<compile_context>
chip_gen: v5e
topology: v5e:2x2
jax: 0.10.0
libtpu: 0.0.40
codegen_flags: <defaults>
</compile_context>

<pallas_src>
import functools
import math

import jax
import jax.numpy as jnp
from jax.experimental import pallas as pl
from jax.experimental.pallas import tpu as pltpu

LN_EPS = 1e-12          # DistilBERT LayerNorm eps
LOGIT_PAD = 128         # pad classifier out-dim to a full lane tile


# --------------------------------------------------------------------------- #
# small helpers (pure jnp, traced inside the Pallas kernel and the reference)
# --------------------------------------------------------------------------- #
def _layer_norm(x, gamma, beta):
    mu = jnp.mean(x, axis=-1, keepdims=True)
    var = jnp.mean((x - mu) ** 2, axis=-1, keepdims=True)
    return (x - mu) * jax.lax.rsqrt(var + LN_EPS) * gamma + beta


def _gelu(x):
    # TODO(synk): DistilBERT uses exact erf-GELU; tanh approximation used here
    # (difference is negligible and tanh lowers cleanly on the EUP).
    c = math.sqrt(2.0 / math.pi)
    return 0.5 * x * (1.0 + jnp.tanh(c * (x + 0.044715 * x * x * x)))


# --------------------------------------------------------------------------- #
# fused forward kernel: one grid step == B_BLK batch elements (rows folded)
# --------------------------------------------------------------------------- #
def _fused_kernel(num_heads, num_layers, regressive,
                  x_ref, amask_ref,
                  eg_ref, eb_ref,
                  wqh_ref, bqh_ref, wkh_ref, bkh_ref, wvh_ref, bvh_ref,
                  woh_ref, bo_ref,
                  g1_ref, be1_ref, w1_ref, b1_ref, w2_ref, b2_ref, g2_ref, be2_ref,
                  pw_ref, pb_ref, cw_ref, cb_ref,
                  out_ref):
    """x: (BS, H) summed embeddings (BS = B_BLK*S rows);
       amask: (1, BS, BS) precomputed block-diagonal additive mask;
       out: (BS, LOGIT_PAD)."""
    BS, H = x_ref.shape
    hd = H // num_heads
    scale = 1.0 / math.sqrt(hd)
    bf16 = jnp.bfloat16

    amask = amask_ref[0]                                   # (BS, BS) f32, hoisted

    # fused embedding LayerNorm
    h = _layer_norm(x_ref[...], eg_ref[...], eb_ref[...])  # (BS, H) f32

    # TODO(synk): convert to a layer grid axis / lax.fori_loop with pl.ds-indexed
    # stacked weights once num_layers > ~3; L=2 unrolled keeps vreg pressure low.
    for l in range(num_layers):
        hb = h.astype(bf16)                                # single cast per layer

        # per-head attention: weights pre-split host-side -> every op below is a
        # plain 2-D matmul (MXU); no lane slicing / concat / transpose relayouts.
        acc = None
        for n in range(num_heads):
            i = l * num_heads + n
            qn = jnp.dot(hb, wqh_ref[i],
                         preferred_element_type=jnp.float32) + bqh_ref[i]   # (BS, hd)
            kn = jnp.dot(hb, wkh_ref[i],
                         preferred_element_type=jnp.float32) + bkh_ref[i]
            vn = jnp.dot(hb, wvh_ref[i],
                         preferred_element_type=jnp.float32) + bvh_ref[i]

            s = jnp.dot(qn.astype(bf16), kn.astype(bf16).T,
                        preferred_element_type=jnp.float32) * scale         # (BS, BS)
            s = s + amask                                   # block-diag + padding mask
            s = s - jnp.max(s, axis=-1, keepdims=True)
            p = jnp.exp(s)
            p = p * pl.reciprocal(jnp.sum(p, axis=-1, keepdims=True), approx=True)

            ctx = jnp.dot(p.astype(bf16), vn.astype(bf16),
                          preferred_element_type=jnp.float32)               # (BS, hd)
            part = jnp.dot(ctx.astype(bf16), woh_ref[i],
                           preferred_element_type=jnp.float32)              # (BS, H)
            acc = part if acc is None else acc + part
        attn = acc + bo_ref[l]

        h1 = _layer_norm(attn + h, g1_ref[l], be1_ref[l])

        ff = jnp.dot(h1.astype(bf16), w1_ref[l],
                     preferred_element_type=jnp.float32) + b1_ref[l]
        ff = _gelu(ff)
        ff = jnp.dot(ff.astype(bf16), w2_ref[l],
                     preferred_element_type=jnp.float32) + b2_ref[l]
        h = _layer_norm(ff + h1, g2_ref[l], be2_ref[l])

    # classifier head on ALL rows (keeps the store sublane/lane dense and avoids
    # in-kernel row gathers); the wrapper selects the [CLS] rows afterwards.
    pre = jnp.dot(h.astype(bf16), pw_ref[...],
                  preferred_element_type=jnp.float32) + pb_ref[...]
    pre = jnp.maximum(pre, 0.0)
    logits = jnp.dot(pre.astype(bf16), cw_ref[...],
                     preferred_element_type=jnp.float32) + cb_ref[...]      # (BS, 128)
    if regressive:
        out_ref[...] = jax.nn.sigmoid(logits) * 4.0 + 1.0
    else:
        out_ref[...] = logits


# --------------------------------------------------------------------------- #
# parameter init (deterministic, BERT-style 0.02 normal)
# --------------------------------------------------------------------------- #
def init_params(key, *, vocab_size, max_pos, hidden, ffn, num_layers, num_labels):
    keys = iter(jax.random.split(key, 8 + num_layers * 8))

    def nrm(shape):
        return 0.02 * jax.random.normal(next(keys), shape, jnp.float32)

    params = {
        "word_emb": nrm((vocab_size, hidden)),
        "pos_emb": nrm((max_pos, hidden)),
        "emb_ln_g": jnp.ones((1, hidden), jnp.float32),
        "emb_ln_b": jnp.zeros((1, hidden), jnp.float32),
        "pre_w": nrm((hidden, hidden)),
        "pre_b": jnp.zeros((1, hidden), jnp.float32),
        "cls_w": nrm((hidden, num_labels)),
        "cls_b": jnp.zeros((1, num_labels), jnp.float32),
        "layers": [],
    }
    for _ in range(num_layers):
        layer = (
            nrm((hidden, hidden)), jnp.zeros((1, hidden), jnp.float32),   # Wq, bq
            nrm((hidden, hidden)), jnp.zeros((1, hidden), jnp.float32),   # Wk, bk
            nrm((hidden, hidden)), jnp.zeros((1, hidden), jnp.float32),   # Wv, bv
            nrm((hidden, hidden)), jnp.zeros((1, hidden), jnp.float32),   # Wo, bo
            jnp.ones((1, hidden), jnp.float32), jnp.zeros((1, hidden), jnp.float32),  # LN1
            nrm((hidden, ffn)), jnp.zeros((1, ffn), jnp.float32),         # FFN lin1
            nrm((ffn, hidden)), jnp.zeros((1, hidden), jnp.float32),      # FFN lin2
            jnp.ones((1, hidden), jnp.float32), jnp.zeros((1, hidden), jnp.float32),  # LN2
        )
        params["layers"].append(layer)
    return params


# --------------------------------------------------------------------------- #
# Pallas forward (single fused pallas_call) + pure-JAX reference
# --------------------------------------------------------------------------- #
def forward_pallas(params, x_ids, x_mask, *, token_count, num_heads,
                   regressive=False, batch_block=2):
    x_ids = x_ids[:, :token_count]
    x_mask = x_mask[:, :token_count]
    B, S = x_ids.shape
    H = params["word_emb"].shape[1]
    L = len(params["layers"])
    num_labels = params["cls_w"].shape[1]
    hd = H // num_heads
    assert H % num_heads == 0

    Bb = min(batch_block, B)             # batch elements folded per grid step
    assert B % Bb == 0
    nb = B // Bb                         # grid steps (on v7x prefer nb >= 2)
    BS = Bb * S

    # embedding gather is glue (data-dependent gather stays in JAX)
    # TODO(synk): at real vocab/seq sizes fuse the gather in-kernel
    # (PrefetchScalarGridSpec + pl.Element row gather) to avoid the HBM round-trip.
    emb = params["word_emb"][x_ids] + params["pos_emb"][None, :S, :]   # (B,S,H) f32
    emb_flat = emb.reshape(B * S, H)

    # hoisted block-diagonal additive attention mask: (nb, BS, BS), 0 = keep,
    # -1e9 = masked (padding key OR different batch element within the block)
    mask_f = x_mask.astype(jnp.float32)                     # (B, S)
    row_b = jnp.arange(BS) // S
    same = (row_b[:, None] == row_b[None, :]).astype(jnp.float32)      # (BS, BS)
    kv = mask_f.reshape(nb, BS)                                        # (nb, BS)
    add_mask = (same[None, :, :] * kv[:, None, :] - 1.0) * 1e9         # (nb, BS, BS)

    # stack per-layer weights; split Q/K/V/O per head HOST-SIDE (free) so the
    # kernel never lane-slices / concatenates.  Matmul weights in bf16.
    def stk(i, dtype=jnp.float32):
        return jnp.stack([params["layers"][l][i] for l in range(L)]).astype(dtype)

    def split_cols(w):   # (L, H, H) -> (L*nh, H, hd)   columns grouped by head
        return (w.reshape(L, H, num_heads, hd).transpose(0, 2, 1, 3)
                 .reshape(L * num_heads, H, hd).astype(jnp.bfloat16))

    def split_bias(b):   # (L, 1, H) -> (L*nh, 1, hd)
        return (b.reshape(L, 1, num_heads, hd).transpose(0, 2, 1, 3)
                 .reshape(L * num_heads, 1, hd))

    def split_rows(w):   # Wo (L, H, H) -> (L*nh, hd, H)  rows grouped by head
        return (w.reshape(L, num_heads, hd, H)
                 .reshape(L * num_heads, hd, H).astype(jnp.bfloat16))

    wq_h, bq_h = split_cols(stk(0)), split_bias(stk(1))
    wk_h, bk_h = split_cols(stk(2)), split_bias(stk(3))
    wv_h, bv_h = split_cols(stk(4)), split_bias(stk(5))
    wo_h, bo = split_rows(stk(6)), stk(7)
    g1, be1 = stk(8), stk(9)
    w1, b1 = stk(10, jnp.bfloat16), stk(11)
    w2, b2 = stk(12, jnp.bfloat16), stk(13)
    g2, be2 = stk(14), stk(15)

    # pad classifier out-dim to 128 lanes (lane-dense store); slice after the call
    cls_w_pad = jnp.zeros((H, LOGIT_PAD), jnp.float32).at[:, :num_labels].set(
        params["cls_w"]).astype(jnp.bfloat16)
    cls_b_pad = jnp.zeros((1, LOGIT_PAD), jnp.float32).at[:, :num_labels].set(
        params["cls_b"])

    args = (emb_flat, add_mask,
            params["emb_ln_g"], params["emb_ln_b"],
            wq_h, bq_h, wk_h, bk_h, wv_h, bv_h, wo_h, bo,
            g1, be1, w1, b1, w2, b2, g2, be2,
            params["pre_w"].astype(jnp.bfloat16), params["pre_b"],
            cls_w_pad, cls_b_pad)

    # TODO(synk): at real model sizes set vmem_limit_bytes (v6e) or stream
    # per-layer weights (v7x, 64 MiB VMEM); all weights are tiny here.
    vmem_full = pl.BlockSpec(memory_space=pltpu.MemorySpace.VMEM)
    in_specs = [pl.BlockSpec((BS, H), lambda g: (g, 0)),
                pl.BlockSpec((1, BS, BS), lambda g: (g, 0, 0))] \
               + [vmem_full] * (len(args) - 2)

    kernel = functools.partial(_fused_kernel, num_heads, L, regressive)
    out = pl.pallas_call(
        kernel,
        out_shape=jax.ShapeDtypeStruct((B * S, LOGIT_PAD), jnp.float32),
        grid=(nb,),
        in_specs=in_specs,
        out_specs=pl.BlockSpec((BS, LOGIT_PAD), lambda g: (g, 0)),
        compiler_params=pltpu.CompilerParams(
            dimension_semantics=("parallel",)),
    )(*args)

    out = out.reshape(B, S, LOGIT_PAD)
    if regressive:
        return out[:, 0, 0]                    # sigmoid(logit)*4 + 1, shape (B,)
    return out[:, 0, :num_labels]              # shape (B, num_labels)


def forward_ref(params, x_ids, x_mask, *, token_count, num_heads, regressive=False):
    x_ids = x_ids[:, :token_count]
    x_mask = x_mask[:, :token_count].astype(jnp.float32)
    B, S = x_ids.shape
    H = params["word_emb"].shape[1]
    hd = H // num_heads
    neg = jnp.finfo(jnp.float32).min

    x = params["word_emb"][x_ids] + params["pos_emb"][None, :S, :]
    x = _layer_norm(x, params["emb_ln_g"], params["emb_ln_b"])
    for (wq, bq, wk, bk, wv, bv, wo, bo, g1, b1_, w1, bf1, w2, bf2, g2, b2_) \
            in params["layers"]:
        q = (x @ wq + bq).reshape(B, S, num_heads, hd).transpose(0, 2, 1, 3)
        k = (x @ wk + bk).reshape(B, S, num_heads, hd).transpose(0, 2, 1, 3)
        v = (x @ wv + bv).reshape(B, S, num_heads, hd).transpose(0, 2, 1, 3)
        scores = jnp.einsum("bnqd,bnkd->bnqk", q, k) / math.sqrt(hd)
        scores = jnp.where(x_mask[:, None, None, :] == 0.0, neg, scores)
        p = jax.nn.softmax(scores, axis=-1)
        ctx = jnp.einsum("bnqk,bnkd->bnqd", p, v).transpose(0, 2, 1, 3).reshape(B, S, H)
        attn = ctx @ wo + bo
        h1 = _layer_norm(attn + x, g1, b1_)
        ff = _gelu(h1 @ w1 + bf1) @ w2 + bf2
        x = _layer_norm(ff + h1, g2, b2_)
    cls = x[:, 0, :]
    pre = jnp.maximum(cls @ params["pre_w"] + params["pre_b"], 0.0)
    logits = pre @ params["cls_w"] + params["cls_b"]
    if regressive:
        return jax.nn.sigmoid(logits[:, 0]) * 4.0 + 1.0
    return logits


# --------------------------------------------------------------------------- #
if __name__ == "__main__":
    # config (small, consistent with the module's forward)
    VOCAB = 100
    TOKEN_COUNT = 8       # self.token_count truncation
    HIDDEN = 32
    HEADS = 4
    FFN = 64
    LAYERS = 2
    NUM_LABELS = 9        # regressive_bert_style=False (default)
    MAX_POS = 16
    B, SEQ_IN = 2, 12     # raw input longer than token_count to exercise truncation

    key = jax.random.PRNGKey(0)
    k_params, k_ids, k_mask = jax.random.split(key, 3)

    params = init_params(k_params, vocab_size=VOCAB, max_pos=MAX_POS, hidden=HIDDEN,
                         ffn=FFN, num_layers=LAYERS, num_labels=NUM_LABELS)

    x = jax.random.randint(k_ids, (B, SEQ_IN), 0, VOCAB, dtype=jnp.int32)
    # attention mask: 1s then some padding zeros
    x_mask = (jnp.arange(SEQ_IN)[None, :] < jnp.array([[SEQ_IN], [6]])).astype(jnp.float32)

    out = forward_pallas(params, x, x_mask,
                         token_count=TOKEN_COUNT, num_heads=HEADS,
                         regressive=False, batch_block=2)
    out = jax.block_until_ready(out)

    ref = forward_ref(params, x, x_mask,
                      token_count=TOKEN_COUNT, num_heads=HEADS, regressive=False)
    assert out.shape == (B, NUM_LABELS), out.shape
    assert jnp.allclose(out, ref, rtol=2e-2, atol=2e-2), (out, ref)

    print("KERNEL_OK")
</pallas_src>

<mosaic_0001>
module attributes {stable_mosaic.version = 11 : i64} {
  func.func @_fused_kernel(%arg0: i32, %arg1: memref<16x32xf32, #tpu.memory_space<vmem>>, %arg2: memref<1x16x16xf32, #tpu.memory_space<vmem>>, %arg3: memref<1x32xf32, #tpu.memory_space<vmem>>, %arg4: memref<1x32xf32, #tpu.memory_space<vmem>>, %arg5: memref<8x32x8xbf16, #tpu.memory_space<vmem>>, %arg6: memref<8x1x8xf32, #tpu.memory_space<vmem>>, %arg7: memref<8x32x8xbf16, #tpu.memory_space<vmem>>, %arg8: memref<8x1x8xf32, #tpu.memory_space<vmem>>, %arg9: memref<8x32x8xbf16, #tpu.memory_space<vmem>>, %arg10: memref<8x1x8xf32, #tpu.memory_space<vmem>>, %arg11: memref<8x8x32xbf16, #tpu.memory_space<vmem>>, %arg12: memref<2x1x32xf32, #tpu.memory_space<vmem>>, %arg13: memref<2x1x32xf32, #tpu.memory_space<vmem>>, %arg14: memref<2x1x32xf32, #tpu.memory_space<vmem>>, %arg15: memref<2x32x64xbf16, #tpu.memory_space<vmem>>, %arg16: memref<2x1x64xf32, #tpu.memory_space<vmem>>, %arg17: memref<2x64x32xbf16, #tpu.memory_space<vmem>>, %arg18: memref<2x1x32xf32, #tpu.memory_space<vmem>>, %arg19: memref<2x1x32xf32, #tpu.memory_space<vmem>>, %arg20: memref<2x1x32xf32, #tpu.memory_space<vmem>>, %arg21: memref<32x32xbf16, #tpu.memory_space<vmem>>, %arg22: memref<1x32xf32, #tpu.memory_space<vmem>>, %arg23: memref<32x128xbf16, #tpu.memory_space<vmem>>, %arg24: memref<1x128xf32, #tpu.memory_space<vmem>>, %arg25: memref<16x128xf32, #tpu.memory_space<vmem>>) attributes {dimension_semantics = [#tpu.dimension_semantics<parallel>], iteration_bounds = array<i64: 1>, scalar_prefetch = 0 : i64, scratch_operands = 0 : i64, tpu.core_type = #tpu.core_type<tc>, window_params = [{transform_indices = @transform_0, window_bounds = array<i64: 16, 32>}, {transform_indices = @transform_1, window_bounds = array<i64: 1, 16, 16>}, {pipeline_mode = #tpu.pipeline_mode<synchronous>, transform_indices = @transform_2, window_bounds = array<i64: 1, 32>}, {pipeline_mode = #tpu.pipeline_mode<synchronous>, transform_indices = @transform_3, window_bounds = array<i64: 1, 32>}, {pipeline_mode = #tpu.pipeline_mode<synchronous>, transform_indices = @transform_4, window_bounds = array<i64: 8, 32, 8>}, {pipeline_mode = #tpu.pipeline_mode<synchronous>, transform_indices = @transform_5, window_bounds = array<i64: 8, 1, 8>}, {pipeline_mode = #tpu.pipeline_mode<synchronous>, transform_indices = @transform_6, window_bounds = array<i64: 8, 32, 8>}, {pipeline_mode = #tpu.pipeline_mode<synchronous>, transform_indices = @transform_7, window_bounds = array<i64: 8, 1, 8>}, {pipeline_mode = #tpu.pipeline_mode<synchronous>, transform_indices = @transform_8, window_bounds = array<i64: 8, 32, 8>}, {pipeline_mode = #tpu.pipeline_mode<synchronous>, transform_indices = @transform_9, window_bounds = array<i64: 8, 1, 8>}, {pipeline_mode = #tpu.pipeline_mode<synchronous>, transform_indices = @transform_10, window_bounds = array<i64: 8, 8, 32>}, {pipeline_mode = #tpu.pipeline_mode<synchronous>, transform_indices = @transform_11, window_bounds = array<i64: 2, 1, 32>}, {pipeline_mode = #tpu.pipeline_mode<synchronous>, transform_indices = @transform_12, window_bounds = array<i64: 2, 1, 32>}, {pipeline_mode = #tpu.pipeline_mode<synchronous>, transform_indices = @transform_13, window_bounds = array<i64: 2, 1, 32>}, {pipeline_mode = #tpu.pipeline_mode<synchronous>, transform_indices = @transform_14, window_bounds = array<i64: 2, 32, 64>}, {pipeline_mode = #tpu.pipeline_mode<synchronous>, transform_indices = @transform_15, window_bounds = array<i64: 2, 1, 64>}, {pipeline_mode = #tpu.pipeline_mode<synchronous>, transform_indices = @transform_16, window_bounds = array<i64: 2, 64, 32>}, {pipeline_mode = #tpu.pipeline_mode<synchronous>, transform_indices = @transform_17, window_bounds = array<i64: 2, 1, 32>}, {pipeline_mode = #tpu.pipeline_mode<synchronous>, transform_indices = @transform_18, window_bounds = array<i64: 2, 1, 32>}, {pipeline_mode = #tpu.pipeline_mode<synchronous>, transform_indices = @transform_19, window_bounds = array<i64: 2, 1, 32>}, {pipeline_mode = #tpu.pipeline_mode<synchronous>, transform_indices = @transform_20, window_bounds = array<i64: 32, 32>}, {pipeline_mode = #tpu.pipeline_mode<synchronous>, transform_indices = @transform_21, window_bounds = array<i64: 1, 32>}, {pipeline_mode = #tpu.pipeline_mode<synchronous>, transform_indices = @transform_22, window_bounds = array<i64: 32, 128>}, {pipeline_mode = #tpu.pipeline_mode<synchronous>, transform_indices = @transform_23, window_bounds = array<i64: 1, 128>}, {transform_indices = @transform_24, window_bounds = array<i64: 16, 128>}]} {
    %c0 = arith.constant 0 : index
    %c0_0 = arith.constant 0 : index
    %c0_1 = arith.constant 0 : index
    %0 = vector.load %arg2[%c0, %c0_0, %c0_1] : memref<1x16x16xf32, #tpu.memory_space<vmem>>, vector<1x16x16xf32>
    %1 = vector.shape_cast %0 : vector<1x16x16xf32> to vector<16x16xf32>
    %c0_2 = arith.constant 0 : index
    %c0_3 = arith.constant 0 : index
    %2 = vector.load %arg1[%c0_2, %c0_3] : memref<16x32xf32, #tpu.memory_space<vmem>>, vector<16x32xf32>
    %c0_4 = arith.constant 0 : index
    %c0_5 = arith.constant 0 : index
    %3 = vector.load %arg3[%c0_4, %c0_5] : memref<1x32xf32, #tpu.memory_space<vmem>>, vector<1x32xf32>
    %c0_6 = arith.constant 0 : index
    %c0_7 = arith.constant 0 : index
    %4 = vector.load %arg4[%c0_6, %c0_7] : memref<1x32xf32, #tpu.memory_space<vmem>>, vector<1x32xf32>
    %cst = arith.constant dense<0.000000e+00> : vector<16xf32>
    %5 = vector.multi_reduction <add>, %2, %cst [1] : vector<16x32xf32> to vector<16xf32>
    %6 = vector.shape_cast %5 : vector<16xf32> to vector<16x1xf32>
    %cst_8 = arith.constant 3.200000e+01 : f32
    %7 = vector.broadcast %cst_8 : f32 to vector<16x1xf32>
    %8 = arith.divf %6, %7 : vector<16x1xf32>
    %9 = vector.broadcast %8 : vector<16x1xf32> to vector<16x32xf32>
    %10 = arith.subf %2, %9 : vector<16x32xf32>
    %11 = arith.mulf %10, %10 : vector<16x32xf32>
    %cst_9 = arith.constant dense<0.000000e+00> : vector<16xf32>
    %12 = vector.multi_reduction <add>, %11, %cst_9 [1] : vector<16x32xf32> to vector<16xf32>
    %13 = vector.shape_cast %12 : vector<16xf32> to vector<16x1xf32>
    %cst_10 = arith.constant 3.200000e+01 : f32
    %14 = vector.broadcast %cst_10 : f32 to vector<16x1xf32>
    %15 = arith.divf %13, %14 : vector<16x1xf32>
    %16 = vector.broadcast %8 : vector<16x1xf32> to vector<16x32xf32>
    %17 = arith.subf %2, %16 : vector<16x32xf32>
    %cst_11 = arith.constant 9.99999996E-13 : f32
    %18 = vector.broadcast %cst_11 : f32 to vector<16x1xf32>
    %19 = arith.addf %15, %18 : vector<16x1xf32>
    %20 = math.rsqrt %19 : vector<16x1xf32>
    %21 = vector.broadcast %20 : vector<16x1xf32> to vector<16x32xf32>
    %22 = arith.mulf %17, %21 : vector<16x32xf32>
    %23 = vector.broadcast %3 : vector<1x32xf32> to vector<16x32xf32>
    %24 = arith.mulf %22, %23 : vector<16x32xf32>
    %25 = vector.broadcast %4 : vector<1x32xf32> to vector<16x32xf32>
    %26 = arith.addf %24, %25 : vector<16x32xf32>
    %27 = arith.truncf %26 : vector<16x32xf32> to vector<16x32xbf16>
    %c0_12 = arith.constant 0 : index
    %c0_13 = arith.constant 0 : index
    %c0_14 = arith.constant 0 : index
    %28 = vector.load %arg5[%c0_12, %c0_13, %c0_14] : memref<8x32x8xbf16, #tpu.memory_space<vmem>>, vector<1x32x8xbf16>
    %29 = vector.shape_cast %28 : vector<1x32x8xbf16> to vector<32x8xbf16>
    %cst_15 = arith.constant dense<0.000000e+00> : vector<16x8xf32>
    %30 = tpu.matmul %27, %29, %cst_15 {dimension_numbers = #tpu.dot_dimension_numbers<[1], [0], [0], [1], [0, 0, 1, 1], [], []>} : vector<16x32xbf16>, vector<32x8xbf16>, vector<16x8xf32> -> vector<16x8xf32>
    %c0_16 = arith.constant 0 : index
    %c0_17 = arith.constant 0 : index
    %c0_18 = arith.constant 0 : index
    %31 = vector.load %arg6[%c0_16, %c0_17, %c0_18] : memref<8x1x8xf32, #tpu.memory_space<vmem>>, vector<1x1x8xf32>
    %32 = vector.shape_cast %31 : vector<1x1x8xf32> to vector<1x8xf32>
    %33 = vector.broadcast %32 : vector<1x8xf32> to vector<16x8xf32>
    %34 = arith.addf %30, %33 : vector<16x8xf32>
    %c0_19 = arith.constant 0 : index
    %c0_20 = arith.constant 0 : index
    %c0_21 = arith.constant 0 : index
    %35 = vector.load %arg7[%c0_19, %c0_20, %c0_21] : memref<8x32x8xbf16, #tpu.memory_space<vmem>>, vector<1x32x8xbf16>
    %36 = vector.shape_cast %35 : vector<1x32x8xbf16> to vector<32x8xbf16>
    %cst_22 = arith.constant dense<0.000000e+00> : vector<16x8xf32>
    %37 = tpu.matmul %27, %36, %cst_22 {dimension_numbers = #tpu.dot_dimension_numbers<[1], [0], [0], [1], [0, 0, 1, 1], [], []>} : vector<16x32xbf16>, vector<32x8xbf16>, vector<16x8xf32> -> vector<16x8xf32>
    %c0_23 = arith.constant 0 : index
    %c0_24 = arith.constant 0 : index
    %c0_25 = arith.constant 0 : index
    %38 = vector.load %arg8[%c0_23, %c0_24, %c0_25] : memref<8x1x8xf32, #tpu.memory_space<vmem>>, vector<1x1x8xf32>
    %39 = vector.shape_cast %38 : vector<1x1x8xf32> to vector<1x8xf32>
    %40 = vector.broadcast %39 : vector<1x8xf32> to vector<16x8xf32>
    %41 = arith.addf %37, %40 : vector<16x8xf32>
    %c0_26 = arith.constant 0 : index
    %c0_27 = arith.constant 0 : index
    %c0_28 = arith.constant 0 : index
    %42 = vector.load %arg9[%c0_26, %c0_27, %c0_28] : memref<8x32x8xbf16, #tpu.memory_space<vmem>>, vector<1x32x8xbf16>
    %43 = vector.shape_cast %42 : vector<1x32x8xbf16> to vector<32x8xbf16>
    %cst_29 = arith.constant dense<0.000000e+00> : vector<16x8xf32>
    %44 = tpu.matmul %27, %43, %cst_29 {dimension_numbers = #tpu.dot_dimension_numbers<[1], [0], [0], [1], [0, 0, 1, 1], [], []>} : vector<16x32xbf16>, vector<32x8xbf16>, vector<16x8xf32> -> vector<16x8xf32>
    %c0_30 = arith.constant 0 : index
    %c0_31 = arith.constant 0 : index
    %c0_32 = arith.constant 0 : index
    %45 = vector.load %arg10[%c0_30, %c0_31, %c0_32] : memref<8x1x8xf32, #tpu.memory_space<vmem>>, vector<1x1x8xf32>
    %46 = vector.shape_cast %45 : vector<1x1x8xf32> to vector<1x8xf32>
    %47 = vector.broadcast %46 : vector<1x8xf32> to vector<16x8xf32>
    %48 = arith.addf %44, %47 : vector<16x8xf32>
    %49 = arith.truncf %34 : vector<16x8xf32> to vector<16x8xbf16>
    %50 = arith.truncf %41 : vector<16x8xf32> to vector<16x8xbf16>
    %51 = tpu.transpose %50, [1, 0] : vector<16x8xbf16> -> vector<8x16xbf16>
    %cst_33 = arith.constant dense<0.000000e+00> : vector<16x16xf32>
    %52 = tpu.matmul %49, %51, %cst_33 {dimension_numbers = #tpu.dot_dimension_numbers<[1], [0], [0], [1], [0, 0, 1, 1], [], []>} : vector<16x8xbf16>, vector<8x16xbf16>, vector<16x16xf32> -> vector<16x16xf32>
    %cst_34 = arith.constant 0.353553385 : f32
    %53 = vector.broadcast %cst_34 : f32 to vector<16x16xf32>
    %54 = arith.mulf %52, %53 : vector<16x16xf32>
    %55 = arith.addf %54, %1 : vector<16x16xf32>
    %cst_35 = arith.constant dense<0xFF800000> : vector<16xf32>
    %56 = vector.multi_reduction <maximumf>, %55, %cst_35 [1] : vector<16x16xf32> to vector<16xf32>
    %57 = vector.shape_cast %56 : vector<16xf32> to vector<16x1xf32>
    %58 = vector.broadcast %57 : vector<16x1xf32> to vector<16x16xf32>
    %59 = arith.subf %55, %58 : vector<16x16xf32>
    %60 = math.exp %59 : vector<16x16xf32>
    %cst_36 = arith.constant dense<0.000000e+00> : vector<16xf32>
    %61 = vector.multi_reduction <add>, %60, %cst_36 [1] : vector<16x16xf32> to vector<16xf32>
    %62 = vector.shape_cast %61 : vector<16xf32> to vector<16x1xf32>
    %63 = tpu.reciprocal %62 {approx = true} : vector<16x1xf32> -> vector<16x1xf32>
    %64 = vector.broadcast %63 : vector<16x1xf32> to vector<16x16xf32>
    %65 = arith.mulf %60, %64 : vector<16x16xf32>
    %66 = arith.truncf %65 : vector<16x16xf32> to vector<16x16xbf16>
    %67 = arith.truncf %48 : vector<16x8xf32> to vector<16x8xbf16>
    %cst_37 = arith.constant dense<0.000000e+00> : vector<16x8xf32>
    %68 = tpu.matmul %66, %67, %cst_37 {dimension_numbers = #tpu.dot_dimension_numbers<[1], [0], [0], [1], [0, 0, 1, 1], [], []>} : vector<16x16xbf16>, vector<16x8xbf16>, vector<16x8xf32> -> vector<16x8xf32>
    %69 = arith.truncf %68 : vector<16x8xf32> to vector<16x8xbf16>
    %c0_38 = arith.constant 0 : index
    %c0_39 = arith.constant 0 : index
    %c0_40 = arith.constant 0 : index
    %70 = vector.load %arg11[%c0_38, %c0_39, %c0_40] : memref<8x8x32xbf16, #tpu.memory_space<vmem>>, vector<1x8x32xbf16>
    %71 = vector.shape_cast %70 : vector<1x8x32xbf16> to vector<8x32xbf16>
    %cst_41 = arith.constant dense<0.000000e+00> : vector<16x32xf32>
    %72 = tpu.matmul %69, %71, %cst_41 {dimension_numbers = #tpu.dot_dimension_numbers<[1], [0], [0], [1], [0, 0, 1, 1], [], []>} : vector<16x8xbf16>, vector<8x32xbf16>, vector<16x32xf32> -> vector<16x32xf32>
    %c1 = arith.constant 1 : index
    %c0_42 = arith.constant 0 : index
    %c0_43 = arith.constant 0 : index
    %73 = vector.load %arg5[%c1, %c0_42, %c0_43] : memref<8x32x8xbf16, #tpu.memory_space<vmem>>, vector<1x32x8xbf16>
    %74 = vector.shape_cast %73 : vector<1x32x8xbf16> to vector<32x8xbf16>
    %cst_44 = arith.constant dense<0.000000e+00> : vector<16x8xf32>
    %75 = tpu.matmul %27, %74, %cst_44 {dimension_numbers = #tpu.dot_dimension_numbers<[1], [0], [0], [1], [0, 0, 1, 1], [], []>} : vector<16x32xbf16>, vector<32x8xbf16>, vector<16x8xf32> -> vector<16x8xf32>
    %c1_45 = arith.constant 1 : index
    %c0_46 = arith.constant 0 : index
    %c0_47 = arith.constant 0 : index
    %76 = vector.load %arg6[%c1_45, %c0_46, %c0_47] : memref<8x1x8xf32, #tpu.memory_space<vmem>>, vector<1x1x8xf32>
    %77 = vector.shape_cast %76 : vector<1x1x8xf32> to vector<1x8xf32>
    %78 = vector.broadcast %77 : vector<1x8xf32> to vector<16x8xf32>
    %79 = arith.addf %75, %78 : vector<16x8xf32>
    %c1_48 = arith.constant 1 : index
    %c0_49 = arith.constant 0 : index
    %c0_50 = arith.constant 0 : index
    %80 = vector.load %arg7[%c1_48, %c0_49, %c0_50] : memref<8x32x8xbf16, #tpu.memory_space<vmem>>, vector<1x32x8xbf16>
    %81 = vector.shape_cast %80 : vector<1x32x8xbf16> to vector<32x8xbf16>
    %cst_51 = arith.constant dense<0.000000e+00> : vector<16x8xf32>
    %82 = tpu.matmul %27, %81, %cst_51 {dimension_numbers = #tpu.dot_dimension_numbers<[1], [0], [0], [1], [0, 0, 1, 1], [], []>} : vector<16x32xbf16>, vector<32x8xbf16>, vector<16x8xf32> -> vector<16x8xf32>
    %c1_52 = arith.constant 1 : index
    %c0_53 = arith.constant 0 : index
    %c0_54 = arith.constant 0 : index
    %83 = vector.load %arg8[%c1_52, %c0_53, %c0_54] : memref<8x1x8xf32, #tpu.memory_space<vmem>>, vector<1x1x8xf32>
    %84 = vector.shape_cast %83 : vector<1x1x8xf32> to vector<1x8xf32>
    %85 = vector.broadcast %84 : vector<1x8xf32> to vector<16x8xf32>
    %86 = arith.addf %82, %85 : vector<16x8xf32>
    %c1_55 = arith.constant 1 : index
    %c0_56 = arith.constant 0 : index
    %c0_57 = arith.constant 0 : index
    %87 = vector.load %arg9[%c1_55, %c0_56, %c0_57] : memref<8x32x8xbf16, #tpu.memory_space<vmem>>, vector<1x32x8xbf16>
    %88 = vector.shape_cast %87 : vector<1x32x8xbf16> to vector<32x8xbf16>
    %cst_58 = arith.constant dense<0.000000e+00> : vector<16x8xf32>
    %89 = tpu.matmul %27, %88, %cst_58 {dimension_numbers = #tpu.dot_dimension_numbers<[1], [0], [0], [1], [0, 0, 1, 1], [], []>} : vector<16x32xbf16>, vector<32x8xbf16>, vector<16x8xf32> -> vector<16x8xf32>
    %c1_59 = arith.constant 1 : index
    %c0_60 = arith.constant 0 : index
    %c0_61 = arith.constant 0 : index
    %90 = vector.load %arg10[%c1_59, %c0_60, %c0_61] : memref<8x1x8xf32, #tpu.memory_space<vmem>>, vector<1x1x8xf32>
    %91 = vector.shape_cast %90 : vector<1x1x8xf32> to vector<1x8xf32>
    %92 = vector.broadcast %91 : vector<1x8xf32> to vector<16x8xf32>
    %93 = arith.addf %89, %92 : vector<16x8xf32>
    %94 = arith.truncf %79 : vector<16x8xf32> to vector<16x8xbf16>
    %95 = arith.truncf %86 : vector<16x8xf32> to vector<16x8xbf16>
    %96 = tpu.transpose %95, [1, 0] : vector<16x8xbf16> -> vector<8x16xbf16>
    %cst_62 = arith.constant dense<0.000000e+00> : vector<16x16xf32>
    %97 = tpu.matmul %94, %96, %cst_62 {dimension_numbers = #tpu.dot_dimension_numbers<[1], [0], [0], [1], [0, 0, 1, 1], [], []>} : vector<16x8xbf16>, vector<8x16xbf16>, vector<16x16xf32> -> vector<16x16xf32>
    %cst_63 = arith.constant 0.353553385 : f32
    %98 = vector.broadcast %cst_63 : f32 to vector<16x16xf32>
    %99 = arith.mulf %97, %98 : vector<16x16xf32>
    %100 = arith.addf %99, %1 : vector<16x16xf32>
    %cst_64 = arith.constant dense<0xFF800000> : vector<16xf32>
    %101 = vector.multi_reduction <maximumf>, %100, %cst_64 [1] : vector<16x16xf32> to vector<16xf32>
    %102 = vector.shape_cast %101 : vector<16xf32> to vector<16x1xf32>
    %103 = vector.broadcast %102 : vector<16x1xf32> to vector<16x16xf32>
    %104 = arith.subf %100, %103 : vector<16x16xf32>
    %105 = math.exp %104 : vector<16x16xf32>
    %cst_65 = arith.constant dense<0.000000e+00> : vector<16xf32>
    %106 = vector.multi_reduction <add>, %105, %cst_65 [1] : vector<16x16xf32> to vector<16xf32>
    %107 = vector.shape_cast %106 : vector<16xf32> to vector<16x1xf32>
    %108 = tpu.reciprocal %107 {approx = true} : vector<16x1xf32> -> vector<16x1xf32>
    %109 = vector.broadcast %108 : vector<16x1xf32> to vector<16x16xf32>
    %110 = arith.mulf %105, %109 : vector<16x16xf32>
    %111 = arith.truncf %110 : vector<16x16xf32> to vector<16x16xbf16>
    %112 = arith.truncf %93 : vector<16x8xf32> to vector<16x8xbf16>
    %cst_66 = arith.constant dense<0.000000e+00> : vector<16x8xf32>
    %113 = tpu.matmul %111, %112, %cst_66 {dimension_numbers = #tpu.dot_dimension_numbers<[1], [0], [0], [1], [0, 0, 1, 1], [], []>} : vector<16x16xbf16>, vector<16x8xbf16>, vector<16x8xf32> -> vector<16x8xf32>
    %114 = arith.truncf %113 : vector<16x8xf32> to vector<16x8xbf16>
    %c1_67 = arith.constant 1 : index
    %c0_68 = arith.constant 0 : index
    %c0_69 = arith.constant 0 : index
    %115 = vector.load %arg11[%c1_67, %c0_68, %c0_69] : memref<8x8x32xbf16, #tpu.memory_space<vmem>>, vector<1x8x32xbf16>
    %116 = vector.shape_cast %115 : vector<1x8x32xbf16> to vector<8x32xbf16>
    %cst_70 = arith.constant dense<0.000000e+00> : vector<16x32xf32>
    %117 = tpu.matmul %114, %116, %cst_70 {dimension_numbers = #tpu.dot_dimension_numbers<[1], [0], [0], [1], [0, 0, 1, 1], [], []>} : vector<16x8xbf16>, vector<8x32xbf16>, vector<16x32xf32> -> vector<16x32xf32>
    %118 = arith.addf %72, %117 : vector<16x32xf32>
    %c2 = arith.constant 2 : index
    %c0_71 = arith.constant 0 : index
    %c0_72 = arith.constant 0 : index
    %119 = vector.load %arg5[%c2, %c0_71, %c0_72] : memref<8x32x8xbf16, #tpu.memory_space<vmem>>, vector<1x32x8xbf16>
    %120 = vector.shape_cast %119 : vector<1x32x8xbf16> to vector<32x8xbf16>
    %cst_73 = arith.constant dense<0.000000e+00> : vector<16x8xf32>
    %121 = tpu.matmul %27, %120, %cst_73 {dimension_numbers = #tpu.dot_dimension_numbers<[1], [0], [0], [1], [0, 0, 1, 1], [], []>} : vector<16x32xbf16>, vector<32x8xbf16>, vector<16x8xf32> -> vector<16x8xf32>
    %c2_74 = arith.constant 2 : index
    %c0_75 = arith.constant 0 : index
    %c0_76 = arith.constant 0 : index
    %122 = vector.load %arg6[%c2_74, %c0_75, %c0_76] : memref<8x1x8xf32, #tpu.memory_space<vmem>>, vector<1x1x8xf32>
    %123 = vector.shape_cast %122 : vector<1x1x8xf32> to vector<1x8xf32>
    %124 = vector.broadcast %123 : vector<1x8xf32> to vector<16x8xf32>
    %125 = arith.addf %121, %124 : vector<16x8xf32>
    %c2_77 = arith.constant 2 : index
    %c0_78 = arith.constant 0 : index
    %c0_79 = arith.constant 0 : index
    %126 = vector.load %arg7[%c2_77, %c0_78, %c0_79] : memref<8x32x8xbf16, #tpu.memory_space<vmem>>, vector<1x32x8xbf16>
    %127 = vector.shape_cast %126 : vector<1x32x8xbf16> to vector<32x8xbf16>
    %cst_80 = arith.constant dense<0.000000e+00> : vector<16x8xf32>
    %128 = tpu.matmul %27, %127, %cst_80 {dimension_numbers = #tpu.dot_dimension_numbers<[1], [0], [0], [1], [0, 0, 1, 1], [], []>} : vector<16x32xbf16>, vector<32x8xbf16>, vector<16x8xf32> -> vector<16x8xf32>
    %c2_81 = arith.constant 2 : index
    %c0_82 = arith.constant 0 : index
    %c0_83 = arith.constant 0 : index
    %129 = vector.load %arg8[%c2_81, %c0_82, %c0_83] : memref<8x1x8xf32, #tpu.memory_space<vmem>>, vector<1x1x8xf32>
    %130 = vector.shape_cast %129 : vector<1x1x8xf32> to vector<1x8xf32>
    %131 = vector.broadcast %130 : vector<1x8xf32> to vector<16x8xf32>
    %132 = arith.addf %128, %131 : vector<16x8xf32>
    %c2_84 = arith.constant 2 : index
    %c0_85 = arith.constant 0 : index
    %c0_86 = arith.constant 0 : index
    %133 = vector.load %arg9[%c2_84, %c0_85, %c0_86] : memref<8x32x8xbf16, #tpu.memory_space<vmem>>, vector<1x32x8xbf16>
    %134 = vector.shape_cast %133 : vector<1x32x8xbf16> to vector<32x8xbf16>
    %cst_87 = arith.constant dense<0.000000e+00> : vector<16x8xf32>
    %135 = tpu.matmul %27, %134, %cst_87 {dimension_numbers = #tpu.dot_dimension_numbers<[1], [0], [0], [1], [0, 0, 1, 1], [], []>} : vector<16x32xbf16>, vector<32x8xbf16>, vector<16x8xf32> -> vector<16x8xf32>
    %c2_88 = arith.constant 2 : index
    %c0_89 = arith.constant 0 : index
    %c0_90 = arith.constant 0 : index
    %136 = vector.load %arg10[%c2_88, %c0_89, %c0_90] : memref<8x1x8xf32, #tpu.memory_space<vmem>>, vector<1x1x8xf32>
    %137 = vector.shape_cast %136 : vector<1x1x8xf32> to vector<1x8xf32>
    %138 = vector.broadcast %137 : vector<1x8xf32> to vector<16x8xf32>
    %139 = arith.addf %135, %138 : vector<16x8xf32>
    %140 = arith.truncf %125 : vector<16x8xf32> to vector<16x8xbf16>
    %141 = arith.truncf %132 : vector<16x8xf32> to vector<16x8xbf16>
    %142 = tpu.transpose %141, [1, 0] : vector<16x8xbf16> -> vector<8x16xbf16>
    %cst_91 = arith.constant dense<0.000000e+00> : vector<16x16xf32>
    %143 = tpu.matmul %140, %142, %cst_91 {dimension_numbers = #tpu.dot_dimension_numbers<[1], [0], [0], [1], [0, 0, 1, 1], [], []>} : vector<16x8xbf16>, vector<8x16xbf16>, vector<16x16xf32> -> vector<16x16xf32>
    %cst_92 = arith.constant 0.353553385 : f32
    %144 = vector.broadcast %cst_92 : f32 to vector<16x16xf32>
    %145 = arith.mulf %143, %144 : vector<16x16xf32>
    %146 = arith.addf %145, %1 : vector<16x16xf32>
    %cst_93 = arith.constant dense<0xFF800000> : vector<16xf32>
    %147 = vector.multi_reduction <maximumf>, %146, %cst_93 [1] : vector<16x16xf32> to vector<16xf32>
    %148 = vector.shape_cast %147 : vector<16xf32> to vector<16x1xf32>
    %149 = vector.broadcast %148 : vector<16x1xf32> to vector<16x16xf32>
    %150 = arith.subf %146, %149 : vector<16x16xf32>
    %151 = math.exp %150 : vector<16x16xf32>
    %cst_94 = arith.constant dense<0.000000e+00> : vector<16xf32>
    %152 = vector.multi_reduction <add>, %151, %cst_94 [1] : vector<16x16xf32> to vector<16xf32>
    %153 = vector.shape_cast %152 : vector<16xf32> to vector<16x1xf32>
    %154 = tpu.reciprocal %153 {approx = true} : vector<16x1xf32> -> vector<16x1xf32>
    %155 = vector.broadcast %154 : vector<16x1xf32> to vector<16x16xf32>
    %156 = arith.mulf %151, %155 : vector<16x16xf32>
    %157 = arith.truncf %156 : vector<16x16xf32> to vector<16x16xbf16>
    %158 = arith.truncf %139 : vector<16x8xf32> to vector<16x8xbf16>
    %cst_95 = arith.constant dense<0.000000e+00> : vector<16x8xf32>
    %159 = tpu.matmul %157, %158, %cst_95 {dimension_numbers = #tpu.dot_dimension_numbers<[1], [0], [0], [1], [0, 0, 1, 1], [], []>} : vector<16x16xbf16>, vector<16x8xbf16>, vector<16x8xf32> -> vector<16x8xf32>
    %160 = arith.truncf %159 : vector<16x8xf32> to vector<16x8xbf16>
    %c2_96 = arith.constant 2 : index
    %c0_97 = arith.constant 0 : index
    %c0_98 = arith.constant 0 : index
    %161 = vector.load %arg11[%c2_96, %c0_97, %c0_98] : memref<8x8x32xbf16, #tpu.memory_space<vmem>>, vector<1x8x32xbf16>
    %162 = vector.shape_cast %161 : vector<1x8x32xbf16> to vector<8x32xbf16>
    %cst_99 = arith.constant dense<0.000000e+00> : vector<16x32xf32>
    %163 = tpu.matmul %160, %162, %cst_99 {dimension_numbers = #tpu.dot_dimension_numbers<[1], [0], [0], [1], [0, 0, 1, 1], [], []>} : vector<16x8xbf16>, vector<8x32xbf16>, vector<16x32xf32> -> vector<16x32xf32>
    %164 = arith.addf %118, %163 : vector<16x32xf32>
    %c3 = arith.constant 3 : index
    %c0_100 = arith.constant 0 : index
    %c0_101 = arith.constant 0 : index
    %165 = vector.load %arg5[%c3, %c0_100, %c0_101] : memref<8x32x8xbf16, #tpu.memory_space<vmem>>, vector<1x32x8xbf16>
    %166 = vector.shape_cast %165 : vector<1x32x8xbf16> to vector<32x8xbf16>
    %cst_102 = arith.constant dense<0.000000e+00> : vector<16x8xf32>
    %167 = tpu.matmul %27, %166, %cst_102 {dimension_numbers = #tpu.dot_dimension_numbers<[1], [0], [0], [1], [0, 0, 1, 1], [], []>} : vector<16x32xbf16>, vector<32x8xbf16>, vector<16x8xf32> -> vector<16x8xf32>
    %c3_103 = arith.constant 3 : index
    %c0_104 = arith.constant 0 : index
    %c0_105 = arith.constant 0 : index
    %168 = vector.load %arg6[%c3_103, %c0_104, %c0_105] : memref<8x1x8xf32, #tpu.memory_space<vmem>>, vector<1x1x8xf32>
    %169 = vector.shape_cast %168 : vector<1x1x8xf32> to vector<1x8xf32>
    %170 = vector.broadcast %169 : vector<1x8xf32> to vector<16x8xf32>
    %171 = arith.addf %167, %170 : vector<16x8xf32>
    %c3_106 = arith.constant 3 : index
    %c0_107 = arith.constant 0 : index
    %c0_108 = arith.constant 0 : index
    %172 = vector.load %arg7[%c3_106, %c0_107, %c0_108] : memref<8x32x8xbf16, #tpu.memory_space<vmem>>, vector<1x32x8xbf16>
    %173 = vector.shape_cast %172 : vector<1x32x8xbf16> to vector<32x8xbf16>
    %cst_109 = arith.constant dense<0.000000e+00> : vector<16x8xf32>
    %174 = tpu.matmul %27, %173, %cst_109 {dimension_numbers = #tpu.dot_dimension_numbers<[1], [0], [0], [1], [0, 0, 1, 1], [], []>} : vector<16x32xbf16>, vector<32x8xbf16>, vector<16x8xf32> -> vector<16x8xf32>
    %c3_110 = arith.constant 3 : index
    %c0_111 = arith.constant 0 : index
    %c0_112 = arith.constant 0 : index
    %175 = vector.load %arg8[%c3_110, %c0_111, %c0_112] : memref<8x1x8xf32, #tpu.memory_space<vmem>>, vector<1x1x8xf32>
    %176 = vector.shape_cast %175 : vector<1x1x8xf32> to vector<1x8xf32>
    %177 = vector.broadcast %176 : vector<1x8xf32> to vector<16x8xf32>
    %178 = arith.addf %174, %177 : vector<16x8xf32>
    %c3_113 = arith.constant 3 : index
    %c0_114 = arith.constant 0 : index
    %c0_115 = arith.constant 0 : index
    %179 = vector.load %arg9[%c3_113, %c0_114, %c0_115] : memref<8x32x8xbf16, #tpu.memory_space<vmem>>, vector<1x32x8xbf16>
    %180 = vector.shape_cast %179 : vector<1x32x8xbf16> to vector<32x8xbf16>
    %cst_116 = arith.constant dense<0.000000e+00> : vector<16x8xf32>
    %181 = tpu.matmul %27, %180, %cst_116 {dimension_numbers = #tpu.dot_dimension_numbers<[1], [0], [0], [1], [0, 0, 1, 1], [], []>} : vector<16x32xbf16>, vector<32x8xbf16>, vector<16x8xf32> -> vector<16x8xf32>
    %c3_117 = arith.constant 3 : index
    %c0_118 = arith.constant 0 : index
    %c0_119 = arith.constant 0 : index
    %182 = vector.load %arg10[%c3_117, %c0_118, %c0_119] : memref<8x1x8xf32, #tpu.memory_space<vmem>>, vector<1x1x8xf32>
    %183 = vector.shape_cast %182 : vector<1x1x8xf32> to vector<1x8xf32>
    %184 = vector.broadcast %183 : vector<1x8xf32> to vector<16x8xf32>
    %185 = arith.addf %181, %184 : vector<16x8xf32>
    %186 = arith.truncf %171 : vector<16x8xf32> to vector<16x8xbf16>
    %187 = arith.truncf %178 : vector<16x8xf32> to vector<16x8xbf16>
    %188 = tpu.transpose %187, [1, 0] : vector<16x8xbf16> -> vector<8x16xbf16>
    %cst_120 = arith.constant dense<0.000000e+00> : vector<16x16xf32>
    %189 = tpu.matmul %186, %188, %cst_120 {dimension_numbers = #tpu.dot_dimension_numbers<[1], [0], [0], [1], [0, 0, 1, 1], [], []>} : vector<16x8xbf16>, vector<8x16xbf16>, vector<16x16xf32> -> vector<16x16xf32>
    %cst_121 = arith.constant 0.353553385 : f32
    %190 = vector.broadcast %cst_121 : f32 to vector<16x16xf32>
    %191 = arith.mulf %189, %190 : vector<16x16xf32>
    %192 = arith.addf %191, %1 : vector<16x16xf32>
    %cst_122 = arith.constant dense<0xFF800000> : vector<16xf32>
    %193 = vector.multi_reduction <maximumf>, %192, %cst_122 [1] : vector<16x16xf32> to vector<16xf32>
    %194 = vector.shape_cast %193 : vector<16xf32> to vector<16x1xf32>
    %195 = vector.broadcast %194 : vector<16x1xf32> to vector<16x16xf32>
    %196 = arith.subf %192, %195 : vector<16x16xf32>
    %197 = math.exp %196 : vector<16x16xf32>
    %cst_123 = arith.constant dense<0.000000e+00> : vector<16xf32>
    %198 = vector.multi_reduction <add>, %197, %cst_123 [1] : vector<16x16xf32> to vector<16xf32>
    %199 = vector.shape_cast %198 : vector<16xf32> to vector<16x1xf32>
    %200 = tpu.reciprocal %199 {approx = true} : vector<16x1xf32> -> vector<16x1xf32>
    %201 = vector.broadcast %200 : vector<16x1xf32> to vector<16x16xf32>
    %202 = arith.mulf %197, %201 : vector<16x16xf32>
    %203 = arith.truncf %202 : vector<16x16xf32> to vector<16x16xbf16>
    %204 = arith.truncf %185 : vector<16x8xf32> to vector<16x8xbf16>
    %cst_124 = arith.constant dense<0.000000e+00> : vector<16x8xf32>
    %205 = tpu.matmul %203, %204, %cst_124 {dimension_numbers = #tpu.dot_dimension_numbers<[1], [0], [0], [1], [0, 0, 1, 1], [], []>} : vector<16x16xbf16>, vector<16x8xbf16>, vector<16x8xf32> -> vector<16x8xf32>
    %206 = arith.truncf %205 : vector<16x8xf32> to vector<16x8xbf16>
    %c3_125 = arith.constant 3 : index
    %c0_126 = arith.constant 0 : index
    %c0_127 = arith.constant 0 : index
    %207 = vector.load %arg11[%c3_125, %c0_126, %c0_127] : memref<8x8x32xbf16, #tpu.memory_space<vmem>>, vector<1x8x32xbf16>
    %208 = vector.shape_cast %207 : vector<1x8x32xbf16> to vector<8x32xbf16>
    %cst_128 = arith.constant dense<0.000000e+00> : vector<16x32xf32>
    %209 = tpu.matmul %206, %208, %cst_128 {dimension_numbers = #tpu.dot_dimension_numbers<[1], [0], [0], [1], [0, 0, 1, 1], [], []>} : vector<16x8xbf16>, vector<8x32xbf16>, vector<16x32xf32> -> vector<16x32xf32>
    %210 = arith.addf %164, %209 : vector<16x32xf32>
    %c0_129 = arith.constant 0 : index
    %c0_130 = arith.constant 0 : index
    %c0_131 = arith.constant 0 : index
    %211 = vector.load %arg12[%c0_129, %c0_130, %c0_131] : memref<2x1x32xf32, #tpu.memory_space<vmem>>, vector<1x1x32xf32>
    %212 = vector.shape_cast %211 : vector<1x1x32xf32> to vector<1x32xf32>
    %213 = vector.broadcast %212 : vector<1x32xf32> to vector<16x32xf32>
    %214 = arith.addf %210, %213 : vector<16x32xf32>
    %215 = arith.addf %214, %26 : vector<16x32xf32>
    %c0_132 = arith.constant 0 : index
    %c0_133 = arith.constant 0 : index
    %c0_134 = arith.constant 0 : index
    %216 = vector.load %arg13[%c0_132, %c0_133, %c0_134] : memref<2x1x32xf32, #tpu.memory_space<vmem>>, vector<1x1x32xf32>
    %217 = vector.shape_cast %216 : vector<1x1x32xf32> to vector<1x32xf32>
    %c0_135 = arith.constant 0 : index
    %c0_136 = arith.constant 0 : index
    %c0_137 = arith.constant 0 : index
    %218 = vector.load %arg14[%c0_135, %c0_136, %c0_137] : memref<2x1x32xf32, #tpu.memory_space<vmem>>, vector<1x1x32xf32>
    %219 = vector.shape_cast %218 : vector<1x1x32xf32> to vector<1x32xf32>
    %cst_138 = arith.constant dense<0.000000e+00> : vector<16xf32>
    %220 = vector.multi_reduction <add>, %215, %cst_138 [1] : vector<16x32xf32> to vector<16xf32>
    %221 = vector.shape_cast %220 : vector<16xf32> to vector<16x1xf32>
    %cst_139 = arith.constant 3.200000e+01 : f32
    %222 = vector.broadcast %cst_139 : f32 to vector<16x1xf32>
    %223 = arith.divf %221, %222 : vector<16x1xf32>
    %224 = vector.broadcast %223 : vector<16x1xf32> to vector<16x32xf32>
    %225 = arith.subf %215, %224 : vector<16x32xf32>
    %226 = arith.mulf %225, %225 : vector<16x32xf32>
    %cst_140 = arith.constant dense<0.000000e+00> : vector<16xf32>
    %227 = vector.multi_reduction <add>, %226, %cst_140 [1] : vector<16x32xf32> to vector<16xf32>
    %228 = vector.shape_cast %227 : vector<16xf32> to vector<16x1xf32>
    %cst_141 = arith.constant 3.200000e+01 : f32
    %229 = vector.broadcast %cst_141 : f32 to vector<16x1xf32>
    %230 = arith.divf %228, %229 : vector<16x1xf32>
    %231 = vector.broadcast %223 : vector<16x1xf32> to vector<16x32xf32>
    %232 = arith.subf %215, %231 : vector<16x32xf32>
    %cst_142 = arith.constant 9.99999996E-13 : f32
    %233 = vector.broadcast %cst_142 : f32 to vector<16x1xf32>
    %234 = arith.addf %230, %233 : vector<16x1xf32>
    %235 = math.rsqrt %234 : vector<16x1xf32>
    %236 = vector.broadcast %235 : vector<16x1xf32> to vector<16x32xf32>
    %237 = arith.mulf %232, %236 : vector<16x32xf32>
    %238 = vector.broadcast %217 : vector<1x32xf32> to vector<16x32xf32>
    %239 = arith.mulf %237, %238 : vector<16x32xf32>
    %240 = vector.broadcast %219 : vector<1x32xf32> to vector<16x32xf32>
    %241 = arith.addf %239, %240 : vector<16x32xf32>
    %242 = arith.truncf %241 : vector<16x32xf32> to vector<16x32xbf16>
    %c0_143 = arith.constant 0 : index
    %c0_144 = arith.constant 0 : index
    %c0_145 = arith.constant 0 : index
    %243 = vector.load %arg15[%c0_143, %c0_144, %c0_145] : memref<2x32x64xbf16, #tpu.memory_space<vmem>>, vector<1x32x64xbf16>
    %244 = vector.shape_cast %243 : vector<1x32x64xbf16> to vector<32x64xbf16>
    %cst_146 = arith.constant dense<0.000000e+00> : vector<16x64xf32>
    %245 = tpu.matmul %242, %244, %cst_146 {dimension_numbers = #tpu.dot_dimension_numbers<[1], [0], [0], [1], [0, 0, 1, 1], [], []>} : vector<16x32xbf16>, vector<32x64xbf16>, vector<16x64xf32> -> vector<16x64xf32>
    %c0_147 = arith.constant 0 : index
    %c0_148 = arith.constant 0 : index
    %c0_149 = arith.constant 0 : index
    %246 = vector.load %arg16[%c0_147, %c0_148, %c0_149] : memref<2x1x64xf32, #tpu.memory_space<vmem>>, vector<1x1x64xf32>
    %247 = vector.shape_cast %246 : vector<1x1x64xf32> to vector<1x64xf32>
    %248 = vector.broadcast %247 : vector<1x64xf32> to vector<16x64xf32>
    %249 = arith.addf %245, %248 : vector<16x64xf32>
    %cst_150 = arith.constant 5.000000e-01 : f32
    %250 = vector.broadcast %cst_150 : f32 to vector<16x64xf32>
    %251 = arith.mulf %250, %249 : vector<16x64xf32>
    %cst_151 = arith.constant 4.471500e-02 : f32
    %252 = vector.broadcast %cst_151 : f32 to vector<16x64xf32>
    %253 = arith.mulf %252, %249 : vector<16x64xf32>
    %254 = arith.mulf %253, %249 : vector<16x64xf32>
    %255 = arith.mulf %254, %249 : vector<16x64xf32>
    %256 = arith.addf %249, %255 : vector<16x64xf32>
    %cst_152 = arith.constant 0.797884583 : f32
    %257 = vector.broadcast %cst_152 : f32 to vector<16x64xf32>
    %258 = arith.mulf %257, %256 : vector<16x64xf32>
    %259 = math.tanh %258 : vector<16x64xf32>
    %cst_153 = arith.constant 1.000000e+00 : f32
    %260 = vector.broadcast %cst_153 : f32 to vector<16x64xf32>
    %261 = arith.addf %260, %259 : vector<16x64xf32>
    %262 = arith.mulf %251, %261 : vector<16x64xf32>
    %263 = arith.truncf %262 : vector<16x64xf32> to vector<16x64xbf16>
    %c0_154 = arith.constant 0 : index
    %c0_155 = arith.constant 0 : index
    %c0_156 = arith.constant 0 : index
    %264 = vector.load %arg17[%c0_154, %c0_155, %c0_156] : memref<2x64x32xbf16, #tpu.memory_space<vmem>>, vector<1x64x32xbf16>
    %265 = vector.shape_cast %264 : vector<1x64x32xbf16> to vector<64x32xbf16>
    %cst_157 = arith.constant dense<0.000000e+00> : vector<16x32xf32>
    %266 = tpu.matmul %263, %265, %cst_157 {dimension_numbers = #tpu.dot_dimension_numbers<[1], [0], [0], [1], [0, 0, 1, 1], [], []>} : vector<16x64xbf16>, vector<64x32xbf16>, vector<16x32xf32> -> vector<16x32xf32>
    %c0_158 = arith.constant 0 : index
    %c0_159 = arith.constant 0 : index
    %c0_160 = arith.constant 0 : index
    %267 = vector.load %arg18[%c0_158, %c0_159, %c0_160] : memref<2x1x32xf32, #tpu.memory_space<vmem>>, vector<1x1x32xf32>
    %268 = vector.shape_cast %267 : vector<1x1x32xf32> to vector<1x32xf32>
    %269 = vector.broadcast %268 : vector<1x32xf32> to vector<16x32xf32>
    %270 = arith.addf %266, %269 : vector<16x32xf32>
    %271 = arith.addf %270, %241 : vector<16x32xf32>
    %c0_161 = arith.constant 0 : index
    %c0_162 = arith.constant 0 : index
    %c0_163 = arith.constant 0 : index
    %272 = vector.load %arg19[%c0_161, %c0_162, %c0_163] : memref<2x1x32xf32, #tpu.memory_space<vmem>>, vector<1x1x32xf32>
    %273 = vector.shape_cast %272 : vector<1x1x32xf32> to vector<1x32xf32>
    %c0_164 = arith.constant 0 : index
    %c0_165 = arith.constant 0 : index
    %c0_166 = arith.constant 0 : index
    %274 = vector.load %arg20[%c0_164, %c0_165, %c0_166] : memref<2x1x32xf32, #tpu.memory_space<vmem>>, vector<1x1x32xf32>
    %275 = vector.shape_cast %274 : vector<1x1x32xf32> to vector<1x32xf32>
    %cst_167 = arith.constant dense<0.000000e+00> : vector<16xf32>
    %276 = vector.multi_reduction <add>, %271, %cst_167 [1] : vector<16x32xf32> to vector<16xf32>
    %277 = vector.shape_cast %276 : vector<16xf32> to vector<16x1xf32>
    %cst_168 = arith.constant 3.200000e+01 : f32
    %278 = vector.broadcast %cst_168 : f32 to vector<16x1xf32>
    %279 = arith.divf %277, %278 : vector<16x1xf32>
    %280 = vector.broadcast %279 : vector<16x1xf32> to vector<16x32xf32>
    %281 = arith.subf %271, %280 : vector<16x32xf32>
    %282 = arith.mulf %281, %281 : vector<16x32xf32>
    %cst_169 = arith.constant dense<0.000000e+00> : vector<16xf32>
    %283 = vector.multi_reduction <add>, %282, %cst_169 [1] : vector<16x32xf32> to vector<16xf32>
    %284 = vector.shape_cast %283 : vector<16xf32> to vector<16x1xf32>
    %cst_170 = arith.constant 3.200000e+01 : f32
    %285 = vector.broadcast %cst_170 : f32 to vector<16x1xf32>
    %286 = arith.divf %284, %285 : vector<16x1xf32>
    %287 = vector.broadcast %279 : vector<16x1xf32> to vector<16x32xf32>
    %288 = arith.subf %271, %287 : vector<16x32xf32>
    %cst_171 = arith.constant 9.99999996E-13 : f32
    %289 = vector.broadcast %cst_171 : f32 to vector<16x1xf32>
    %290 = arith.addf %286, %289 : vector<16x1xf32>
    %291 = math.rsqrt %290 : vector<16x1xf32>
    %292 = vector.broadcast %291 : vector<16x1xf32> to vector<16x32xf32>
    %293 = arith.mulf %288, %292 : vector<16x32xf32>
    %294 = vector.broadcast %273 : vector<1x32xf32> to vector<16x32xf32>
    %295 = arith.mulf %293, %294 : vector<16x32xf32>
    %296 = vector.broadcast %275 : vector<1x32xf32> to vector<16x32xf32>
    %297 = arith.addf %295, %296 : vector<16x32xf32>
    %298 = arith.truncf %297 : vector<16x32xf32> to vector<16x32xbf16>
    %c4 = arith.constant 4 : index
    %c0_172 = arith.constant 0 : index
    %c0_173 = arith.constant 0 : index
    %299 = vector.load %arg5[%c4, %c0_172, %c0_173] : memref<8x32x8xbf16, #tpu.memory_space<vmem>>, vector<1x32x8xbf16>
    %300 = vector.shape_cast %299 : vector<1x32x8xbf16> to vector<32x8xbf16>
    %cst_174 = arith.constant dense<0.000000e+00> : vector<16x8xf32>
    %301 = tpu.matmul %298, %300, %cst_174 {dimension_numbers = #tpu.dot_dimension_numbers<[1], [0], [0], [1], [0, 0, 1, 1], [], []>} : vector<16x32xbf16>, vector<32x8xbf16>, vector<16x8xf32> -> vector<16x8xf32>
    %c4_175 = arith.constant 4 : index
    %c0_176 = arith.constant 0 : index
    %c0_177 = arith.constant 0 : index
    %302 = vector.load %arg6[%c4_175, %c0_176, %c0_177] : memref<8x1x8xf32, #tpu.memory_space<vmem>>, vector<1x1x8xf32>
    %303 = vector.shape_cast %302 : vector<1x1x8xf32> to vector<1x8xf32>
    %304 = vector.broadcast %303 : vector<1x8xf32> to vector<16x8xf32>
    %305 = arith.addf %301, %304 : vector<16x8xf32>
    %c4_178 = arith.constant 4 : index
    %c0_179 = arith.constant 0 : index
    %c0_180 = arith.constant 0 : index
    %306 = vector.load %arg7[%c4_178, %c0_179, %c0_180] : memref<8x32x8xbf16, #tpu.memory_space<vmem>>, vector<1x32x8xbf16>
    %307 = vector.shape_cast %306 : vector<1x32x8xbf16> to vector<32x8xbf16>
    %cst_181 = arith.constant dense<0.000000e+00> : vector<16x8xf32>
    %308 = tpu.matmul %298, %307, %cst_181 {dimension_numbers = #tpu.dot_dimension_numbers<[1], [0], [0], [1], [0, 0, 1, 1], [], []>} : vector<16x32xbf16>, vector<32x8xbf16>, vector<16x8xf32> -> vector<16x8xf32>
    %c4_182 = arith.constant 4 : index
    %c0_183 = arith.constant 0 : index
    %c0_184 = arith.constant 0 : index
    %309 = vector.load %arg8[%c4_182, %c0_183, %c0_184] : memref<8x1x8xf32, #tpu.memory_space<vmem>>, vector<1x1x8xf32>
    %310 = vector.shape_cast %309 : vector<1x1x8xf32> to vector<1x8xf32>
    %311 = vector.broadcast %310 : vector<1x8xf32> to vector<16x8xf32>
    %312 = arith.addf %308, %311 : vector<16x8xf32>
    %c4_185 = arith.constant 4 : index
    %c0_186 = arith.constant 0 : index
    %c0_187 = arith.constant 0 : index
    %313 = vector.load %arg9[%c4_185, %c0_186, %c0_187] : memref<8x32x8xbf16, #tpu.memory_space<vmem>>, vector<1x32x8xbf16>
    %314 = vector.shape_cast %313 : vector<1x32x8xbf16> to vector<32x8xbf16>
    %cst_188 = arith.constant dense<0.000000e+00> : vector<16x8xf32>
    %315 = tpu.matmul %298, %314, %cst_188 {dimension_numbers = #tpu.dot_dimension_numbers<[1], [0], [0], [1], [0, 0, 1, 1], [], []>} : vector<16x32xbf16>, vector<32x8xbf16>, vector<16x8xf32> -> vector<16x8xf32>
    %c4_189 = arith.constant 4 : index
    %c0_190 = arith.constant 0 : index
    %c0_191 = arith.constant 0 : index
    %316 = vector.load %arg10[%c4_189, %c0_190, %c0_191] : memref<8x1x8xf32, #tpu.memory_space<vmem>>, vector<1x1x8xf32>
    %317 = vector.shape_cast %316 : vector<1x1x8xf32> to vector<1x8xf32>
    %318 = vector.broadcast %317 : vector<1x8xf32> to vector<16x8xf32>
    %319 = arith.addf %315, %318 : vector<16x8xf32>
    %320 = arith.truncf %305 : vector<16x8xf32> to vector<16x8xbf16>
    %321 = arith.truncf %312 : vector<16x8xf32> to vector<16x8xbf16>
    %322 = tpu.transpose %321, [1, 0] : vector<16x8xbf16> -> vector<8x16xbf16>
    %cst_192 = arith.constant dense<0.000000e+00> : vector<16x16xf32>
    %323 = tpu.matmul %320, %322, %cst_192 {dimension_numbers = #tpu.dot_dimension_numbers<[1], [0], [0], [1], [0, 0, 1, 1], [], []>} : vector<16x8xbf16>, vector<8x16xbf16>, vector<16x16xf32> -> vector<16x16xf32>
    %cst_193 = arith.constant 0.353553385 : f32
    %324 = vector.broadcast %cst_193 : f32 to vector<16x16xf32>
    %325 = arith.mulf %323, %324 : vector<16x16xf32>
    %326 = arith.addf %325, %1 : vector<16x16xf32>
    %cst_194 = arith.constant dense<0xFF800000> : vector<16xf32>
    %327 = vector.multi_reduction <maximumf>, %326, %cst_194 [1] : vector<16x16xf32> to vector<16xf32>
    %328 = vector.shape_cast %327 : vector<16xf32> to vector<16x1xf32>
    %329 = vector.broadcast %328 : vector<16x1xf32> to vector<16x16xf32>
    %330 = arith.subf %326, %329 : vector<16x16xf32>
    %331 = math.exp %330 : vector<16x16xf32>
    %cst_195 = arith.constant dense<0.000000e+00> : vector<16xf32>
    %332 = vector.multi_reduction <add>, %331, %cst_195 [1] : vector<16x16xf32> to vector<16xf32>
    %333 = vector.shape_cast %332 : vector<16xf32> to vector<16x1xf32>
    %334 = tpu.reciprocal %333 {approx = true} : vector<16x1xf32> -> vector<16x1xf32>
    %335 = vector.broadcast %334 : vector<16x1xf32> to vector<16x16xf32>
    %336 = arith.mulf %331, %335 : vector<16x16xf32>
    %337 = arith.truncf %336 : vector<16x16xf32> to vector<16x16xbf16>
    %338 = arith.truncf %319 : vector<16x8xf32> to vector<16x8xbf16>
    %cst_196 = arith.constant dense<0.000000e+00> : vector<16x8xf32>
    %339 = tpu.matmul %337, %338, %cst_196 {dimension_numbers = #tpu.dot_dimension_numbers<[1], [0], [0], [1], [0, 0, 1, 1], [], []>} : vector<16x16xbf16>, vector<16x8xbf16>, vector<16x8xf32> -> vector<16x8xf32>
    %340 = arith.truncf %339 : vector<16x8xf32> to vector<16x8xbf16>
    %c4_197 = arith.constant 4 : index
    %c0_198 = arith.constant 0 : index
    %c0_199 = arith.constant 0 : index
    %341 = vector.load %arg11[%c4_197, %c0_198, %c0_199] : memref<8x8x32xbf16, #tpu.memory_space<vmem>>, vector<1x8x32xbf16>
    %342 = vector.shape_cast %341 : vector<1x8x32xbf16> to vector<8x32xbf16>
    %cst_200 = arith.constant dense<0.000000e+00> : vector<16x32xf32>
    %343 = tpu.matmul %340, %342, %cst_200 {dimension_numbers = #tpu.dot_dimension_numbers<[1], [0], [0], [1], [0, 0, 1, 1], [], []>} : vector<16x8xbf16>, vector<8x32xbf16>, vector<16x32xf32> -> vector<16x32xf32>
    %c5 = arith.constant 5 : index
    %c0_201 = arith.constant 0 : index
    %c0_202 = arith.constant 0 : index
    %344 = vector.load %arg5[%c5, %c0_201, %c0_202] : memref<8x32x8xbf16, #tpu.memory_space<vmem>>, vector<1x32x8xbf16>
    %345 = vector.shape_cast %344 : vector<1x32x8xbf16> to vector<32x8xbf16>
    %cst_203 = arith.constant dense<0.000000e+00> : vector<16x8xf32>
    %346 = tpu.matmul %298, %345, %cst_203 {dimension_numbers = #tpu.dot_dimension_numbers<[1], [0], [0], [1], [0, 0, 1, 1], [], []>} : vector<16x32xbf16>, vector<32x8xbf16>, vector<16x8xf32> -> vector<16x8xf32>
    %c5_204 = arith.constant 5 : index
    %c0_205 = arith.constant 0 : index
    %c0_206 = arith.constant 0 : index
    %347 = vector.load %arg6[%c5_204, %c0_205, %c0_206] : memref<8x1x8xf32, #tpu.memory_space<vmem>>, vector<1x1x8xf32>
    %348 = vector.shape_cast %347 : vector<1x1x8xf32> to vector<1x8xf32>
    %349 = vector.broadcast %348 : vector<1x8xf32> to vector<16x8xf32>
    %350 = arith.addf %346, %349 : vector<16x8xf32>
    %c5_207 = arith.constant 5 : index
    %c0_208 = arith.constant 0 : index
    %c0_209 = arith.constant 0 : index
    %351 = vector.load %arg7[%c5_207, %c0_208, %c0_209] : memref<8x32x8xbf16, #tpu.memory_space<vmem>>, vector<1x32x8xbf16>
    %352 = vector.shape_cast %351 : vector<1x32x8xbf16> to vector<32x8xbf16>
    %cst_210 = arith.constant dense<0.000000e+00> : vector<16x8xf32>
    %353 = tpu.matmul %298, %352, %cst_210 {dimension_numbers = #tpu.dot_dimension_numbers<[1], [0], [0], [1], [0, 0, 1, 1], [], []>} : vector<16x32xbf16>, vector<32x8xbf16>, vector<16x8xf32> -> vector<16x8xf32>
    %c5_211 = arith.constant 5 : index
    %c0_212 = arith.constant 0 : index
    %c0_213 = arith.constant 0 : index
    %354 = vector.load %arg8[%c5_211, %c0_212, %c0_213] : memref<8x1x8xf32, #tpu.memory_space<vmem>>, vector<1x1x8xf32>
    %355 = vector.shape_cast %354 : vector<1x1x8xf32> to vector<1x8xf32>
    %356 = vector.broadcast %355 : vector<1x8xf32> to vector<16x8xf32>
    %357 = arith.addf %353, %356 : vector<16x8xf32>
    %c5_214 = arith.constant 5 : index
    %c0_215 = arith.constant 0 : index
    %c0_216 = arith.constant 0 : index
    %358 = vector.load %arg9[%c5_214, %c0_215, %c0_216] : memref<8x32x8xbf16, #tpu.memory_space<vmem>>, vector<1x32x8xbf16>
    %359 = vector.shape_cast %358 : vector<1x32x8xbf16> to vector<32x8xbf16>
    %cst_217 = arith.constant dense<0.000000e+00> : vector<16x8xf32>
    %360 = tpu.matmul %298, %359, %cst_217 {dimension_numbers = #tpu.dot_dimension_numbers<[1], [0], [0], [1], [0, 0, 1, 1], [], []>} : vector<16x32xbf16>, vector<32x8xbf16>, vector<16x8xf32> -> vector<16x8xf32>
    %c5_218 = arith.constant 5 : index
    %c0_219 = arith.constant 0 : index
    %c0_220 = arith.constant 0 : index
    %361 = vector.load %arg10[%c5_218, %c0_219, %c0_220] : memref<8x1x8xf32, #tpu.memory_space<vmem>>, vector<1x1x8xf32>
    %362 = vector.shape_cast %361 : vector<1x1x8xf32> to vector<1x8xf32>
    %363 = vector.broadcast %362 : vector<1x8xf32> to vector<16x8xf32>
    %364 = arith.addf %360, %363 : vector<16x8xf32>
    %365 = arith.truncf %350 : vector<16x8xf32> to vector<16x8xbf16>
    %366 = arith.truncf %357 : vector<16x8xf32> to vector<16x8xbf16>
    %367 = tpu.transpose %366, [1, 0] : vector<16x8xbf16> -> vector<8x16xbf16>
    %cst_221 = arith.constant dense<0.000000e+00> : vector<16x16xf32>
    %368 = tpu.matmul %365, %367, %cst_221 {dimension_numbers = #tpu.dot_dimension_numbers<[1], [0], [0], [1], [0, 0, 1, 1], [], []>} : vector<16x8xbf16>, vector<8x16xbf16>, vector<16x16xf32> -> vector<16x16xf32>
    %cst_222 = arith.constant 0.353553385 : f32
    %369 = vector.broadcast %cst_222 : f32 to vector<16x16xf32>
    %370 = arith.mulf %368, %369 : vector<16x16xf32>
    %371 = arith.addf %370, %1 : vector<16x16xf32>
    %cst_223 = arith.constant dense<0xFF800000> : vector<16xf32>
    %372 = vector.multi_reduction <maximumf>, %371, %cst_223 [1] : vector<16x16xf32> to vector<16xf32>
    %373 = vector.shape_cast %372 : vector<16xf32> to vector<16x1xf32>
    %374 = vector.broadcast %373 : vector<16x1xf32> to vector<16x16xf32>
    %375 = arith.subf %371, %374 : vector<16x16xf32>
    %376 = math.exp %375 : vector<16x16xf32>
    %cst_224 = arith.constant dense<0.000000e+00> : vector<16xf32>
    %377 = vector.multi_reduction <add>, %376, %cst_224 [1] : vector<16x16xf32> to vector<16xf32>
    %378 = vector.shape_cast %377 : vector<16xf32> to vector<16x1xf32>
    %379 = tpu.reciprocal %378 {approx = true} : vector<16x1xf32> -> vector<16x1xf32>
    %380 = vector.broadcast %379 : vector<16x1xf32> to vector<16x16xf32>
    %381 = arith.mulf %376, %380 : vector<16x16xf32>
    %382 = arith.truncf %381 : vector<16x16xf32> to vector<16x16xbf16>
    %383 = arith.truncf %364 : vector<16x8xf32> to vector<16x8xbf16>
    %cst_225 = arith.constant dense<0.000000e+00> : vector<16x8xf32>
    %384 = tpu.matmul %382, %383, %cst_225 {dimension_numbers = #tpu.dot_dimension_numbers<[1], [0], [0], [1], [0, 0, 1, 1], [], []>} : vector<16x16xbf16>, vector<16x8xbf16>, vector<16x8xf32> -> vector<16x8xf32>
    %385 = arith.truncf %384 : vector<16x8xf32> to vector<16x8xbf16>
    %c5_226 = arith.constant 5 : index
    %c0_227 = arith.constant 0 : index
    %c0_228 = arith.constant 0 : index
    %386 = vector.load %arg11[%c5_226, %c0_227, %c0_228] : memref<8x8x32xbf16, #tpu.memory_space<vmem>>, vector<1x8x32xbf16>
    %387 = vector.shape_cast %386 : vector<1x8x32xbf16> to vector<8x32xbf16>
    %cst_229 = arith.constant dense<0.000000e+00> : vector<16x32xf32>
    %388 = tpu.matmul %385, %387, %cst_229 {dimension_numbers = #tpu.dot_dimension_numbers<[1], [0], [0], [1], [0, 0, 1, 1], [], []>} : vector<16x8xbf16>, vector<8x32xbf16>, vector<16x32xf32> -> vector<16x32xf32>
    %389 = arith.addf %343, %388 : vector<16x32xf32>
    %c6 = arith.constant 6 : index
    %c0_230 = arith.constant 0 : index
    %c0_231 = arith.constant 0 : index
    %390 = vector.load %arg5[%c6, %c0_230, %c0_231] : memref<8x32x8xbf16, #tpu.memory_space<vmem>>, vector<1x32x8xbf16>
    %391 = vector.shape_cast %390 : vector<1x32x8xbf16> to vector<32x8xbf16>
    %cst_232 = arith.constant dense<0.000000e+00> : vector<16x8xf32>
    %392 = tpu.matmul %298, %391, %cst_232 {dimension_numbers = #tpu.dot_dimension_numbers<[1], [0], [0], [1], [0, 0, 1, 1], [], []>} : vector<16x32xbf16>, vector<32x8xbf16>, vector<16x8xf32> -> vector<16x8xf32>
    %c6_233 = arith.constant 6 : index
    %c0_234 = arith.constant 0 : index
    %c0_235 = arith.constant 0 : index
    %393 = vector.load %arg6[%c6_233, %c0_234, %c0_235] : memref<8x1x8xf32, #tpu.memory_space<vmem>>, vector<1x1x8xf32>
    %394 = vector.shape_cast %393 : vector<1x1x8xf32> to vector<1x8xf32>
    %395 = vector.broadcast %394 : vector<1x8xf32> to vector<16x8xf32>
    %396 = arith.addf %392, %395 : vector<16x8xf32>
    %c6_236 = arith.constant 6 : index
    %c0_237 = arith.constant 0 : index
    %c0_238 = arith.constant 0 : index
    %397 = vector.load %arg7[%c6_236, %c0_237, %c0_238] : memref<8x32x8xbf16, #tpu.memory_space<vmem>>, vector<1x32x8xbf16>
    %398 = vector.shape_cast %397 : vector<1x32x8xbf16> to vector<32x8xbf16>
    %cst_239 = arith.constant dense<0.000000e+00> : vector<16x8xf32>
    %399 = tpu.matmul %298, %398, %cst_239 {dimension_numbers = #tpu.dot_dimension_numbers<[1], [0], [0], [1], [0, 0, 1, 1], [], []>} : vector<16x32xbf16>, vector<32x8xbf16>, vector<16x8xf32> -> vector<16x8xf32>
    %c6_240 = arith.constant 6 : index
    %c0_241 = arith.constant 0 : index
    %c0_242 = arith.constant 0 : index
    %400 = vector.load %arg8[%c6_240, %c0_241, %c0_242] : memref<8x1x8xf32, #tpu.memory_space<vmem>>, vector<1x1x8xf32>
    %401 = vector.shape_cast %400 : vector<1x1x8xf32> to vector<1x8xf32>
    %402 = vector.broadcast %401 : vector<1x8xf32> to vector<16x8xf32>
    %403 = arith.addf %399, %402 : vector<16x8xf32>
    %c6_243 = arith.constant 6 : index
    %c0_244 = arith.constant 0 : index
    %c0_245 = arith.constant 0 : index
    %404 = vector.load %arg9[%c6_243, %c0_244, %c0_245] : memref<8x32x8xbf16, #tpu.memory_space<vmem>>, vector<1x32x8xbf16>
    %405 = vector.shape_cast %404 : vector<1x32x8xbf16> to vector<32x8xbf16>
    %cst_246 = arith.constant dense<0.000000e+00> : vector<16x8xf32>
    %406 = tpu.matmul %298, %405, %cst_246 {dimension_numbers = #tpu.dot_dimension_numbers<[1], [0], [0], [1], [0, 0, 1, 1], [], []>} : vector<16x32xbf16>, vector<32x8xbf16>, vector<16x8xf32> -> vector<16x8xf32>
    %c6_247 = arith.constant 6 : index
    %c0_248 = arith.constant 0 : index
    %c0_249 = arith.constant 0 : index
    %407 = vector.load %arg10[%c6_247, %c0_248, %c0_249] : memref<8x1x8xf32, #tpu.memory_space<vmem>>, vector<1x1x8xf32>
    %408 = vector.shape_cast %407 : vector<1x1x8xf32> to vector<1x8xf32>
    %409 = vector.broadcast %408 : vector<1x8xf32> to vector<16x8xf32>
    %410 = arith.addf %406, %409 : vector<16x8xf32>
    %411 = arith.truncf %396 : vector<16x8xf32> to vector<16x8xbf16>
    %412 = arith.truncf %403 : vector<16x8xf32> to vector<16x8xbf16>
    %413 = tpu.transpose %412, [1, 0] : vector<16x8xbf16> -> vector<8x16xbf16>
    %cst_250 = arith.constant dense<0.000000e+00> : vector<16x16xf32>
    %414 = tpu.matmul %411, %413, %cst_250 {dimension_numbers = #tpu.dot_dimension_numbers<[1], [0], [0], [1], [0, 0, 1, 1], [], []>} : vector<16x8xbf16>, vector<8x16xbf16>, vector<16x16xf32> -> vector<16x16xf32>
    %cst_251 = arith.constant 0.353553385 : f32
    %415 = vector.broadcast %cst_251 : f32 to vector<16x16xf32>
    %416 = arith.mulf %414, %415 : vector<16x16xf32>
    %417 = arith.addf %416, %1 : vector<16x16xf32>
    %cst_252 = arith.constant dense<0xFF800000> : vector<16xf32>
    %418 = vector.multi_reduction <maximumf>, %417, %cst_252 [1] : vector<16x16xf32> to vector<16xf32>
    %419 = vector.shape_cast %418 : vector<16xf32> to vector<16x1xf32>
    %420 = vector.broadcast %419 : vector<16x1xf32> to vector<16x16xf32>
    %421 = arith.subf %417, %420 : vector<16x16xf32>
    %422 = math.exp %421 : vector<16x16xf32>
    %cst_253 = arith.constant dense<0.000000e+00> : vector<16xf32>
    %423 = vector.multi_reduction <add>, %422, %cst_253 [1] : vector<16x16xf32> to vector<16xf32>
    %424 = vector.shape_cast %423 : vector<16xf32> to vector<16x1xf32>
    %425 = tpu.reciprocal %424 {approx = true} : vector<16x1xf32> -> vector<16x1xf32>
    %426 = vector.broadcast %425 : vector<16x1xf32> to vector<16x16xf32>
    %427 = arith.mulf %422, %426 : vector<16x16xf32>
    %428 = arith.truncf %427 : vector<16x16xf32> to vector<16x16xbf16>
    %429 = arith.truncf %410 : vector<16x8xf32> to vector<16x8xbf16>
    %cst_254 = arith.constant dense<0.000000e+00> : vector<16x8xf32>
    %430 = tpu.matmul %428, %429, %cst_254 {dimension_numbers = #tpu.dot_dimension_numbers<[1], [0], [0], [1], [0, 0, 1, 1], [], []>} : vector<16x16xbf16>, vector<16x8xbf16>, vector<16x8xf32> -> vector<16x8xf32>
    %431 = arith.truncf %430 : vector<16x8xf32> to vector<16x8xbf16>
    %c6_255 = arith.constant 6 : index
    %c0_256 = arith.constant 0 : index
    %c0_257 = arith.constant 0 : index
    %432 = vector.load %arg11[%c6_255, %c0_256, %c0_257] : memref<8x8x32xbf16, #tpu.memory_space<vmem>>, vector<1x8x32xbf16>
    %433 = vector.shape_cast %432 : vector<1x8x32xbf16> to vector<8x32xbf16>
    %cst_258 = arith.constant dense<0.000000e+00> : vector<16x32xf32>
    %434 = tpu.matmul %431, %433, %cst_258 {dimension_numbers = #tpu.dot_dimension_numbers<[1], [0], [0], [1], [0, 0, 1, 1], [], []>} : vector<16x8xbf16>, vector<8x32xbf16>, vector<16x32xf32> -> vector<16x32xf32>
    %435 = arith.addf %389, %434 : vector<16x32xf32>
    %c7 = arith.constant 7 : index
    %c0_259 = arith.constant 0 : index
    %c0_260 = arith.constant 0 : index
    %436 = vector.load %arg5[%c7, %c0_259, %c0_260] : memref<8x32x8xbf16, #tpu.memory_space<vmem>>, vector<1x32x8xbf16>
    %437 = vector.shape_cast %436 : vector<1x32x8xbf16> to vector<32x8xbf16>
    %cst_261 = arith.constant dense<0.000000e+00> : vector<16x8xf32>
    %438 = tpu.matmul %298, %437, %cst_261 {dimension_numbers = #tpu.dot_dimension_numbers<[1], [0], [0], [1], [0, 0, 1, 1], [], []>} : vector<16x32xbf16>, vector<32x8xbf16>, vector<16x8xf32> -> vector<16x8xf32>
    %c7_262 = arith.constant 7 : index
    %c0_263 = arith.constant 0 : index
    %c0_264 = arith.constant 0 : index
    %439 = vector.load %arg6[%c7_262, %c0_263, %c0_264] : memref<8x1x8xf32, #tpu.memory_space<vmem>>, vector<1x1x8xf32>
    %440 = vector.shape_cast %439 : vector<1x1x8xf32> to vector<1x8xf32>
    %441 = vector.broadcast %440 : vector<1x8xf32> to vector<16x8xf32>
    %442 = arith.addf %438, %441 : vector<16x8xf32>
    %c7_265 = arith.constant 7 : index
    %c0_266 = arith.constant 0 : index
    %c0_267 = arith.constant 0 : index
    %443 = vector.load %arg7[%c7_265, %c0_266, %c0_267] : memref<8x32x8xbf16, #tpu.memory_space<vmem>>, vector<1x32x8xbf16>
    %444 = vector.shape_cast %443 : vector<1x32x8xbf16> to vector<32x8xbf16>
    %cst_268 = arith.constant dense<0.000000e+00> : vector<16x8xf32>
    %445 = tpu.matmul %298, %444, %cst_268 {dimension_numbers = #tpu.dot_dimension_numbers<[1], [0], [0], [1], [0, 0, 1, 1], [], []>} : vector<16x32xbf16>, vector<32x8xbf16>, vector<16x8xf32> -> vector<16x8xf32>
    %c7_269 = arith.constant 7 : index
    %c0_270 = arith.constant 0 : index
    %c0_271 = arith.constant 0 : index
    %446 = vector.load %arg8[%c7_269, %c0_270, %c0_271] : memref<8x1x8xf32, #tpu.memory_space<vmem>>, vector<1x1x8xf32>
    %447 = vector.shape_cast %446 : vector<1x1x8xf32> to vector<1x8xf32>
    %448 = vector.broadcast %447 : vector<1x8xf32> to vector<16x8xf32>
    %449 = arith.addf %445, %448 : vector<16x8xf32>
    %c7_272 = arith.constant 7 : index
    %c0_273 = arith.constant 0 : index
    %c0_274 = arith.constant 0 : index
    %450 = vector.load %arg9[%c7_272, %c0_273, %c0_274] : memref<8x32x8xbf16, #tpu.memory_space<vmem>>, vector<1x32x8xbf16>
    %451 = vector.shape_cast %450 : vector<1x32x8xbf16> to vector<32x8xbf16>
    %cst_275 = arith.constant dense<0.000000e+00> : vector<16x8xf32>
    %452 = tpu.matmul %298, %451, %cst_275 {dimension_numbers = #tpu.dot_dimension_numbers<[1], [0], [0], [1], [0, 0, 1, 1], [], []>} : vector<16x32xbf16>, vector<32x8xbf16>, vector<16x8xf32> -> vector<16x8xf32>
    %c7_276 = arith.constant 7 : index
    %c0_277 = arith.constant 0 : index
    %c0_278 = arith.constant 0 : index
    %453 = vector.load %arg10[%c7_276, %c0_277, %c0_278] : memref<8x1x8xf32, #tpu.memory_space<vmem>>, vector<1x1x8xf32>
    %454 = vector.shape_cast %453 : vector<1x1x8xf32> to vector<1x8xf32>
    %455 = vector.broadcast %454 : vector<1x8xf32> to vector<16x8xf32>
    %456 = arith.addf %452, %455 : vector<16x8xf32>
    %457 = arith.truncf %442 : vector<16x8xf32> to vector<16x8xbf16>
    %458 = arith.truncf %449 : vector<16x8xf32> to vector<16x8xbf16>
    %459 = tpu.transpose %458, [1, 0] : vector<16x8xbf16> -> vector<8x16xbf16>
    %cst_279 = arith.constant dense<0.000000e+00> : vector<16x16xf32>
    %460 = tpu.matmul %457, %459, %cst_279 {dimension_numbers = #tpu.dot_dimension_numbers<[1], [0], [0], [1], [0, 0, 1, 1], [], []>} : vector<16x8xbf16>, vector<8x16xbf16>, vector<16x16xf32> -> vector<16x16xf32>
    %cst_280 = arith.constant 0.353553385 : f32
    %461 = vector.broadcast %cst_280 : f32 to vector<16x16xf32>
    %462 = arith.mulf %460, %461 : vector<16x16xf32>
    %463 = arith.addf %462, %1 : vector<16x16xf32>
    %cst_281 = arith.constant dense<0xFF800000> : vector<16xf32>
    %464 = vector.multi_reduction <maximumf>, %463, %cst_281 [1] : vector<16x16xf32> to vector<16xf32>
    %465 = vector.shape_cast %464 : vector<16xf32> to vector<16x1xf32>
    %466 = vector.broadcast %465 : vector<16x1xf32> to vector<16x16xf32>
    %467 = arith.subf %463, %466 : vector<16x16xf32>
    %468 = math.exp %467 : vector<16x16xf32>
    %cst_282 = arith.constant dense<0.000000e+00> : vector<16xf32>
    %469 = vector.multi_reduction <add>, %468, %cst_282 [1] : vector<16x16xf32> to vector<16xf32>
    %470 = vector.shape_cast %469 : vector<16xf32> to vector<16x1xf32>
    %471 = tpu.reciprocal %470 {approx = true} : vector<16x1xf32> -> vector<16x1xf32>
    %472 = vector.broadcast %471 : vector<16x1xf32> to vector<16x16xf32>
    %473 = arith.mulf %468, %472 : vector<16x16xf32>
    %474 = arith.truncf %473 : vector<16x16xf32> to vector<16x16xbf16>
    %475 = arith.truncf %456 : vector<16x8xf32> to vector<16x8xbf16>
    %cst_283 = arith.constant dense<0.000000e+00> : vector<16x8xf32>
    %476 = tpu.matmul %474, %475, %cst_283 {dimension_numbers = #tpu.dot_dimension_numbers<[1], [0], [0], [1], [0, 0, 1, 1], [], []>} : vector<16x16xbf16>, vector<16x8xbf16>, vector<16x8xf32> -> vector<16x8xf32>
    %477 = arith.truncf %476 : vector<16x8xf32> to vector<16x8xbf16>
    %c7_284 = arith.constant 7 : index
    %c0_285 = arith.constant 0 : index
    %c0_286 = arith.constant 0 : index
    %478 = vector.load %arg11[%c7_284, %c0_285, %c0_286] : memref<8x8x32xbf16, #tpu.memory_space<vmem>>, vector<1x8x32xbf16>
    %479 = vector.shape_cast %478 : vector<1x8x32xbf16> to vector<8x32xbf16>
    %cst_287 = arith.constant dense<0.000000e+00> : vector<16x32xf32>
    %480 = tpu.matmul %477, %479, %cst_287 {dimension_numbers = #tpu.dot_dimension_numbers<[1], [0], [0], [1], [0, 0, 1, 1], [], []>} : vector<16x8xbf16>, vector<8x32xbf16>, vector<16x32xf32> -> vector<16x32xf32>
    %481 = arith.addf %435, %480 : vector<16x32xf32>
    %c1_288 = arith.constant 1 : index
    %c0_289 = arith.constant 0 : index
    %c0_290 = arith.constant 0 : index
    %482 = vector.load %arg12[%c1_288, %c0_289, %c0_290] : memref<2x1x32xf32, #tpu.memory_space<vmem>>, vector<1x1x32xf32>
    %483 = vector.shape_cast %482 : vector<1x1x32xf32> to vector<1x32xf32>
    %484 = vector.broadcast %483 : vector<1x32xf32> to vector<16x32xf32>
    %485 = arith.addf %481, %484 : vector<16x32xf32>
    %486 = arith.addf %485, %297 : vector<16x32xf32>
    %c1_291 = arith.constant 1 : index
    %c0_292 = arith.constant 0 : index
    %c0_293 = arith.constant 0 : index
    %487 = vector.load %arg13[%c1_291, %c0_292, %c0_293] : memref<2x1x32xf32, #tpu.memory_space<vmem>>, vector<1x1x32xf32>
    %488 = vector.shape_cast %487 : vector<1x1x32xf32> to vector<1x32xf32>
    %c1_294 = arith.constant 1 : index
    %c0_295 = arith.constant 0 : index
    %c0_296 = arith.constant 0 : index
    %489 = vector.load %arg14[%c1_294, %c0_295, %c0_296] : memref<2x1x32xf32, #tpu.memory_space<vmem>>, vector<1x1x32xf32>
    %490 = vector.shape_cast %489 : vector<1x1x32xf32> to vector<1x32xf32>
    %cst_297 = arith.constant dense<0.000000e+00> : vector<16xf32>
    %491 = vector.multi_reduction <add>, %486, %cst_297 [1] : vector<16x32xf32> to vector<16xf32>
    %492 = vector.shape_cast %491 : vector<16xf32> to vector<16x1xf32>
    %cst_298 = arith.constant 3.200000e+01 : f32
    %493 = vector.broadcast %cst_298 : f32 to vector<16x1xf32>
    %494 = arith.divf %492, %493 : vector<16x1xf32>
    %495 = vector.broadcast %494 : vector<16x1xf32> to vector<16x32xf32>
    %496 = arith.subf %486, %495 : vector<16x32xf32>
    %497 = arith.mulf %496, %496 : vector<16x32xf32>
    %cst_299 = arith.constant dense<0.000000e+00> : vector<16xf32>
    %498 = vector.multi_reduction <add>, %497, %cst_299 [1] : vector<16x32xf32> to vector<16xf32>
    %499 = vector.shape_cast %498 : vector<16xf32> to vector<16x1xf32>
    %cst_300 = arith.constant 3.200000e+01 : f32
    %500 = vector.broadcast %cst_300 : f32 to vector<16x1xf32>
    %501 = arith.divf %499, %500 : vector<16x1xf32>
    %502 = vector.broadcast %494 : vector<16x1xf32> to vector<16x32xf32>
    %503 = arith.subf %486, %502 : vector<16x32xf32>
    %cst_301 = arith.constant 9.99999996E-13 : f32
    %504 = vector.broadcast %cst_301 : f32 to vector<16x1xf32>
    %505 = arith.addf %501, %504 : vector<16x1xf32>
    %506 = math.rsqrt %505 : vector<16x1xf32>
    %507 = vector.broadcast %506 : vector<16x1xf32> to vector<16x32xf32>
    %508 = arith.mulf %503, %507 : vector<16x32xf32>
    %509 = vector.broadcast %488 : vector<1x32xf32> to vector<16x32xf32>
    %510 = arith.mulf %508, %509 : vector<16x32xf32>
    %511 = vector.broadcast %490 : vector<1x32xf32> to vector<16x32xf32>
    %512 = arith.addf %510, %511 : vector<16x32xf32>
    %513 = arith.truncf %512 : vector<16x32xf32> to vector<16x32xbf16>
    %c1_302 = arith.constant 1 : index
    %c0_303 = arith.constant 0 : index
    %c0_304 = arith.constant 0 : index
    %514 = vector.load %arg15[%c1_302, %c0_303, %c0_304] : memref<2x32x64xbf16, #tpu.memory_space<vmem>>, vector<1x32x64xbf16>
    %515 = vector.shape_cast %514 : vector<1x32x64xbf16> to vector<32x64xbf16>
    %cst_305 = arith.constant dense<0.000000e+00> : vector<16x64xf32>
    %516 = tpu.matmul %513, %515, %cst_305 {dimension_numbers = #tpu.dot_dimension_numbers<[1], [0], [0], [1], [0, 0, 1, 1], [], []>} : vector<16x32xbf16>, vector<32x64xbf16>, vector<16x64xf32> -> vector<16x64xf32>
    %c1_306 = arith.constant 1 : index
    %c0_307 = arith.constant 0 : index
    %c0_308 = arith.constant 0 : index
    %517 = vector.load %arg16[%c1_306, %c0_307, %c0_308] : memref<2x1x64xf32, #tpu.memory_space<vmem>>, vector<1x1x64xf32>
    %518 = vector.shape_cast %517 : vector<1x1x64xf32> to vector<1x64xf32>
    %519 = vector.broadcast %518 : vector<1x64xf32> to vector<16x64xf32>
    %520 = arith.addf %516, %519 : vector<16x64xf32>
    %cst_309 = arith.constant 5.000000e-01 : f32
    %521 = vector.broadcast %cst_309 : f32 to vector<16x64xf32>
    %522 = arith.mulf %521, %520 : vector<16x64xf32>
    %cst_310 = arith.constant 4.471500e-02 : f32
    %523 = vector.broadcast %cst_310 : f32 to vector<16x64xf32>
    %524 = arith.mulf %523, %520 : vector<16x64xf32>
    %525 = arith.mulf %524, %520 : vector<16x64xf32>
    %526 = arith.mulf %525, %520 : vector<16x64xf32>
    %527 = arith.addf %520, %526 : vector<16x64xf32>
    %cst_311 = arith.constant 0.797884583 : f32
    %528 = vector.broadcast %cst_311 : f32 to vector<16x64xf32>
    %529 = arith.mulf %528, %527 : vector<16x64xf32>
    %530 = math.tanh %529 : vector<16x64xf32>
    %cst_312 = arith.constant 1.000000e+00 : f32
    %531 = vector.broadcast %cst_312 : f32 to vector<16x64xf32>
    %532 = arith.addf %531, %530 : vector<16x64xf32>
    %533 = arith.mulf %522, %532 : vector<16x64xf32>
    %534 = arith.truncf %533 : vector<16x64xf32> to vector<16x64xbf16>
    %c1_313 = arith.constant 1 : index
    %c0_314 = arith.constant 0 : index
    %c0_315 = arith.constant 0 : index
    %535 = vector.load %arg17[%c1_313, %c0_314, %c0_315] : memref<2x64x32xbf16, #tpu.memory_space<vmem>>, vector<1x64x32xbf16>
    %536 = vector.shape_cast %535 : vector<1x64x32xbf16> to vector<64x32xbf16>
    %cst_316 = arith.constant dense<0.000000e+00> : vector<16x32xf32>
    %537 = tpu.matmul %534, %536, %cst_316 {dimension_numbers = #tpu.dot_dimension_numbers<[1], [0], [0], [1], [0, 0, 1, 1], [], []>} : vector<16x64xbf16>, vector<64x32xbf16>, vector<16x32xf32> -> vector<16x32xf32>
    %c1_317 = arith.constant 1 : index
    %c0_318 = arith.constant 0 : index
    %c0_319 = arith.constant 0 : index
    %538 = vector.load %arg18[%c1_317, %c0_318, %c0_319] : memref<2x1x32xf32, #tpu.memory_space<vmem>>, vector<1x1x32xf32>
    %539 = vector.shape_cast %538 : vector<1x1x32xf32> to vector<1x32xf32>
    %540 = vector.broadcast %539 : vector<1x32xf32> to vector<16x32xf32>
    %541 = arith.addf %537, %540 : vector<16x32xf32>
    %542 = arith.addf %541, %512 : vector<16x32xf32>
    %c1_320 = arith.constant 1 : index
    %c0_321 = arith.constant 0 : index
    %c0_322 = arith.constant 0 : index
    %543 = vector.load %arg19[%c1_320, %c0_321, %c0_322] : memref<2x1x32xf32, #tpu.memory_space<vmem>>, vector<1x1x32xf32>
    %544 = vector.shape_cast %543 : vector<1x1x32xf32> to vector<1x32xf32>
    %c1_323 = arith.constant 1 : index
    %c0_324 = arith.constant 0 : index
    %c0_325 = arith.constant 0 : index
    %545 = vector.load %arg20[%c1_323, %c0_324, %c0_325] : memref<2x1x32xf32, #tpu.memory_space<vmem>>, vector<1x1x32xf32>
    %546 = vector.shape_cast %545 : vector<1x1x32xf32> to vector<1x32xf32>
    %cst_326 = arith.constant dense<0.000000e+00> : vector<16xf32>
    %547 = vector.multi_reduction <add>, %542, %cst_326 [1] : vector<16x32xf32> to vector<16xf32>
    %548 = vector.shape_cast %547 : vector<16xf32> to vector<16x1xf32>
    %cst_327 = arith.constant 3.200000e+01 : f32
    %549 = vector.broadcast %cst_327 : f32 to vector<16x1xf32>
    %550 = arith.divf %548, %549 : vector<16x1xf32>
    %551 = vector.broadcast %550 : vector<16x1xf32> to vector<16x32xf32>
    %552 = arith.subf %542, %551 : vector<16x32xf32>
    %553 = arith.mulf %552, %552 : vector<16x32xf32>
    %cst_328 = arith.constant dense<0.000000e+00> : vector<16xf32>
    %554 = vector.multi_reduction <add>, %553, %cst_328 [1] : vector<16x32xf32> to vector<16xf32>
    %555 = vector.shape_cast %554 : vector<16xf32> to vector<16x1xf32>
    %cst_329 = arith.constant 3.200000e+01 : f32
    %556 = vector.broadcast %cst_329 : f32 to vector<16x1xf32>
    %557 = arith.divf %555, %556 : vector<16x1xf32>
    %558 = vector.broadcast %550 : vector<16x1xf32> to vector<16x32xf32>
    %559 = arith.subf %542, %558 : vector<16x32xf32>
    %cst_330 = arith.constant 9.99999996E-13 : f32
    %560 = vector.broadcast %cst_330 : f32 to vector<16x1xf32>
    %561 = arith.addf %557, %560 : vector<16x1xf32>
    %562 = math.rsqrt %561 : vector<16x1xf32>
    %563 = vector.broadcast %562 : vector<16x1xf32> to vector<16x32xf32>
    %564 = arith.mulf %559, %563 : vector<16x32xf32>
    %565 = vector.broadcast %544 : vector<1x32xf32> to vector<16x32xf32>
    %566 = arith.mulf %564, %565 : vector<16x32xf32>
    %567 = vector.broadcast %546 : vector<1x32xf32> to vector<16x32xf32>
    %568 = arith.addf %566, %567 : vector<16x32xf32>
    %569 = arith.truncf %568 : vector<16x32xf32> to vector<16x32xbf16>
    %c0_331 = arith.constant 0 : index
    %c0_332 = arith.constant 0 : index
    %570 = vector.load %arg21[%c0_331, %c0_332] : memref<32x32xbf16, #tpu.memory_space<vmem>>, vector<32x32xbf16>
    %cst_333 = arith.constant dense<0.000000e+00> : vector<16x32xf32>
    %571 = tpu.matmul %569, %570, %cst_333 {dimension_numbers = #tpu.dot_dimension_numbers<[1], [0], [0], [1], [0, 0, 1, 1], [], []>} : vector<16x32xbf16>, vector<32x32xbf16>, vector<16x32xf32> -> vector<16x32xf32>
    %c0_334 = arith.constant 0 : index
    %c0_335 = arith.constant 0 : index
    %572 = vector.load %arg22[%c0_334, %c0_335] : memref<1x32xf32, #tpu.memory_space<vmem>>, vector<1x32xf32>
    %573 = vector.broadcast %572 : vector<1x32xf32> to vector<16x32xf32>
    %574 = arith.addf %571, %573 : vector<16x32xf32>
    %cst_336 = arith.constant 0.000000e+00 : f32
    %575 = vector.broadcast %cst_336 : f32 to vector<16x32xf32>
    %576 = arith.maximumf %574, %575 : vector<16x32xf32>
    %577 = arith.truncf %576 : vector<16x32xf32> to vector<16x32xbf16>
    %c0_337 = arith.constant 0 : index
    %c0_338 = arith.constant 0 : index
    %578 = vector.load %arg23[%c0_337, %c0_338] : memref<32x128xbf16, #tpu.memory_space<vmem>>, vector<32x128xbf16>
    %cst_339 = arith.constant dense<0.000000e+00> : vector<16x128xf32>
    %579 = tpu.matmul %577, %578, %cst_339 {dimension_numbers = #tpu.dot_dimension_numbers<[1], [0], [0], [1], [0, 0, 1, 1], [], []>} : vector<16x32xbf16>, vector<32x128xbf16>, vector<16x128xf32> -> vector<16x128xf32>
    %c0_340 = arith.constant 0 : index
    %c0_341 = arith.constant 0 : index
    %580 = vector.load %arg24[%c0_340, %c0_341] : memref<1x128xf32, #tpu.memory_space<vmem>>, vector<1x128xf32>
    %581 = vector.broadcast %580 : vector<1x128xf32> to vector<16x128xf32>
    %582 = arith.addf %579, %581 : vector<16x128xf32>
    %c0_342 = arith.constant 0 : index
    %c0_343 = arith.constant 0 : index
    %583 = vector.load %arg25[%c0_342, %c0_343] : memref<16x128xf32, #tpu.memory_space<vmem>>, vector<16x128xf32>
    tpu.vector_store %arg25[%c0_342, %c0_343], %582 {strides = array<i32>} : memref<16x128xf32, #tpu.memory_space<vmem>>, vector<16x128xf32>,
    return
  }
  func.func @transform_0(%arg0: i32) -> (i32, i32) {
    %c0_i32 = arith.constant 0 : i32
    %c0_i32_0 = arith.constant 0 : i32
    return %arg0, %c0_i32 : i32, i32
  }
  func.func @transform_1(%arg0: i32) -> (i32, i32, i32) {
    %c0_i32 = arith.constant 0 : i32
    %c0_i32_0 = arith.constant 0 : i32
    %c0_i32_1 = arith.constant 0 : i32
    return %arg0, %c0_i32, %c0_i32_0 : i32, i32, i32
  }
  func.func @transform_2(%arg0: i32) -> (i32, i32) {
    %c0_i32 = arith.constant 0 : i32
    %c0_i32_0 = arith.constant 0 : i32
    %c0_i32_1 = arith.constant 0 : i32
    return %c0_i32, %c0_i32_0 : i32, i32
  }
  func.func @transform_3(%arg0: i32) -> (i32, i32) {
    %c0_i32 = arith.constant 0 : i32
    %c0_i32_0 = arith.constant 0 : i32
    %c0_i32_1 = arith.constant 0 : i32
    return %c0_i32, %c0_i32_0 : i32, i32
  }
  func.func @transform_4(%arg0: i32) -> (i32, i32, i32) {
    %c0_i32 = arith.constant 0 : i32
    %c0_i32_0 = arith.constant 0 : i32
    %c0_i32_1 = arith.constant 0 : i32
    %c0_i32_2 = arith.constant 0 : i32
    return %c0_i32, %c0_i32_0, %c0_i32_1 : i32, i32, i32
  }
  func.func @transform_5(%arg0: i32) -> (i32, i32, i32) {
    %c0_i32 = arith.constant 0 : i32
    %c0_i32_0 = arith.constant 0 : i32
    %c0_i32_1 = arith.constant 0 : i32
    %c0_i32_2 = arith.constant 0 : i32
    return %c0_i32, %c0_i32_0, %c0_i32_1 : i32, i32, i32
  }
  func.func @transform_6(%arg0: i32) -> (i32, i32, i32) {
    %c0_i32 = arith.constant 0 : i32
    %c0_i32_0 = arith.constant 0 : i32
    %c0_i32_1 = arith.constant 0 : i32
    %c0_i32_2 = arith.constant 0 : i32
    return %c0_i32, %c0_i32_0, %c0_i32_1 : i32, i32, i32
  }
  func.func @transform_7(%arg0: i32) -> (i32, i32, i32) {
    %c0_i32 = arith.constant 0 : i32
    %c0_i32_0 = arith.constant 0 : i32
    %c0_i32_1 = arith.constant 0 : i32
    %c0_i32_2 = arith.constant 0 : i32
    return %c0_i32, %c0_i32_0, %c0_i32_1 : i32, i32, i32
  }
  func.func @transform_8(%arg0: i32) -> (i32, i32, i32) {
    %c0_i32 = arith.constant 0 : i32
    %c0_i32_0 = arith.constant 0 : i32
    %c0_i32_1 = arith.constant 0 : i32
    %c0_i32_2 = arith.constant 0 : i32
    return %c0_i32, %c0_i32_0, %c0_i32_1 : i32, i32, i32
  }
  func.func @transform_9(%arg0: i32) -> (i32, i32, i32) {
    %c0_i32 = arith.constant 0 : i32
    %c0_i32_0 = arith.constant 0 : i32
    %c0_i32_1 = arith.constant 0 : i32
    %c0_i32_2 = arith.constant 0 : i32
    return %c0_i32, %c0_i32_0, %c0_i32_1 : i32, i32, i32
  }
  func.func @transform_10(%arg0: i32) -> (i32, i32, i32) {
    %c0_i32 = arith.constant 0 : i32
    %c0_i32_0 = arith.constant 0 : i32
    %c0_i32_1 = arith.constant 0 : i32
    %c0_i32_2 = arith.constant 0 : i32
    return %c0_i32, %c0_i32_0, %c0_i32_1 : i32, i32, i32
  }
  func.func @transform_11(%arg0: i32) -> (i32, i32, i32) {
    %c0_i32 = arith.constant 0 : i32
    %c0_i32_0 = arith.constant 0 : i32
    %c0_i32_1 = arith.constant 0 : i32
    %c0_i32_2 = arith.constant 0 : i32
    return %c0_i32, %c0_i32_0, %c0_i32_1 : i32, i32, i32
  }
  func.func @transform_12(%arg0: i32) -> (i32, i32, i32) {
    %c0_i32 = arith.constant 0 : i32
    %c0_i32_0 = arith.constant 0 : i32
    %c0_i32_1 = arith.constant 0 : i32
    %c0_i32_2 = arith.constant 0 : i32
    return %c0_i32, %c0_i32_0, %c0_i32_1 : i32, i32, i32
  }
  func.func @transform_13(%arg0: i32) -> (i32, i32, i32) {
    %c0_i32 = arith.constant 0 : i32
    %c0_i32_0 = arith.constant 0 : i32
    %c0_i32_1 = arith.constant 0 : i32
    %c0_i32_2 = arith.constant 0 : i32
    return %c0_i32, %c0_i32_0, %c0_i32_1 : i32, i32, i32
  }
  func.func @transform_14(%arg0: i32) -> (i32, i32, i32) {
    %c0_i32 = arith.constant 0 : i32
    %c0_i32_0 = arith.constant 0 : i32
    %c0_i32_1 = arith.constant 0 : i32
    %c0_i32_2 = arith.constant 0 : i32
    return %c0_i32, %c0_i32_0, %c0_i32_1 : i32, i32, i32
  }
  func.func @transform_15(%arg0: i32) -> (i32, i32, i32) {
    %c0_i32 = arith.constant 0 : i32
    %c0_i32_0 = arith.constant 0 : i32
    %c0_i32_1 = arith.constant 0 : i32
    %c0_i32_2 = arith.constant 0 : i32
    return %c0_i32, %c0_i32_0, %c0_i32_1 : i32, i32, i32
  }
  func.func @transform_16(%arg0: i32) -> (i32, i32, i32) {
    %c0_i32 = arith.constant 0 : i32
    %c0_i32_0 = arith.constant 0 : i32
    %c0_i32_1 = arith.constant 0 : i32
    %c0_i32_2 = arith.constant 0 : i32
    return %c0_i32, %c0_i32_0, %c0_i32_1 : i32, i32, i32
  }
  func.func @transform_17(%arg0: i32) -> (i32, i32, i32) {
    %c0_i32 = arith.constant 0 : i32
    %c0_i32_0 = arith.constant 0 : i32
    %c0_i32_1 = arith.constant 0 : i32
    %c0_i32_2 = arith.constant 0 : i32
    return %c0_i32, %c0_i32_0, %c0_i32_1 : i32, i32, i32
  }
  func.func @transform_18(%arg0: i32) -> (i32, i32, i32) {
    %c0_i32 = arith.constant 0 : i32
    %c0_i32_0 = arith.constant 0 : i32
    %c0_i32_1 = arith.constant 0 : i32
    %c0_i32_2 = arith.constant 0 : i32
    return %c0_i32, %c0_i32_0, %c0_i32_1 : i32, i32, i32
  }
  func.func @transform_19(%arg0: i32) -> (i32, i32, i32) {
    %c0_i32 = arith.constant 0 : i32
    %c0_i32_0 = arith.constant 0 : i32
    %c0_i32_1 = arith.constant 0 : i32
    %c0_i32_2 = arith.constant 0 : i32
    return %c0_i32, %c0_i32_0, %c0_i32_1 : i32, i32, i32
  }
  func.func @transform_20(%arg0: i32) -> (i32, i32) {
    %c0_i32 = arith.constant 0 : i32
    %c0_i32_0 = arith.constant 0 : i32
    %c0_i32_1 = arith.constant 0 : i32
    return %c0_i32, %c0_i32_0 : i32, i32
  }
  func.func @transform_21(%arg0: i32) -> (i32, i32) {
    %c0_i32 = arith.constant 0 : i32
    %c0_i32_0 = arith.constant 0 : i32
    %c0_i32_1 = arith.constant 0 : i32
    return %c0_i32, %c0_i32_0 : i32, i32
  }
  func.func @transform_22(%arg0: i32) -> (i32, i32) {
    %c0_i32 = arith.constant 0 : i32
    %c0_i32_0 = arith.constant 0 : i32
    %c0_i32_1 = arith.constant 0 : i32
    return %c0_i32, %c0_i32_0 : i32, i32
  }
  func.func @transform_23(%arg0: i32) -> (i32, i32) {
    %c0_i32 = arith.constant 0 : i32
    %c0_i32_0 = arith.constant 0 : i32
    %c0_i32_1 = arith.constant 0 : i32
    return %c0_i32, %c0_i32_0 : i32, i32
  }
  func.func @transform_24(%arg0: i32) -> (i32, i32) {
    %c0_i32 = arith.constant 0 : i32
    %c0_i32_0 = arith.constant 0 : i32
    return %arg0, %c0_i32 : i32, i32
  }
}

</mosaic_0001>

<llo_original>
// kernel: tpu_custom_call.1
$region0: #{tpu_custom_call.1}
  #allocation0 [shape = 'u32[]', space=smem, size = 0x4, offset = 0x4, fixed_abs, tag = 'smem constant byte address 0x4 - core index']
  #allocation1 [shape = 'u32[72,128]{1,0:T(1,128)}', space=vmem, size = 0x9000, scoped, tag = 'internal scratch']
  %s0 = inlined_call_operand.vmem [shape: f32[16,32], index: 0, kind: input, shape index: {}]
  %s1 = inlined_call_operand.vmem [shape: f32[1,16,16], index: 1, kind: input, shape index: {}]
  %s2 = inlined_call_operand.vmem [shape: f32[1,32], index: 2, kind: input, shape index: {}]
  %s3 = inlined_call_operand.vmem [shape: f32[1,32], index: 3, kind: input, shape index: {}]
  %s4 = inlined_call_operand.vmem [shape: bf16[8,32,8], index: 4, kind: input, shape index: {}]
  %s5 = inlined_call_operand.vmem [shape: f32[8,1,8], index: 5, kind: input, shape index: {}]
  %s6 = inlined_call_operand.vmem [shape: bf16[8,32,8], index: 6, kind: input, shape index: {}]
  %s7 = inlined_call_operand.vmem [shape: f32[8,1,8], index: 7, kind: input, shape index: {}]
  %s8 = inlined_call_operand.vmem [shape: bf16[8,32,8], index: 8, kind: input, shape index: {}]
  %s9 = inlined_call_operand.vmem [shape: f32[8,1,8], index: 9, kind: input, shape index: {}]
  %s10 = inlined_call_operand.vmem [shape: bf16[8,8,32], index: 10, kind: input, shape index: {}]
  %s11 = inlined_call_operand.vmem [shape: f32[2,1,32], index: 11, kind: input, shape index: {}]
  %s12 = inlined_call_operand.vmem [shape: f32[2,1,32], index: 12, kind: input, shape index: {}]
  %s13 = inlined_call_operand.vmem [shape: f32[2,1,32], index: 13, kind: input, shape index: {}]
  %s14 = inlined_call_operand.vmem [shape: bf16[2,32,64], index: 14, kind: input, shape index: {}]
  %s15 = inlined_call_operand.vmem [shape: f32[2,1,64], index: 15, kind: input, shape index: {}]
  %s16 = inlined_call_operand.vmem [shape: bf16[2,64,32], index: 16, kind: input, shape index: {}]
  %s17 = inlined_call_operand.vmem [shape: f32[2,1,32], index: 17, kind: input, shape index: {}]
  %s18 = inlined_call_operand.vmem [shape: f32[2,1,32], index: 18, kind: input, shape index: {}]
  %s19 = inlined_call_operand.vmem [shape: f32[2,1,32], index: 19, kind: input, shape index: {}]
  %s20 = inlined_call_operand.vmem [shape: bf16[32,32], index: 20, kind: input, shape index: {}]
  %s21 = inlined_call_operand.vmem [shape: f32[1,32], index: 21, kind: input, shape index: {}]
  %s22 = inlined_call_operand.vmem [shape: bf16[32,128], index: 22, kind: input, shape index: {}]
  %s23 = inlined_call_operand.vmem [shape: f32[1,128], index: 23, kind: input, shape index: {}]
  %s24 = inlined_call_operand.hbm [shape: f32[16,128], index: 24, kind: output, shape index: {}]
  %s25 = sld [smem:[#allocation0]]
  $region106: #{tpu_custom_call.1} parent=0
    _
  %s27 = ssub.s32 1, %s25
  %s28 = scalar_select 0, %s27, %s25
  $region1: #{tpu_custom_call.1} parent=0
    #allocation2 [shape = 'u8[8192]{0}', space=vmem, size = 0x2000, scoped, tag = 'output window, operand 0, single buffered']
    #allocation3 [shape = 's32[1]{0}', space=sflag, size = 0x4, scoped, tag = 'scoped memory for tpu_custom_call.1']
    %29 = vsyncpa [#allocation3], 0
    // Predicated region
    $region2: #{tpu_custom_call.1} parent=1 // pred_check
      _
    $region3: #{tpu_custom_call.1} parent=1 // pred_check_branch
      %31 = sbr.rel (0) target = $region5
    $region4: #{tpu_custom_call.1} parent=1 // pred_region
      _
    $region5: #{tpu_custom_call.1} parent=1 // pred_fallthru
      _
    // Predicated region
    $region6: #{tpu_custom_call.1} parent=1 // pred_check
      _
    $region7: #{tpu_custom_call.1} parent=1 // pred_check_branch
      %33 = sbr.rel (0) target = $region9
    $region8: #{tpu_custom_call.1} parent=1 // pred_region
      _
    $region9: #{tpu_custom_call.1} parent=1 // pred_fallthru
      _
    // Predicated region
    $region10: #{tpu_custom_call.1} parent=1 // pred_check
      _
    $region11: #{tpu_custom_call.1} parent=1 // pred_check_branch
      %35 = sbr.rel (0) target = $region13
    $region12: #{tpu_custom_call.1} parent=1 // pred_region
      _
    $region13: #{tpu_custom_call.1} parent=1 // pred_fallthru
      _
    // Predicated region
    $region14: #{tpu_custom_call.1} parent=1 // pred_check
      _
    $region15: #{tpu_custom_call.1} parent=1 // pred_check_branch
      %37 = sbr.rel (0) target = $region17
    $region16: #{tpu_custom_call.1} parent=1 // pred_region
      _
    $region17: #{tpu_custom_call.1} parent=1 // pred_fallthru
      _
    // Predicated region
    $region18: #{tpu_custom_call.1} parent=1 // pred_check
      _
    $region19: #{tpu_custom_call.1} parent=1 // pred_check_branch
      %39 = sbr.rel (0) target = $region21
    $region20: #{tpu_custom_call.1} parent=1 // pred_region
      _
    $region21: #{tpu_custom_call.1} parent=1 // pred_fallthru
      _
    // Predicated region
    $region22: #{tpu_custom_call.1} parent=1 // pred_check
      _
    $region23: #{tpu_custom_call.1} parent=1 // pred_check_branch
      %41 = sbr.rel (0) target = $region25
    $region24: #{tpu_custom_call.1} parent=1 // pred_region
      _
    $region25: #{tpu_custom_call.1} parent=1 // pred_fallthru
      _
    // Predicated region
    $region26: #{tpu_custom_call.1} parent=1 // pred_check
      _
    $region27: #{tpu_custom_call.1} parent=1 // pred_check_branch
      %43 = sbr.rel (0) target = $region29
    $region28: #{tpu_custom_call.1} parent=1 // pred_region
      _
    $region29: #{tpu_custom_call.1} parent=1 // pred_fallthru
      _
    // Predicated region
    $region30: #{tpu_custom_call.1} parent=1 // pred_check
      _
    $region31: #{tpu_custom_call.1} parent=1 // pred_check_branch
      %45 = sbr.rel (0) target = $region33
    $region32: #{tpu_custom_call.1} parent=1 // pred_region
      _
    $region33: #{tpu_custom_call.1} parent=1 // pred_fallthru
      _
    // Predicated region
    $region34: #{tpu_custom_call.1} parent=1 // pred_check
      _
    $region35: #{tpu_custom_call.1} parent=1 // pred_check_branch
      %47 = sbr.rel (0) target = $region37
    $region36: #{tpu_custom_call.1} parent=1 // pred_region
      _
    $region37: #{tpu_custom_call.1} parent=1 // pred_fallthru
      _
    // Predicated region
    $region38: #{tpu_custom_call.1} parent=1 // pred_check
      _
    $region39: #{tpu_custom_call.1} parent=1 // pred_check_branch
      %49 = sbr.rel (0) target = $region41
    $region40: #{tpu_custom_call.1} parent=1 // pred_region
      _
    $region41: #{tpu_custom_call.1} parent=1 // pred_fallthru
      _
    // Predicated region
    $region42: #{tpu_custom_call.1} parent=1 // pred_check
      _
    $region43: #{tpu_custom_call.1} parent=1 // pred_check_branch
      %51 = sbr.rel (0) target = $region45
    $region44: #{tpu_custom_call.1} parent=1 // pred_region
      _
    $region45: #{tpu_custom_call.1} parent=1 // pred_fallthru
      _
    // Predicated region
    $region46: #{tpu_custom_call.1} parent=1 // pred_check
      _
    $region47: #{tpu_custom_call.1} parent=1 // pred_check_branch
      %53 = sbr.rel (0) target = $region49
    $region48: #{tpu_custom_call.1} parent=1 // pred_region
      _
    $region49: #{tpu_custom_call.1} parent=1 // pred_fallthru
      _
    // Predicated region
    $region50: #{tpu_custom_call.1} parent=1 // pred_check
      _
    $region51: #{tpu_custom_call.1} parent=1 // pred_check_branch
      %55 = sbr.rel (0) target = $region53
    $region52: #{tpu_custom_call.1} parent=1 // pred_region
      _
    $region53: #{tpu_custom_call.1} parent=1 // pred_fallthru
      _
    // Predicated region
    $region54: #{tpu_custom_call.1} parent=1 // pred_check
      _
    $region55: #{tpu_custom_call.1} parent=1 // pred_check_branch
      %57 = sbr.rel (0) target = $region57
    $region56: #{tpu_custom_call.1} parent=1 // pred_region
      _
    $region57: #{tpu_custom_call.1} parent=1 // pred_fallthru
      _
    // Predicated region
    $region58: #{tpu_custom_call.1} parent=1 // pred_check
      _
    $region59: #{tpu_custom_call.1} parent=1 // pred_check_branch
      %59 = sbr.rel (0) target = $region61
    $region60: #{tpu_custom_call.1} parent=1 // pred_region
      _
    $region61: #{tpu_custom_call.1} parent=1 // pred_fallthru
      _
    // Predicated region
    $region62: #{tpu_custom_call.1} parent=1 // pred_check
      _
    $region63: #{tpu_custom_call.1} parent=1 // pred_check_branch
      %61 = sbr.rel (0) target = $region65
    $region64: #{tpu_custom_call.1} parent=1 // pred_region
      _
    $region65: #{tpu_custom_call.1} parent=1 // pred_fallthru
      _
    // Predicated region
    $region66: #{tpu_custom_call.1} parent=1 // pred_check
      _
    $region67: #{tpu_custom_call.1} parent=1 // pred_check_branch
      %63 = sbr.rel (0) target = $region69
    $region68: #{tpu_custom_call.1} parent=1 // pred_region
      _
    $region69: #{tpu_custom_call.1} parent=1 // pred_fallthru
      _
    // Predicated region
    $region70: #{tpu_custom_call.1} parent=1 // pred_check
      _
    $region71: #{tpu_custom_call.1} parent=1 // pred_check_branch
      %65 = sbr.rel (0) target = $region73
    $region72: #{tpu_custom_call.1} parent=1 // pred_region
      _
    $region73: #{tpu_custom_call.1} parent=1 // pred_fallthru
      _
    // Predicated region
    $region74: #{tpu_custom_call.1} parent=1 // pred_check
      _
    $region75: #{tpu_custom_call.1} parent=1 // pred_check_branch
      %67 = sbr.rel (0) target = $region77
    $region76: #{tpu_custom_call.1} parent=1 // pred_region
      _
    $region77: #{tpu_custom_call.1} parent=1 // pred_fallthru
      _
    // Predicated region
    $region78: #{tpu_custom_call.1} parent=1 // pred_check
      _
    $region79: #{tpu_custom_call.1} parent=1 // pred_check_branch
      %69 = sbr.rel (0) target = $region81
    $region80: #{tpu_custom_call.1} parent=1 // pred_region
      _
    $region81: #{tpu_custom_call.1} parent=1 // pred_fallthru
      _
    // Predicated region
    $region82: #{tpu_custom_call.1} parent=1 // pred_check
      _
    $region83: #{tpu_custom_call.1} parent=1 // pred_check_branch
      %71 = sbr.rel (0) target = $region85
    $region84: #{tpu_custom_call.1} parent=1 // pred_region
      _
    $region85: #{tpu_custom_call.1} parent=1 // pred_fallthru
      _
    // Predicated region
    $region86: #{tpu_custom_call.1} parent=1 // pred_check
      _
    $region87: #{tpu_custom_call.1} parent=1 // pred_check_branch
      %73 = sbr.rel (0) target = $region89
    $region88: #{tpu_custom_call.1} parent=1 // pred_region
      _
    $region89: #{tpu_custom_call.1} parent=1 // pred_fallthru
      _
    // Predicated region
    $region90: #{tpu_custom_call.1} parent=1 // pred_check
      _
    $region91: #{tpu_custom_call.1} parent=1 // pred_check_branch
      %75 = sbr.rel (0) target = $region93
    $region92: #{tpu_custom_call.1} parent=1 // pred_region
      _
    $region93: #{tpu_custom_call.1} parent=1 // pred_fallthru
      _
    // Predicated region
    $region94: #{tpu_custom_call.1} parent=1 // pred_check
      _
    $region95: #{tpu_custom_call.1} parent=1 // pred_check_branch
      %77 = sbr.rel (0) target = $region97
    $region96: #{tpu_custom_call.1} parent=1 // pred_region
      _
    $region97: #{tpu_custom_call.1} parent=1 // pred_fallthru
      _
    %v79 = vld [vmem:[%s1] sm:$0xff]
    %v80 = vld [vmem:[%s1 + $0x8] sm:$0xff]
    %v81 = vld [vmem:[%s0] sm:$0xff]
    %v82 = vld [vmem:[%s0 + $0x8] sm:$0xff]
    %v83 = vld [vmem:[%s2] sm:$0x1]
    %v84 = vld [vmem:[%s3] sm:$0x1]
    %vm85 = vcmask 261120
    %v86 = vsel %vm85, %v81, 0.0
    %87 = vadd.xlane.f32.xlu0 %v86
    %v88 = vpop.xlane.xlu0 %87
    %v89 = vsel %vm85, %v82, 0.0
    %90 = vadd.xlane.f32.xlu0 %v89
    %v91 = vpop.xlane.xlu0 %90
    %v92 = vrcp.pop 32.0
    %v93 = vmul.f32 32.0, %v92
    %v94 = vsub.f32 1.0, %v93
    %v95 = vmul.f32 %v92, %v94
    %v96 = vadd.f32 %v92, %v95
    %vm97 = vweird.f32 %v92
    %v98 = vsel %vm97, %v92, %v96
    %v99 = vmul.f32 %v88, %v98
    %v100 = vmul.f32 %v91, %v98
    %v101 = vsub.f32 %v81, %v99
    %v102 = vsub.f32 %v82, %v100
    %v103 = vmul.f32 %v101, %v101
    %v104 = vmul.f32 %v102, %v102
    %v105 = vsel %vm85, %v103, 0.0
    %106 = vadd.xlane.f32.xlu0 %v105
    %v107 = vpop.xlane.xlu0 %106
    %v108 = vsel %vm85, %v104, 0.0
    %109 = vadd.xlane.f32.xlu0 %v108
    %v110 = vpop.xlane.xlu0 %109
    %v111 = vmul.f32 %v107, %v98
    %v112 = vmul.f32 %v110, %v98
    %v113 = vadd.f32 %v111, 1e-12
    %v114 = vadd.f32 %v112, 1e-12
    %v115 = vrsqrt.pop %v113
    %v116 = vmul.f32 %v115, %v113
    %v117 = vmul.f32 %v116, %v115
    %v118 = vmul.f32 0.5, %v117
    %v119 = vsub.f32 1.5, %v118
    %v120 = vmul.f32 %v115, %v119
    %vm121 = vweird.f32 %v113
    %vm122 = vweird.f32 %v115
    %vm123 = vmor %vm121, %vm122
    %v124 = vsel %vm123, %v115, %v120
    %v125 = vrsqrt.pop %v114
    %v126 = vmul.f32 %v125, %v114
    %v127 = vmul.f32 %v126, %v125
    %v128 = vmul.f32 0.5, %v127
    %v129 = vsub.f32 1.5, %v128
    %v130 = vmul.f32 %v125, %v129
    %vm131 = vweird.f32 %v114
    %vm132 = vweird.f32 %v125
    %vm133 = vmor %vm131, %vm132
    %v134 = vsel %vm133, %v125, %v130
    %v135 = vmul.f32 %v101, %v124
    %v136 = vmul.f32 %v102, %v134
    %v138 = vperm.slane %v83, 0
    %v140 = vmul.f32 %v135, %v138
    %v141 = vmul.f32 %v136, %v138
    %v143 = vperm.slane %v84, 0
    %v145 = vadd.f32 %v140, %v143
    %v146 = vadd.f32 %v141, %v143
    %v147 = vpack.c.bf16 %v146, %v145
    %v148 = vld [vmem:[%s4] sm:$0xf]
    %v149 = vld [vmem:[%s4 + $0x4] sm:$0xf]
    %v150 = vld [vmem:[%s4 + $0x8] sm:$0xf]
    %v151 = vld [vmem:[%s4 + $0xc] sm:$0xf]
    %v152 = vld [vmem:[%s5] sm:$0x1]
    %v154 = vperm.slane %v152, 0
    %v160 = vunpack.c.l.b16 %v148
    %v161 = vunpack.c.l.b16 %v149
    %v162 = vunpack.c.l.b16 %v150
    %v163 = vunpack.c.l.b16 %v151
    %v164 = vpack.c.b16 %v161, %v160
    %v165 = vpack.c.b16 %v163, %v162
    %v169 = vsel %vm85, %v147, 0
    %171 = vmatpush.bf16.msra.mxu0 0
    %172 = vmatpush.bf16.msra.mxu0 0
    %173 = vmatpush.bf16.msra.mxu0 0
    %174 = vmatpush.bf16.msra.mxu0 0
    %175 = vmatpush.bf16.msra.mxu0 0
    %176 = vmatpush.bf16.msra.mxu0 0
    %177 = vmatpush.bf16.msra.mxu0 %v165
    %178 = vmatpush.bf16.msra.mxu0 %v164
    %179 = vmatmul.bf16.gmra.mxu0 %v169
    %v180 = vpop.f32.mrf.mxu0
    %v181 = vadd.f32 %v154, %v180
    %v182 = vpop.f32.mrf.mxu0
    %v183 = vadd.f32 %v154, %v182
    %184 = vdwg.mxu0
    %v185 = vld [vmem:[%s6] sm:$0xf]
    %v186 = vld [vmem:[%s6 + $0x4] sm:$0xf]
    %v187 = vld [vmem:[%s6 + $0x8] sm:$0xf]
    %v188 = vld [vmem:[%s6 + $0xc] sm:$0xf]
    %v189 = vld [vmem:[%s7] sm:$0x1]
    %v191 = vperm.slane %v189, 0
    %v197 = vunpack.c.l.b16 %v185
    %v198 = vunpack.c.l.b16 %v186
    %v199 = vunpack.c.l.b16 %v187
    %v200 = vunpack.c.l.b16 %v188
    %v201 = vpack.c.b16 %v198, %v197
    %v202 = vpack.c.b16 %v200, %v199
    %205 = vmatpush.bf16.msra.mxu0 0
    %206 = vmatpush.bf16.msra.mxu0 0
    %207 = vmatpush.bf16.msra.mxu0 0
    %208 = vmatpush.bf16.msra.mxu0 0
    %209 = vmatpush.bf16.msra.mxu0 0
    %210 = vmatpush.bf16.msra.mxu0 0
    %211 = vmatpush.bf16.msra.mxu0 %v202
    %212 = vmatpush.bf16.msra.mxu0 %v201
    %213 = vmatmul.bf16.gmra.mxu0 %v169
    %v214 = vpop.f32.mrf.mxu0
    %v215 = vadd.f32 %v191, %v214
    %v216 = vpop.f32.mrf.mxu0
    %v217 = vadd.f32 %v191, %v216
    %218 = vdwg.mxu0
    %v219 = vld [vmem:[%s8] sm:$0xf]
    %v220 = vld [vmem:[%s8 + $0x4] sm:$0xf]
    %v221 = vld [vmem:[%s8 + $0x8] sm:$0xf]
    %v222 = vld [vmem:[%s8 + $0xc] sm:$0xf]
    %v223 = vld [vmem:[%s9] sm:$0x1]
    %v225 = vperm.slane %v223, 0
    %v231 = vunpack.c.l.b16 %v219
    %v232 = vunpack.c.l.b16 %v220
    %v233 = vunpack.c.l.b16 %v221
    %v234 = vunpack.c.l.b16 %v222
    %v235 = vpack.c.b16 %v232, %v231
    %v236 = vpack.c.b16 %v234, %v233
    %239 = vmatpush.bf16.msra.mxu0 0
    %240 = vmatpush.bf16.msra.mxu0 0
    %241 = vmatpush.bf16.msra.mxu0 0
    %242 = vmatpush.bf16.msra.mxu0 0
    %243 = vmatpush.bf16.msra.mxu0 0
    %244 = vmatpush.bf16.msra.mxu0 0
    %245 = vmatpush.bf16.msra.mxu0 %v236
    %246 = vmatpush.bf16.msra.mxu0 %v235
    %247 = vmatmul.bf16.gmra.mxu0 %v169
    %v248 = vpop.f32.mrf.mxu0
    %v249 = vadd.f32 %v225, %v248
    %v250 = vpop.f32.mrf.mxu0
    %v251 = vadd.f32 %v225, %v250
    %252 = vdwg.mxu0
    %v253 = vpack.c.bf16 %v183, %v181
    %v254 = vpack.c.bf16 %v217, %v215
    %vm255 = vcmask 64512
    %v257 = vsel %vm255, %v253, 0
    %v260 = vsel %vm255, %v254, 0
    %262 = vmatpush.bf16.xpose.msra.mxu0 0
    %263 = vmatpush.bf16.xpose.msra.mxu0 0
    %264 = vmatpush.bf16.xpose.msra.mxu0 0
    %265 = vmatpush.bf16.xpose.msra.mxu0 0
    %266 = vmatpush.bf16.xpose.msra.mxu0 0
    %267 = vmatpush.bf16.xpose.msra.mxu0 0
    %268 = vmatpush.bf16.xpose.msra.mxu0 0
    %269 = vmatpush.bf16.xpose.msra.mxu0 %v260
    %270 = vmatmul.bf16.gmra.mxu0 %v257
    %v271 = vpop.f32.mrf.mxu0
    %v272 = vadd.f32 0.0, %v271
    %v273 = vpop.f32.mrf.mxu0
    %v274 = vadd.f32 0.0, %v273
    %275 = vdwg.mxu0
    %v276 = vmul.f32 %v272, 0.35355338
    %v277 = vmul.f32 %v274, 0.35355338
    %v278 = vadd.f32 %v276, %v79
    %v279 = vadd.f32 %v277, %v80
    %vm280 = vcmask 130048
    %v281 = vsel %vm280, %v278, -inf
    %282 = vmax.xlane.f32.xlu0 %v281
    %v283 = vpop.xlane.xlu0 %282
    %v284 = vsel %vm280, %v279, -inf
    %285 = vmax.xlane.f32.xlu0 %v284
    %v286 = vpop.xlane.xlu0 %285
    %v287 = vsub.f32 %v278, %v283
    %v288 = vsub.f32 %v279, %v286
    %v289 = vmul.f32 %v287, 1.442695
    %v290 = vpow.pop %v289
    %v291 = vmul.f32 %v288, 1.442695
    %v292 = vpow.pop %v291
    %v293 = vsel %vm280, %v290, 0.0
    %294 = vadd.xlane.f32.xlu0 %v293
    %v295 = vpop.xlane.xlu0 %294
    %v296 = vsel %vm280, %v292, 0.0
    %297 = vadd.xlane.f32.xlu0 %v296
    %v298 = vpop.xlane.xlu0 %297
    %v299 = vrcp.pop %v295
    %v300 = vrcp.pop %v298
    %v301 = vmul.f32 %v290, %v299
    %v302 = vmul.f32 %v292, %v300
    %v303 = vpack.c.bf16 %v302, %v301
    %v304 = vpack.c.bf16 %v251, %v249
    %v306 = vsel %vm280, %v303, 0
    %308 = vmatpush.bf16.msra.mxu0 0
    %309 = vmatpush.bf16.msra.mxu0 0
    %310 = vmatpush.bf16.msra.mxu0 0
    %311 = vmatpush.bf16.msra.mxu0 0
    %312 = vmatpush.bf16.msra.mxu0 0
    %313 = vmatpush.bf16.msra.mxu0 0
    %314 = vmatpush.bf16.msra.mxu0 0
    %315 = vmatpush.bf16.msra.mxu0 %v304
    %316 = vmatmul.bf16.gmra.mxu0 %v306
    %v317 = vpop.f32.mrf.mxu0
    %v318 = vadd.f32 0.0, %v317
    %v319 = vpop.f32.mrf.mxu0
    %v320 = vadd.f32 0.0, %v319
    %321 = vdwg.mxu0
    %v322 = vpack.c.bf16 %v320, %v318
    %v323 = vld [vmem:[%s10] sm:$0xf]
    %s324 = scalar_lea.vmem %s4, 16
    %v325 = vld [vmem:[%s324] sm:$0xf]
    %v326 = vld [vmem:[%s324 + $0x4] sm:$0xf]
    %v327 = vld [vmem:[%s324 + $0x8] sm:$0xf]
    %v328 = vld [vmem:[%s324 + $0xc] sm:$0xf]
    %s329 = scalar_lea.vmem %s5, 1
    %v330 = vld [vmem:[%s329] sm:$0x1]
    %v332 = vperm.slane %v330, 0
    %v338 = vunpack.c.l.b16 %v325
    %v339 = vunpack.c.l.b16 %v326
    %v340 = vunpack.c.l.b16 %v327
    %v341 = vunpack.c.l.b16 %v328
    %v342 = vpack.c.b16 %v339, %v338
    %v343 = vpack.c.b16 %v341, %v340
    %346 = vmatpush.bf16.msra.mxu0 0
    %347 = vmatpush.bf16.msra.mxu0 0
    %348 = vmatpush.bf16.msra.mxu0 0
    %349 = vmatpush.bf16.msra.mxu0 0
    %350 = vmatpush.bf16.msra.mxu0 0
    %351 = vmatpush.bf16.msra.mxu0 0
    %352 = vmatpush.bf16.msra.mxu0 %v343
    %353 = vmatpush.bf16.msra.mxu0 %v342
    %354 = vmatmul.bf16.gmra.mxu0 %v169
    %v355 = vpop.f32.mrf.mxu0
    %v356 = vadd.f32 %v332, %v355
    %v357 = vpop.f32.mrf.mxu0
    %v358 = vadd.f32 %v332, %v357
    %359 = vdwg.mxu0
    %s360 = scalar_lea.vmem %s6, 16
    %v361 = vld [vmem:[%s360] sm:$0xf]
    %v362 = vld [vmem:[%s360 + $0x4] sm:$0xf]
    %v363 = vld [vmem:[%s360 + $0x8] sm:$0xf]
    %v364 = vld [vmem:[%s360 + $0xc] sm:$0xf]
    %s365 = scalar_lea.vmem %s7, 1
    %v366 = vld [vmem:[%s365] sm:$0x1]
    %v368 = vperm.slane %v366, 0
    %v374 = vunpack.c.l.b16 %v361
    %v375 = vunpack.c.l.b16 %v362
    %v376 = vunpack.c.l.b16 %v363
    %v377 = vunpack.c.l.b16 %v364
    %v378 = vpack.c.b16 %v375, %v374
    %v379 = vpack.c.b16 %v377, %v376
    %382 = vmatpush.bf16.msra.mxu0 0
    %383 = vmatpush.bf16.msra.mxu0 0
    %384 = vmatpush.bf16.msra.mxu0 0
    %385 = vmatpush.bf16.msra.mxu0 0
    %386 = vmatpush.bf16.msra.mxu0 0
    %387 = vmatpush.bf16.msra.mxu0 0
    %388 = vmatpush.bf16.msra.mxu0 %v379
    %389 = vmatpush.bf16.msra.mxu0 %v378
    %390 = vmatmul.bf16.gmra.mxu0 %v169
    %v391 = vpop.f32.mrf.mxu0
    %v392 = vadd.f32 %v368, %v391
    %v393 = vpop.f32.mrf.mxu0
    %v394 = vadd.f32 %v368, %v393
    %395 = vdwg.mxu0
    %s396 = scalar_lea.vmem %s8, 16
    %v397 = vld [vmem:[%s396] sm:$0xf]
    %v398 = vld [vmem:[%s396 + $0x4] sm:$0xf]
    %v399 = vld [vmem:[%s396 + $0x8] sm:$0xf]
    %v400 = vld [vmem:[%s396 + $0xc] sm:$0xf]
    %s401 = scalar_lea.vmem %s9, 1
    %v402 = vld [vmem:[%s401] sm:$0x1]
    %v404 = vperm.slane %v402, 0
    %v410 = vunpack.c.l.b16 %v397
    %v411 = vunpack.c.l.b16 %v398
    %v412 = vunpack.c.l.b16 %v399
    %v413 = vunpack.c.l.b16 %v400
    %v414 = vpack.c.b16 %v411, %v410
    %v415 = vpack.c.b16 %v413, %v412
    %418 = vmatpush.bf16.msra.mxu0 0
    %419 = vmatpush.bf16.msra.mxu0 0
    %420 = vmatpush.bf16.msra.mxu0 0
    %421 = vmatpush.bf16.msra.mxu0 0
    %422 = vmatpush.bf16.msra.mxu0 0
    %423 = vmatpush.bf16.msra.mxu0 0
    %424 = vmatpush.bf16.msra.mxu0 %v415
    %425 = vmatpush.bf16.msra.mxu0 %v414
    %426 = vmatmul.bf16.gmra.mxu0 %v169
    %v427 = vpop.f32.mrf.mxu0
    %v428 = vadd.f32 %v404, %v427
    %v429 = vpop.f32.mrf.mxu0
    %v430 = vadd.f32 %v404, %v429
    %431 = vdwg.mxu0
    %v432 = vpack.c.bf16 %v358, %v356
    %v433 = vpack.c.bf16 %v394, %v392
    %v435 = vsel %vm255, %v432, 0
    %v438 = vsel %vm255, %v433, 0
    %440 = vmatpush.bf16.xpose.msra.mxu0 0
    %441 = vmatpush.bf16.xpose.msra.mxu0 0
    %442 = vmatpush.bf16.xpose.msra.mxu0 0
    %443 = vmatpush.bf16.xpose.msra.mxu0 0
    %444 = vmatpush.bf16.xpose.msra.mxu0 0
    %445 = vmatpush.bf16.xpose.msra.mxu0 0
    %446 = vmatpush.bf16.xpose.msra.mxu0 0
    %447 = vmatpush.bf16.xpose.msra.mxu0 %v438
    %448 = vmatmul.bf16.gmra.mxu0 %v435
    %v449 = vpop.f32.mrf.mxu0
    %v450 = vadd.f32 0.0, %v449
    %v451 = vpop.f32.mrf.mxu0
    %v452 = vadd.f32 0.0, %v451
    %453 = vdwg.mxu0
    %v454 = vmul.f32 %v450, 0.35355338
    %v455 = vmul.f32 %v452, 0.35355338
    %v456 = vadd.f32 %v454, %v79
    %v457 = vadd.f32 %v455, %v80
    %v458 = vsel %vm280, %v456, -inf
    %459 = vmax.xlane.f32.xlu0 %v458
    %v460 = vpop.xlane.xlu0 %459
    %v461 = vsel %vm280, %v457, -inf
    %462 = vmax.xlane.f32.xlu0 %v461
    %v463 = vpop.xlane.xlu0 %462
    %v464 = vsub.f32 %v456, %v460
    %v465 = vsub.f32 %v457, %v463
    %v466 = vmul.f32 %v464, 1.442695
    %v467 = vpow.pop %v466
    %v468 = vmul.f32 %v465, 1.442695
    %v469 = vpow.pop %v468
    %v470 = vsel %vm280, %v467, 0.0
    %471 = vadd.xlane.f32.xlu0 %v470
    %v472 = vpop.xlane.xlu0 %471
    %v473 = vsel %vm280, %v469, 0.0
    %474 = vadd.xlane.f32.xlu0 %v473
    %v475 = vpop.xlane.xlu0 %474
    %v476 = vrcp.pop %v472
    %v477 = vrcp.pop %v475
    %v478 = vmul.f32 %v467, %v476
    %v479 = vmul.f32 %v469, %v477
    %v480 = vpack.c.bf16 %v479, %v478
    %v481 = vpack.c.bf16 %v430, %v428
    %v483 = vsel %vm280, %v480, 0
    %485 = vmatpush.bf16.msra.mxu0 0
    %486 = vmatpush.bf16.msra.mxu0 0
    %487 = vmatpush.bf16.msra.mxu0 0
    %488 = vmatpush.bf16.msra.mxu0 0
    %489 = vmatpush.bf16.msra.mxu0 0
    %490 = vmatpush.bf16.msra.mxu0 0
    %491 = vmatpush.bf16.msra.mxu0 0
    %492 = vmatpush.bf16.msra.mxu0 %v481
    %493 = vmatmul.bf16.gmra.mxu0 %v483
    %v494 = vpop.f32.mrf.mxu0
    %v495 = vadd.f32 0.0, %v494
    %v496 = vpop.f32.mrf.mxu0
    %v497 = vadd.f32 0.0, %v496
    %498 = vdwg.mxu0
    %v499 = vpack.c.bf16 %v497, %v495
    %s500 = scalar_lea.vmem %s10, 4
    %v501 = vld [vmem:[%s500] sm:$0xf]
    %v503 = vsel %vm255, %v499, 0
    %vm505 = vcmask 1043456
    %v507 = vsel %vm505, %v501, 0
    %509 = vmatpush.bf16.msra.mxu0 0
    %510 = vmatpush.bf16.msra.mxu0 0
    %511 = vmatpush.bf16.msra.mxu0 0
    %512 = vmatpush.bf16.msra.mxu0 0
    %513 = vmatpush.bf16.msra.mxu0 0
    %514 = vmatpush.bf16.msra.mxu0 0
    %515 = vmatpush.bf16.msra.mxu0 0
    %516 = vmatpush.bf16.msra.mxu0 %v507
    %517 = vmatmul.bf16.gmra.mxu0 %v503
    %v518 = vpop.f32.mrf.mxu0
    %v519 = vadd.f32 0.0, %v518
    %v520 = vpop.f32.mrf.mxu0
    %v521 = vadd.f32 0.0, %v520
    %522 = vdwg.mxu0
    %v524 = vsel %vm255, %v322, 0
    %v527 = vsel %vm505, %v323, 0
    %529 = vmatpush.bf16.msra.mxu0 0
    %530 = vmatpush.bf16.msra.mxu0 0
    %531 = vmatpush.bf16.msra.mxu0 0
    %532 = vmatpush.bf16.msra.mxu0 0
    %533 = vmatpush.bf16.msra.mxu0 0
    %534 = vmatpush.bf16.msra.mxu0 0
    %535 = vmatpush.bf16.msra.mxu0 0
    %536 = vmatpush.bf16.msra.mxu0 %v527
    %537 = vmatmul.bf16.gmra.mxu0 %v524
    %v538 = vpop.f32.mrf.mxu0
    %v539 = vadd.f32 %v519, %v538
    %v540 = vpop.f32.mrf.mxu0
    %v541 = vadd.f32 %v521, %v540
    %542 = vdwg.mxu0
    %s543 = scalar_lea.vmem %s4, 32
    %v544 = vld [vmem:[%s543] sm:$0xf]
    %v545 = vld [vmem:[%s543 + $0x4] sm:$0xf]
    %v546 = vld [vmem:[%s543 + $0x8] sm:$0xf]
    %v547 = vld [vmem:[%s543 + $0xc] sm:$0xf]
    %s548 = scalar_lea.vmem %s5, 2
    %v549 = vld [vmem:[%s548] sm:$0x1]
    %v551 = vperm.slane %v549, 0
    %v557 = vunpack.c.l.b16 %v544
    %v558 = vunpack.c.l.b16 %v545
    %v559 = vunpack.c.l.b16 %v546
    %v560 = vunpack.c.l.b16 %v547
    %v561 = vpack.c.b16 %v558, %v557
    %v562 = vpack.c.b16 %v560, %v559
    %565 = vmatpush.bf16.msra.mxu0 0
    %566 = vmatpush.bf16.msra.mxu0 0
    %567 = vmatpush.bf16.msra.mxu0 0
    %568 = vmatpush.bf16.msra.mxu0 0
    %569 = vmatpush.bf16.msra.mxu0 0
    %570 = vmatpush.bf16.msra.mxu0 0
    %571 = vmatpush.bf16.msra.mxu0 %v562
    %572 = vmatpush.bf16.msra.mxu0 %v561
    %573 = vmatmul.bf16.gmra.mxu0 %v169
    %v574 = vpop.f32.mrf.mxu0
    %v575 = vadd.f32 %v551, %v574
    %v576 = vpop.f32.mrf.mxu0
    %v577 = vadd.f32 %v551, %v576
    %578 = vdwg.mxu0
    %s579 = scalar_lea.vmem %s6, 32
    %v580 = vld [vmem:[%s579] sm:$0xf]
    %v581 = vld [vmem:[%s579 + $0x4] sm:$0xf]
    %v582 = vld [vmem:[%s579 + $0x8] sm:$0xf]
    %v583 = vld [vmem:[%s579 + $0xc] sm:$0xf]
    %s584 = scalar_lea.vmem %s7, 2
    %v585 = vld [vmem:[%s584] sm:$0x1]
    %v587 = vperm.slane %v585, 0
    %v593 = vunpack.c.l.b16 %v580
    %v594 = vunpack.c.l.b16 %v581
    %v595 = vunpack.c.l.b16 %v582
    %v596 = vunpack.c.l.b16 %v583
    %v597 = vpack.c.b16 %v594, %v593
    %v598 = vpack.c.b16 %v596, %v595
    %601 = vmatpush.bf16.msra.mxu0 0
    %602 = vmatpush.bf16.msra.mxu0 0
    %603 = vmatpush.bf16.msra.mxu0 0
    %604 = vmatpush.bf16.msra.mxu0 0
    %605 = vmatpush.bf16.msra.mxu0 0
    %606 = vmatpush.bf16.msra.mxu0 0
    %607 = vmatpush.bf16.msra.mxu0 %v598
    %608 = vmatpush.bf16.msra.mxu0 %v597
    %609 = vmatmul.bf16.gmra.mxu0 %v169
    %v610 = vpop.f32.mrf.mxu0
    %v611 = vadd.f32 %v587, %v610
    %v612 = vpop.f32.mrf.mxu0
    %v613 = vadd.f32 %v587, %v612
    %614 = vdwg.mxu0
    %s615 = scalar_lea.vmem %s8, 32
    %v616 = vld [vmem:[%s615] sm:$0xf]
    %v617 = vld [vmem:[%s615 + $0x4] sm:$0xf]
    %v618 = vld [vmem:[%s615 + $0x8] sm:$0xf]
    %v619 = vld [vmem:[%s615 + $0xc] sm:$0xf]
    %s620 = scalar_lea.vmem %s9, 2
    %v621 = vld [vmem:[%s620] sm:$0x1]
    %v623 = vperm.slane %v621, 0
    %v629 = vunpack.c.l.b16 %v616
    %v630 = vunpack.c.l.b16 %v617
    %v631 = vunpack.c.l.b16 %v618
    %v632 = vunpack.c.l.b16 %v619
    %v633 = vpack.c.b16 %v630, %v629
    %v634 = vpack.c.b16 %v632, %v631
    %637 = vmatpush.bf16.msra.mxu0 0
    %638 = vmatpush.bf16.msra.mxu0 0
    %639 = vmatpush.bf16.msra.mxu0 0
    %640 = vmatpush.bf16.msra.mxu0 0
    %641 = vmatpush.bf16.msra.mxu0 0
    %642 = vmatpush.bf16.msra.mxu0 0
    %643 = vmatpush.bf16.msra.mxu0 %v634
    %644 = vmatpush.bf16.msra.mxu0 %v633
    %645 = vmatmul.bf16.gmra.mxu0 %v169
    %v646 = vpop.f32.mrf.mxu0
    %v647 = vadd.f32 %v623, %v646
    %v648 = vpop.f32.mrf.mxu0
    %v649 = vadd.f32 %v623, %v648
    %650 = vdwg.mxu0
    %v651 = vpack.c.bf16 %v577, %v575
    %v652 = vpack.c.bf16 %v613, %v611
    %v654 = vsel %vm255, %v651, 0
    %v657 = vsel %vm255, %v652, 0
    %659 = vmatpush.bf16.xpose.msra.mxu0 0
    %660 = vmatpush.bf16.xpose.msra.mxu0 0
    %661 = vmatpush.bf16.xpose.msra.mxu0 0
    %662 = vmatpush.bf16.xpose.msra.mxu0 0
    %663 = vmatpush.bf16.xpose.msra.mxu0 0
    %664 = vmatpush.bf16.xpose.msra.mxu0 0
    %665 = vmatpush.bf16.xpose.msra.mxu0 0
    %666 = vmatpush.bf16.xpose.msra.mxu0 %v657
    %667 = vmatmul.bf16.gmra.mxu0 %v654
    %v668 = vpop.f32.mrf.mxu0
    %v669 = vadd.f32 0.0, %v668
    %v670 = vpop.f32.mrf.mxu0
    %v671 = vadd.f32 0.0, %v670
    %672 = vdwg.mxu0
    %v673 = vmul.f32 %v669, 0.35355338
    %v674 = vmul.f32 %v671, 0.35355338
    %v675 = vadd.f32 %v673, %v79
    %v676 = vadd.f32 %v674, %v80
    %v677 = vsel %vm280, %v675, -inf
    %678 = vmax.xlane.f32.xlu0 %v677
    %v679 = vpop.xlane.xlu0 %678
    %v680 = vsel %vm280, %v676, -inf
    %681 = vmax.xlane.f32.xlu0 %v680
    %v682 = vpop.xlane.xlu0 %681
    %v683 = vsub.f32 %v675, %v679
    %v684 = vsub.f32 %v676, %v682
    %v685 = vmul.f32 %v683, 1.442695
    %v686 = vpow.pop %v685
    %v687 = vmul.f32 %v684, 1.442695
    %v688 = vpow.pop %v687
    %v689 = vsel %vm280, %v686, 0.0
    %690 = vadd.xlane.f32.xlu0 %v689
    %v691 = vpop.xlane.xlu0 %690
    %v692 = vsel %vm280, %v688, 0.0
    %693 = vadd.xlane.f32.xlu0 %v692
    %v694 = vpop.xlane.xlu0 %693
    %v695 = vrcp.pop %v691
    %v696 = vrcp.pop %v694
    %v697 = vmul.f32 %v686, %v695
    %v698 = vmul.f32 %v688, %v696
    %v699 = vpack.c.bf16 %v698, %v697
    %v700 = vpack.c.bf16 %v649, %v647
    %v702 = vsel %vm280, %v699, 0
    %704 = vmatpush.bf16.msra.mxu0 0
    %705 = vmatpush.bf16.msra.mxu0 0
    %706 = vmatpush.bf16.msra.mxu0 0
    %707 = vmatpush.bf16.msra.mxu0 0
    %708 = vmatpush.bf16.msra.mxu0 0
    %709 = vmatpush.bf16.msra.mxu0 0
    %710 = vmatpush.bf16.msra.mxu0 0
    %711 = vmatpush.bf16.msra.mxu0 %v700
    %712 = vmatmul.bf16.gmra.mxu0 %v702
    %v713 = vpop.f32.mrf.mxu0
    %v714 = vadd.f32 0.0, %v713
    %v715 = vpop.f32.mrf.mxu0
    %v716 = vadd.f32 0.0, %v715
    %717 = vdwg.mxu0
    %v718 = vpack.c.bf16 %v716, %v714
    %s719 = scalar_lea.vmem %s10, 8
    %v720 = vld [vmem:[%s719] sm:$0xf]
    %v722 = vsel %vm255, %v718, 0
    %v725 = vsel %vm505, %v720, 0
    %727 = vmatpush.bf16.msra.mxu0 0
    %728 = vmatpush.bf16.msra.mxu0 0
    %729 = vmatpush.bf16.msra.mxu0 0
    %730 = vmatpush.bf16.msra.mxu0 0
    %731 = vmatpush.bf16.msra.mxu0 0
    %732 = vmatpush.bf16.msra.mxu0 0
    %733 = vmatpush.bf16.msra.mxu0 0
    %734 = vmatpush.bf16.msra.mxu0 %v725
    %735 = vmatmul.bf16.gmra.mxu0 %v722
    %v736 = vpop.f32.mrf.mxu0
    %v737 = vadd.f32 0.0, %v736
    %v738 = vpop.f32.mrf.mxu0
    %v739 = vadd.f32 0.0, %v738
    %740 = vdwg.mxu0
    %v741 = vadd.f32 %v539, %v737
    %v742 = vadd.f32 %v541, %v739
    %s743 = scalar_lea.vmem %s4, 48
    %v744 = vld [vmem:[%s743] sm:$0xf]
    %v745 = vld [vmem:[%s743 + $0x4] sm:$0xf]
    %v746 = vld [vmem:[%s743 + $0x8] sm:$0xf]
    %v747 = vld [vmem:[%s743 + $0xc] sm:$0xf]
    %s748 = scalar_lea.vmem %s5, 3
    %v749 = vld [vmem:[%s748] sm:$0x1]
    %v751 = vperm.slane %v749, 0
    %v757 = vunpack.c.l.b16 %v744
    %v758 = vunpack.c.l.b16 %v745
    %v759 = vunpack.c.l.b16 %v746
    %v760 = vunpack.c.l.b16 %v747
    %v761 = vpack.c.b16 %v758, %v757
    %v762 = vpack.c.b16 %v760, %v759
    %765 = vmatpush.bf16.msra.mxu0 0
    %766 = vmatpush.bf16.msra.mxu0 0
    %767 = vmatpush.bf16.msra.mxu0 0
    %768 = vmatpush.bf16.msra.mxu0 0
    %769 = vmatpush.bf16.msra.mxu0 0
    %770 = vmatpush.bf16.msra.mxu0 0
    %771 = vmatpush.bf16.msra.mxu0 %v762
    %772 = vmatpush.bf16.msra.mxu0 %v761
    %773 = vmatmul.bf16.gmra.mxu0 %v169
    %v774 = vpop.f32.mrf.mxu0
    %v775 = vadd.f32 %v751, %v774
    %v776 = vpop.f32.mrf.mxu0
    %v777 = vadd.f32 %v751, %v776
    %778 = vdwg.mxu0
    %s779 = scalar_lea.vmem %s6, 48
    %v780 = vld [vmem:[%s779] sm:$0xf]
    %v781 = vld [vmem:[%s779 + $0x4] sm:$0xf]
    %v782 = vld [vmem:[%s779 + $0x8] sm:$0xf]
    %v783 = vld [vmem:[%s779 + $0xc] sm:$0xf]
    %s784 = scalar_lea.vmem %s7, 3
    %v785 = vld [vmem:[%s784] sm:$0x1]
    %v787 = vperm.slane %v785, 0
    %v793 = vunpack.c.l.b16 %v780
    %v794 = vunpack.c.l.b16 %v781
    %v795 = vunpack.c.l.b16 %v782
    %v796 = vunpack.c.l.b16 %v783
    %v797 = vpack.c.b16 %v794, %v793
    %v798 = vpack.c.b16 %v796, %v795
    %801 = vmatpush.bf16.msra.mxu0 0
    %802 = vmatpush.bf16.msra.mxu0 0
    %803 = vmatpush.bf16.msra.mxu0 0
    %804 = vmatpush.bf16.msra.mxu0 0
    %805 = vmatpush.bf16.msra.mxu0 0
    %806 = vmatpush.bf16.msra.mxu0 0
    %807 = vmatpush.bf16.msra.mxu0 %v798
    %808 = vmatpush.bf16.msra.mxu0 %v797
    %809 = vmatmul.bf16.gmra.mxu0 %v169
    %v810 = vpop.f32.mrf.mxu0
    %v811 = vadd.f32 %v787, %v810
    %v812 = vpop.f32.mrf.mxu0
    %v813 = vadd.f32 %v787, %v812
    %814 = vdwg.mxu0
    %s815 = scalar_lea.vmem %s8, 48
    %v816 = vld [vmem:[%s815] sm:$0xf]
    %v817 = vld [vmem:[%s815 + $0x4] sm:$0xf]
    %v818 = vld [vmem:[%s815 + $0x8] sm:$0xf]
    %v819 = vld [vmem:[%s815 + $0xc] sm:$0xf]
    %s820 = scalar_lea.vmem %s9, 3
    %v821 = vld [vmem:[%s820] sm:$0x1]
    %v823 = vperm.slane %v821, 0
    %v829 = vunpack.c.l.b16 %v816
    %v830 = vunpack.c.l.b16 %v817
    %v831 = vunpack.c.l.b16 %v818
    %v832 = vunpack.c.l.b16 %v819
    %v833 = vpack.c.b16 %v830, %v829
    %v834 = vpack.c.b16 %v832, %v831
    %837 = vmatpush.bf16.msra.mxu0 0
    %838 = vmatpush.bf16.msra.mxu0 0
    %839 = vmatpush.bf16.msra.mxu0 0
    %840 = vmatpush.bf16.msra.mxu0 0
    %841 = vmatpush.bf16.msra.mxu0 0
    %842 = vmatpush.bf16.msra.mxu0 0
    %843 = vmatpush.bf16.msra.mxu0 %v834
    %844 = vmatpush.bf16.msra.mxu0 %v833
    %845 = vmatmul.bf16.gmra.mxu0 %v169
    %v846 = vpop.f32.mrf.mxu0
    %v847 = vadd.f32 %v823, %v846
    %v848 = vpop.f32.mrf.mxu0
    %v849 = vadd.f32 %v823, %v848
    %850 = vdwg.mxu0
    %v851 = vpack.c.bf16 %v777, %v775
    %v852 = vpack.c.bf16 %v813, %v811
    %v854 = vsel %vm255, %v851, 0
    %v857 = vsel %vm255, %v852, 0
    %859 = vmatpush.bf16.xpose.msra.mxu0 0
    %860 = vmatpush.bf16.xpose.msra.mxu0 0
    %861 = vmatpush.bf16.xpose.msra.mxu0 0
    %862 = vmatpush.bf16.xpose.msra.mxu0 0
    %863 = vmatpush.bf16.xpose.msra.mxu0 0
    %864 = vmatpush.bf16.xpose.msra.mxu0 0
    %865 = vmatpush.bf16.xpose.msra.mxu0 0
    %866 = vmatpush.bf16.xpose.msra.mxu0 %v857
    %867 = vmatmul.bf16.gmra.mxu0 %v854
    %v868 = vpop.f32.mrf.mxu0
    %v869 = vadd.f32 0.0, %v868
    %v870 = vpop.f32.mrf.mxu0
    %v871 = vadd.f32 0.0, %v870
    %872 = vdwg.mxu0
    %v873 = vmul.f32 %v869, 0.35355338
    %v874 = vmul.f32 %v871, 0.35355338
    %v875 = vadd.f32 %v873, %v79
    %v876 = vadd.f32 %v874, %v80
    %v877 = vsel %vm280, %v875, -inf
    %878 = vmax.xlane.f32.xlu0 %v877
    %v879 = vpop.xlane.xlu0 %878
    %v880 = vsel %vm280, %v876, -inf
    %881 = vmax.xlane.f32.xlu0 %v880
    %v882 = vpop.xlane.xlu0 %881
    %v883 = vsub.f32 %v875, %v879
    %v884 = vsub.f32 %v876, %v882
    %v885 = vmul.f32 %v883, 1.442695
    %v886 = vpow.pop %v885
    %v887 = vmul.f32 %v884, 1.442695
    %v888 = vpow.pop %v887
    %v889 = vsel %vm280, %v886, 0.0
    %890 = vadd.xlane.f32.xlu0 %v889
    %v891 = vpop.xlane.xlu0 %890
    %v892 = vsel %vm280, %v888, 0.0
    %893 = vadd.xlane.f32.xlu0 %v892
    %v894 = vpop.xlane.xlu0 %893
    %v895 = vrcp.pop %v891
    %v896 = vrcp.pop %v894
    %v897 = vmul.f32 %v886, %v895
    %v898 = vmul.f32 %v888, %v896
    %v899 = vpack.c.bf16 %v898, %v897
    %v900 = vpack.c.bf16 %v849, %v847
    %v902 = vsel %vm280, %v899, 0
    %904 = vmatpush.bf16.msra.mxu0 0
    %905 = vmatpush.bf16.msra.mxu0 0
    %906 = vmatpush.bf16.msra.mxu0 0
    %907 = vmatpush.bf16.msra.mxu0 0
    %908 = vmatpush.bf16.msra.mxu0 0
    %909 = vmatpush.bf16.msra.mxu0 0
    %910 = vmatpush.bf16.msra.mxu0 0
    %911 = vmatpush.bf16.msra.mxu0 %v900
    %912 = vmatmul.bf16.gmra.mxu0 %v902
    %v913 = vpop.f32.mrf.mxu0
    %v914 = vadd.f32 0.0, %v913
    %v915 = vpop.f32.mrf.mxu0
    %v916 = vadd.f32 0.0, %v915
    %917 = vdwg.mxu0
    %v918 = vpack.c.bf16 %v916, %v914
    %s919 = scalar_lea.vmem %s10, 12
    %v920 = vld [vmem:[%s919] sm:$0xf]
    %v922 = vsel %vm255, %v918, 0
    %v925 = vsel %vm505, %v920, 0
    %927 = vmatpush.bf16.msra.mxu0 0
    %928 = vmatpush.bf16.msra.mxu0 0
    %929 = vmatpush.bf16.msra.mxu0 0
    %930 = vmatpush.bf16.msra.mxu0 0
    %931 = vmatpush.bf16.msra.mxu0 0
    %932 = vmatpush.bf16.msra.mxu0 0
    %933 = vmatpush.bf16.msra.mxu0 0
    %934 = vmatpush.bf16.msra.mxu0 %v925
    %935 = vmatmul.bf16.gmra.mxu0 %v922
    %v936 = vpop.f32.mrf.mxu0
    %v937 = vadd.f32 0.0, %v936
    %v938 = vpop.f32.mrf.mxu0
    %v939 = vadd.f32 0.0, %v938
    %940 = vdwg.mxu0
    %v941 = vadd.f32 %v741, %v937
    %v942 = vadd.f32 %v742, %v939
    %v943 = vld [vmem:[%s11] sm:$0x1]
    %v945 = vperm.slane %v943, 0
    %v947 = vadd.f32 %v941, %v945
    %v948 = vadd.f32 %v942, %v945
    %v949 = vadd.f32 %v947, %v145
    %v950 = vadd.f32 %v948, %v146
    %v951 = vld [vmem:[%s12] sm:$0x1]
    %v952 = vld [vmem:[%s13] sm:$0x1]
    %v953 = vsel %vm85, %v949, 0.0
    %954 = vadd.xlane.f32.xlu0 %v953
    %v955 = vpop.xlane.xlu0 %954
    %v956 = vsel %vm85, %v950, 0.0
    %957 = vadd.xlane.f32.xlu0 %v956
    %v958 = vpop.xlane.xlu0 %957
    %v959 = vmul.f32 %v955, %v98
    %v960 = vmul.f32 %v958, %v98
    %v961 = vsub.f32 %v949, %v959
    %v962 = vsub.f32 %v950, %v960
    %v963 = vmul.f32 %v961, %v961
    %v964 = vmul.f32 %v962, %v962
    %v965 = vsel %vm85, %v963, 0.0
    %966 = vadd.xlane.f32.xlu0 %v965
    %v967 = vpop.xlane.xlu0 %966
    %v968 = vsel %vm85, %v964, 0.0
    %969 = vadd.xlane.f32.xlu0 %v968
    %v970 = vpop.xlane.xlu0 %969
    %v971 = vmul.f32 %v967, %v98
    %v972 = vmul.f32 %v970, %v98
    %v973 = vadd.f32 %v971, 1e-12
    %v974 = vadd.f32 %v972, 1e-12
    %v975 = vrsqrt.pop %v973
    %v976 = vmul.f32 %v975, %v973
    %v977 = vmul.f32 %v976, %v975
    %v978 = vmul.f32 0.5, %v977
    %v979 = vsub.f32 1.5, %v978
    %v980 = vmul.f32 %v975, %v979
    %vm981 = vweird.f32 %v973
    %vm982 = vweird.f32 %v975
    %vm983 = vmor %vm981, %vm982
    %v984 = vsel %vm983, %v975, %v980
    %v985 = vrsqrt.pop %v974
    %v986 = vmul.f32 %v985, %v974
    %v987 = vmul.f32 %v986, %v985
    %v988 = vmul.f32 0.5, %v987
    %v989 = vsub.f32 1.5, %v988
    %v990 = vmul.f32 %v985, %v989
    %vm991 = vweird.f32 %v974
    %vm992 = vweird.f32 %v985
    %vm993 = vmor %vm991, %vm992
    %v994 = vsel %vm993, %v985, %v990
    %v995 = vmul.f32 %v961, %v984
    %v996 = vmul.f32 %v962, %v994
    %v998 = vperm.slane %v951, 0
    %v1000 = vmul.f32 %v995, %v998
    %v1001 = vmul.f32 %v996, %v998
    %v1003 = vperm.slane %v952, 0
    %v1005 = vadd.f32 %v1000, %v1003
    %v1006 = vadd.f32 %v1001, %v1003
    %v1007 = vpack.c.bf16 %v1006, %v1005
    %v1008 = vld [vmem:[%s14] sm:$0xf]
    %v1009 = vld [vmem:[%s14 + $0x4] sm:$0xf]
    %v1010 = vld [vmem:[%s14 + $0x8] sm:$0xf]
    %v1011 = vld [vmem:[%s14 + $0xc] sm:$0xf]
    %v1012 = vld [vmem:[%s15] sm:$0x1]
    %v1014 = vperm.slane %v1012, 0
    %v1020 = vunpack.c.l.b16 %v1008
    %v1021 = vunpack.c.l.b16 %v1009
    %v1022 = vunpack.c.l.b16 %v1010
    %v1023 = vunpack.c.l.b16 %v1011
    %v1024 = vpack.c.b16 %v1021, %v1020
    %v1025 = vpack.c.b16 %v1023, %v1022
    %v1029 = vsel %vm85, %v1007, 0
    %1031 = vmatpush.bf16.msra.mxu0 0
    %1032 = vmatpush.bf16.msra.mxu0 0
    %1033 = vmatpush.bf16.msra.mxu0 0
    %1034 = vmatpush.bf16.msra.mxu0 0
    %1035 = vmatpush.bf16.msra.mxu0 0
    %1036 = vmatpush.bf16.msra.mxu0 0
    %1037 = vmatpush.bf16.msra.mxu0 %v1025
    %1038 = vmatpush.bf16.msra.mxu0 %v1024
    %1039 = vmatmul.bf16.gmra.mxu0 %v1029
    %v1040 = vpop.f32.mrf.mxu0
    %v1041 = vadd.f32 %v1014, %v1040
    %v1042 = vpop.f32.mrf.mxu0
    %v1043 = vadd.f32 %v1014, %v1042
    %1044 = vdwg.mxu0
    %v1045 = vmul.f32 %v1041, 0.5
    %v1046 = vmul.f32 %v1043, 0.5
    %v1047 = vmul.f32 %v1041, 0.044715
    %v1048 = vmul.f32 %v1043, 0.044715
    %v1049 = vmul.f32 %v1047, %v1041
    %v1050 = vmul.f32 %v1048, %v1043
    %v1051 = vmul.f32 %v1049, %v1041
    %v1052 = vmul.f32 %v1050, %v1043
    %v1053 = vadd.f32 %v1041, %v1051
    %v1054 = vadd.f32 %v1043, %v1052
    %v1055 = vmul.f32 %v1053, 0.7978846
    %v1056 = vmul.f32 %v1054, 0.7978846
    %v1057 = vtanh.pop %v1055
    %v1058 = vtanh.pop %v1056
    %v1059 = vadd.f32 %v1057, 1.0
    %v1060 = vadd.f32 %v1058, 1.0
    %v1061 = vmul.f32 %v1045, %v1059
    %v1062 = vmul.f32 %v1046, %v1060
    %v1063 = vpack.c.bf16 %v1062, %v1061
    %v1064 = vld [vmem:[%s16] sm:$0xf]
    %v1065 = vld [vmem:[%s16 + $0x4] sm:$0xf]
    %v1066 = vld [vmem:[%s16 + $0x8] sm:$0xf]
    %v1067 = vld [vmem:[%s16 + $0xc] sm:$0xf]
    %v1068 = vld [vmem:[%s16 + $0x10] sm:$0xf]
    %v1069 = vld [vmem:[%s16 + $0x14] sm:$0xf]
    %v1070 = vld [vmem:[%s16 + $0x18] sm:$0xf]
    %v1071 = vld [vmem:[%s16 + $0x1c] sm:$0xf]
    %v1072 = vld [vmem:[%s17] sm:$0x1]
    %v1074 = vperm.slane %v1072, 0
    %v1084 = vunpack.c.l.b16 %v1064
    %v1085 = vunpack.c.l.b16 %v1065
    %v1086 = vunpack.c.l.b16 %v1066
    %v1087 = vunpack.c.l.b16 %v1067
    %v1088 = vunpack.c.l.b16 %v1068
    %v1089 = vunpack.c.l.b16 %v1069
    %v1090 = vunpack.c.l.b16 %v1070
    %v1091 = vunpack.c.l.b16 %v1071
    %v1092 = vpack.c.b16 %v1085, %v1084
    %v1093 = vpack.c.b16 %v1087, %v1086
    %v1094 = vpack.c.b16 %v1089, %v1088
    %v1095 = vpack.c.b16 %v1091, %v1090
    %vm1100 = vcmask 523264
    %v1102 = vsel %vm1100, %v1063, 0
    %1104 = vmatpush.bf16.msra.mxu0 0
    %1105 = vmatpush.bf16.msra.mxu0 0
    %1106 = vmatpush.bf16.msra.mxu0 0
    %1107 = vmatpush.bf16.msra.mxu0 0
    %1108 = vmatpush.bf16.msra.mxu0 %v1095
    %1109 = vmatpush.bf16.msra.mxu0 %v1094
    %1110 = vmatpush.bf16.msra.mxu0 %v1093
    %1111 = vmatpush.bf16.msra.mxu0 %v1092
    %1112 = vmatmul.bf16.gmra.mxu0 %v1102
    %v1113 = vpop.f32.mrf.mxu0
    %v1114 = vadd.f32 %v1074, %v1113
    %v1115 = vpop.f32.mrf.mxu0
    %v1116 = vadd.f32 %v1074, %v1115
    %1117 = vdwg.mxu0
    %v1118 = vadd.f32 %v1114, %v1005
    %v1119 = vadd.f32 %v1116, %v1006
    %v1120 = vld [vmem:[%s18] sm:$0x1]
    %v1121 = vld [vmem:[%s19] sm:$0x1]
    %v1122 = vsel %vm85, %v1118, 0.0
    %1123 = vadd.xlane.f32.xlu0 %v1122
    %v1124 = vpop.xlane.xlu0 %1123
    %v1125 = vsel %vm85, %v1119, 0.0
    %1126 = vadd.xlane.f32.xlu0 %v1125
    %v1127 = vpop.xlane.xlu0 %1126
    %v1128 = vmul.f32 %v1124, %v98
    %v1129 = vmul.f32 %v1127, %v98
    %v1130 = vsub.f32 %v1118, %v1128
    %v1131 = vsub.f32 %v1119, %v1129
    %v1132 = vmul.f32 %v1130, %v1130
    %v1133 = vmul.f32 %v1131, %v1131
    %v1134 = vsel %vm85, %v1132, 0.0
    %1135 = vadd.xlane.f32.xlu0 %v1134
    %v1136 = vpop.xlane.xlu0 %1135
    %v1137 = vsel %vm85, %v1133, 0.0
    %1138 = vadd.xlane.f32.xlu0 %v1137
    %v1139 = vpop.xlane.xlu0 %1138
    %v1140 = vmul.f32 %v1136, %v98
    %v1141 = vmul.f32 %v1139, %v98
    %v1142 = vadd.f32 %v1140, 1e-12
    %v1143 = vadd.f32 %v1141, 1e-12
    %v1144 = vrsqrt.pop %v1142
    %v1145 = vmul.f32 %v1144, %v1142
    %v1146 = vmul.f32 %v1145, %v1144
    %v1147 = vmul.f32 0.5, %v1146
    %v1148 = vsub.f32 1.5, %v1147
    %v1149 = vmul.f32 %v1144, %v1148
    %vm1150 = vweird.f32 %v1142
    %vm1151 = vweird.f32 %v1144
    %vm1152 = vmor %vm1150, %vm1151
    %v1153 = vsel %vm1152, %v1144, %v1149
    %v1154 = vrsqrt.pop %v1143
    %v1155 = vmul.f32 %v1154, %v1143
    %v1156 = vmul.f32 %v1155, %v1154
    %v1157 = vmul.f32 0.5, %v1156
    %v1158 = vsub.f32 1.5, %v1157
    %v1159 = vmul.f32 %v1154, %v1158
    %vm1160 = vweird.f32 %v1143
    %vm1161 = vweird.f32 %v1154
    %vm1162 = vmor %vm1160, %vm1161
    %v1163 = vsel %vm1162, %v1154, %v1159
    %v1164 = vmul.f32 %v1130, %v1153
    %v1165 = vmul.f32 %v1131, %v1163
    %v1167 = vperm.slane %v1120, 0
    %v1169 = vmul.f32 %v1164, %v1167
    %v1170 = vmul.f32 %v1165, %v1167
    %v1172 = vperm.slane %v1121, 0
    %v1174 = vadd.f32 %v1169, %v1172
    %v1175 = vadd.f32 %v1170, %v1172
    %v1176 = vpack.c.bf16 %v1175, %v1174
    %s1177 = scalar_lea.vmem %s4, 64
    %v1178 = vld [vmem:[%s1177] sm:$0xf]
    %v1179 = vld [vmem:[%s1177 + $0x4] sm:$0xf]
    %v1180 = vld [vmem:[%s1177 + $0x8] sm:$0xf]
    %v1181 = vld [vmem:[%s1177 + $0xc] sm:$0xf]
    %s1182 = scalar_lea.vmem %s5, 4
    %v1183 = vld [vmem:[%s1182] sm:$0x1]
    %v1185 = vperm.slane %v1183, 0
    %v1191 = vunpack.c.l.b16 %v1178
    %v1192 = vunpack.c.l.b16 %v1179
    %v1193 = vunpack.c.l.b16 %v1180
    %v1194 = vunpack.c.l.b16 %v1181
    %v1195 = vpack.c.b16 %v1192, %v1191
    %v1196 = vpack.c.b16 %v1194, %v1193
    %v1200 = vsel %vm85, %v1176, 0
    %1202 = vmatpush.bf16.msra.mxu0 0
    %1203 = vmatpush.bf16.msra.mxu0 0
    %1204 = vmatpush.bf16.msra.mxu0 0
    %1205 = vmatpush.bf16.msra.mxu0 0
    %1206 = vmatpush.bf16.msra.mxu0 0
    %1207 = vmatpush.bf16.msra.mxu0 0
    %1208 = vmatpush.bf16.msra.mxu0 %v1196
    %1209 = vmatpush.bf16.msra.mxu0 %v1195
    %1210 = vmatmul.bf16.gmra.mxu0 %v1200
    %v1211 = vpop.f32.mrf.mxu0
    %v1212 = vadd.f32 %v1185, %v1211
    %v1213 = vpop.f32.mrf.mxu0
    %v1214 = vadd.f32 %v1185, %v1213
    %1215 = vdwg.mxu0
    %s1216 = scalar_lea.vmem %s6, 64
    %v1217 = vld [vmem:[%s1216] sm:$0xf]
    %v1218 = vld [vmem:[%s1216 + $0x4] sm:$0xf]
    %v1219 = vld [vmem:[%s1216 + $0x8] sm:$0xf]
    %v1220 = vld [vmem:[%s1216 + $0xc] sm:$0xf]
    %s1221 = scalar_lea.vmem %s7, 4
    %v1222 = vld [vmem:[%s1221] sm:$0x1]
    %v1224 = vperm.slane %v1222, 0
    %v1230 = vunpack.c.l.b16 %v1217
    %v1231 = vunpack.c.l.b16 %v1218
    %v1232 = vunpack.c.l.b16 %v1219
    %v1233 = vunpack.c.l.b16 %v1220
    %v1234 = vpack.c.b16 %v1231, %v1230
    %v1235 = vpack.c.b16 %v1233, %v1232
    %1238 = vmatpush.bf16.msra.mxu0 0
    %1239 = vmatpush.bf16.msra.mxu0 0
    %1240 = vmatpush.bf16.msra.mxu0 0
    %1241 = vmatpush.bf16.msra.mxu0 0
    %1242 = vmatpush.bf16.msra.mxu0 0
    %1243 = vmatpush.bf16.msra.mxu0 0
    %1244 = vmatpush.bf16.msra.mxu0 %v1235
    %1245 = vmatpush.bf16.msra.mxu0 %v1234
    %1246 = vmatmul.bf16.gmra.mxu0 %v1200
    %v1247 = vpop.f32.mrf.mxu0
    %v1248 = vadd.f32 %v1224, %v1247
    %v1249 = vpop.f32.mrf.mxu0
    %v1250 = vadd.f32 %v1224, %v1249
    %1251 = vdwg.mxu0
    %s1252 = scalar_lea.vmem %s8, 64
    %v1253 = vld [vmem:[%s1252] sm:$0xf]
    %v1254 = vld [vmem:[%s1252 + $0x4] sm:$0xf]
    %v1255 = vld [vmem:[%s1252 + $0x8] sm:$0xf]
    %v1256 = vld [vmem:[%s1252 + $0xc] sm:$0xf]
    %s1257 = scalar_lea.vmem %s9, 4
    %v1258 = vld [vmem:[%s1257] sm:$0x1]
    %v1260 = vperm.slane %v1258, 0
    %v1266 = vunpack.c.l.b16 %v1253
    %v1267 = vunpack.c.l.b16 %v1254
    %v1268 = vunpack.c.l.b16 %v1255
    %v1269 = vunpack.c.l.b16 %v1256
    %v1270 = vpack.c.b16 %v1267, %v1266
    %v1271 = vpack.c.b16 %v1269, %v1268
    %1274 = vmatpush.bf16.msra.mxu0 0
    %1275 = vmatpush.bf16.msra.mxu0 0
    %1276 = vmatpush.bf16.msra.mxu0 0
    %1277 = vmatpush.bf16.msra.mxu0 0
    %1278 = vmatpush.bf16.msra.mxu0 0
    %1279 = vmatpush.bf16.msra.mxu0 0
    %1280 = vmatpush.bf16.msra.mxu0 %v1271
    %1281 = vmatpush.bf16.msra.mxu0 %v1270
    %1282 = vmatmul.bf16.gmra.mxu0 %v1200
    %v1283 = vpop.f32.mrf.mxu0
    %v1284 = vadd.f32 %v1260, %v1283
    %v1285 = vpop.f32.mrf.mxu0
    %v1286 = vadd.f32 %v1260, %v1285
    %1287 = vdwg.mxu0
    %v1288 = vpack.c.bf16 %v1214, %v1212
    %v1289 = vpack.c.bf16 %v1250, %v1248
    %v1291 = vsel %vm255, %v1288, 0
    %v1294 = vsel %vm255, %v1289, 0
    %1296 = vmatpush.bf16.xpose.msra.mxu0 0
    %1297 = vmatpush.bf16.xpose.msra.mxu0 0
    %1298 = vmatpush.bf16.xpose.msra.mxu0 0
    %1299 = vmatpush.bf16.xpose.msra.mxu0 0
    %1300 = vmatpush.bf16.xpose.msra.mxu0 0
    %1301 = vmatpush.bf16.xpose.msra.mxu0 0
    %1302 = vmatpush.bf16.xpose.msra.mxu0 0
    %1303 = vmatpush.bf16.xpose.msra.mxu0 %v1294
    %1304 = vmatmul.bf16.gmra.mxu0 %v1291
    %v1305 = vpop.f32.mrf.mxu0
    %v1306 = vadd.f32 0.0, %v1305
    %v1307 = vpop.f32.mrf.mxu0
    %v1308 = vadd.f32 0.0, %v1307
    %1309 = vdwg.mxu0
    %v1310 = vmul.f32 %v1306, 0.35355338
    %v1311 = vmul.f32 %v1308, 0.35355338
    %v1312 = vadd.f32 %v1310, %v79
    %v1313 = vadd.f32 %v1311, %v80
    %v1314 = vsel %vm280, %v1312, -inf
    %1315 = vmax.xlane.f32.xlu0 %v1314
    %v1316 = vpop.xlane.xlu0 %1315
    %v1317 = vsel %vm280, %v1313, -inf
    %1318 = vmax.xlane.f32.xlu0 %v1317
    %v1319 = vpop.xlane.xlu0 %1318
    %v1320 = vsub.f32 %v1312, %v1316
    %v1321 = vsub.f32 %v1313, %v1319
    %v1322 = vmul.f32 %v1320, 1.442695
    %v1323 = vpow.pop %v1322
    %v1324 = vmul.f32 %v1321, 1.442695
    %v1325 = vpow.pop %v1324
    %v1326 = vsel %vm280, %v1323, 0.0
    %1327 = vadd.xlane.f32.xlu0 %v1326
    %v1328 = vpop.xlane.xlu0 %1327
    %v1329 = vsel %vm280, %v1325, 0.0
    %1330 = vadd.xlane.f32.xlu0 %v1329
    %v1331 = vpop.xlane.xlu0 %1330
    %v1332 = vrcp.pop %v1328
    %v1333 = vrcp.pop %v1331
    %v1334 = vmul.f32 %v1323, %v1332
    %v1335 = vmul.f32 %v1325, %v1333
    %v1336 = vpack.c.bf16 %v1335, %v1334
    %v1337 = vpack.c.bf16 %v1286, %v1284
    %v1339 = vsel %vm280, %v1336, 0
    %1341 = vmatpush.bf16.msra.mxu0 0
    %1342 = vmatpush.bf16.msra.mxu0 0
    %1343 = vmatpush.bf16.msra.mxu0 0
    %1344 = vmatpush.bf16.msra.mxu0 0
    %1345 = vmatpush.bf16.msra.mxu0 0
    %1346 = vmatpush.bf16.msra.mxu0 0
    %1347 = vmatpush.bf16.msra.mxu0 0
    %1348 = vmatpush.bf16.msra.mxu0 %v1337
    %1349 = vmatmul.bf16.gmra.mxu0 %v1339
    %v1350 = vpop.f32.mrf.mxu0
    %v1351 = vadd.f32 0.0, %v1350
    %v1352 = vpop.f32.mrf.mxu0
    %v1353 = vadd.f32 0.0, %v1352
    %1354 = vdwg.mxu0
    %v1355 = vpack.c.bf16 %v1353, %v1351
    %s1356 = scalar_lea.vmem %s10, 16
    %v1357 = vld [vmem:[%s1356] sm:$0xf]
    %s1358 = scalar_lea.vmem %s4, 80
    %v1359 = vld [vmem:[%s1358] sm:$0xf]
    %v1360 = vld [vmem:[%s1358 + $0x4] sm:$0xf]
    %v1361 = vld [vmem:[%s1358 + $0x8] sm:$0xf]
    %v1362 = vld [vmem:[%s1358 + $0xc] sm:$0xf]
    %s1363 = scalar_lea.vmem %s5, 5
    %v1364 = vld [vmem:[%s1363] sm:$0x1]
    %v1366 = vperm.slane %v1364, 0
    %v1372 = vunpack.c.l.b16 %v1359
    %v1373 = vunpack.c.l.b16 %v1360
    %v1374 = vunpack.c.l.b16 %v1361
    %v1375 = vunpack.c.l.b16 %v1362
    %v1376 = vpack.c.b16 %v1373, %v1372
    %v1377 = vpack.c.b16 %v1375, %v1374
    %1380 = vmatpush.bf16.msra.mxu0 0
    %1381 = vmatpush.bf16.msra.mxu0 0
    %1382 = vmatpush.bf16.msra.mxu0 0
    %1383 = vmatpush.bf16.msra.mxu0 0
    %1384 = vmatpush.bf16.msra.mxu0 0
    %1385 = vmatpush.bf16.msra.mxu0 0
    %1386 = vmatpush.bf16.msra.mxu0 %v1377
    %1387 = vmatpush.bf16.msra.mxu0 %v1376
    %1388 = vmatmul.bf16.gmra.mxu0 %v1200
    %v1389 = vpop.f32.mrf.mxu0
    %v1390 = vadd.f32 %v1366, %v1389
    %v1391 = vpop.f32.mrf.mxu0
    %v1392 = vadd.f32 %v1366, %v1391
    %1393 = vdwg.mxu0
    %s1394 = scalar_lea.vmem %s6, 80
    %v1395 = vld [vmem:[%s1394] sm:$0xf]
    %v1396 = vld [vmem:[%s1394 + $0x4] sm:$0xf]
    %v1397 = vld [vmem:[%s1394 + $0x8] sm:$0xf]
    %v1398 = vld [vmem:[%s1394 + $0xc] sm:$0xf]
    %s1399 = scalar_lea.vmem %s7, 5
    %v1400 = vld [vmem:[%s1399] sm:$0x1]
    %v1402 = vperm.slane %v1400, 0
    %v1408 = vunpack.c.l.b16 %v1395
    %v1409 = vunpack.c.l.b16 %v1396
    %v1410 = vunpack.c.l.b16 %v1397
    %v1411 = vunpack.c.l.b16 %v1398
    %v1412 = vpack.c.b16 %v1409, %v1408
    %v1413 = vpack.c.b16 %v1411, %v1410
    %1416 = vmatpush.bf16.msra.mxu0 0
    %1417 = vmatpush.bf16.msra.mxu0 0
    %1418 = vmatpush.bf16.msra.mxu0 0
    %1419 = vmatpush.bf16.msra.mxu0 0
    %1420 = vmatpush.bf16.msra.mxu0 0
    %1421 = vmatpush.bf16.msra.mxu0 0
    %1422 = vmatpush.bf16.msra.mxu0 %v1413
    %1423 = vmatpush.bf16.msra.mxu0 %v1412
    %1424 = vmatmul.bf16.gmra.mxu0 %v1200
    %v1425 = vpop.f32.mrf.mxu0
    %v1426 = vadd.f32 %v1402, %v1425
    %v1427 = vpop.f32.mrf.mxu0
    %v1428 = vadd.f32 %v1402, %v1427
    %1429 = vdwg.mxu0
    %s1430 = scalar_lea.vmem %s8, 80
    %v1431 = vld [vmem:[%s1430] sm:$0xf]
    %v1432 = vld [vmem:[%s1430 + $0x4] sm:$0xf]
    %v1433 = vld [vmem:[%s1430 + $0x8] sm:$0xf]
    %v1434 = vld [vmem:[%s1430 + $0xc] sm:$0xf]
    %s1435 = scalar_lea.vmem %s9, 5
    %v1436 = vld [vmem:[%s1435] sm:$0x1]
    %v1438 = vperm.slane %v1436, 0
    %v1444 = vunpack.c.l.b16 %v1431
    %v1445 = vunpack.c.l.b16 %v1432
    %v1446 = vunpack.c.l.b16 %v1433
    %v1447 = vunpack.c.l.b16 %v1434
    %v1448 = vpack.c.b16 %v1445, %v1444
    %v1449 = vpack.c.b16 %v1447, %v1446
    %1452 = vmatpush.bf16.msra.mxu0 0
    %1453 = vmatpush.bf16.msra.mxu0 0
    %1454 = vmatpush.bf16.msra.mxu0 0
    %1455 = vmatpush.bf16.msra.mxu0 0
    %1456 = vmatpush.bf16.msra.mxu0 0
    %1457 = vmatpush.bf16.msra.mxu0 0
    %1458 = vmatpush.bf16.msra.mxu0 %v1449
    %1459 = vmatpush.bf16.msra.mxu0 %v1448
    %1460 = vmatmul.bf16.gmra.mxu0 %v1200
    %v1461 = vpop.f32.mrf.mxu0
    %v1462 = vadd.f32 %v1438, %v1461
    %v1463 = vpop.f32.mrf.mxu0
    %v1464 = vadd.f32 %v1438, %v1463
    %1465 = vdwg.mxu0
    %v1466 = vpack.c.bf16 %v1392, %v1390
    %v1467 = vpack.c.bf16 %v1428, %v1426
    %v1469 = vsel %vm255, %v1466, 0
    %v1472 = vsel %vm255, %v1467, 0
    %1474 = vmatpush.bf16.xpose.msra.mxu0 0
    %1475 = vmatpush.bf16.xpose.msra.mxu0 0
    %1476 = vmatpush.bf16.xpose.msra.mxu0 0
    %1477 = vmatpush.bf16.xpose.msra.mxu0 0
    %1478 = vmatpush.bf16.xpose.msra.mxu0 0
    %1479 = vmatpush.bf16.xpose.msra.mxu0 0
    %1480 = vmatpush.bf16.xpose.msra.mxu0 0
    %1481 = vmatpush.bf16.xpose.msra.mxu0 %v1472
    %1482 = vmatmul.bf16.gmra.mxu0 %v1469
    %v1483 = vpop.f32.mrf.mxu0
    %v1484 = vadd.f32 0.0, %v1483
    %v1485 = vpop.f32.mrf.mxu0
    %v1486 = vadd.f32 0.0, %v1485
    %1487 = vdwg.mxu0
    %v1488 = vmul.f32 %v1484, 0.35355338
    %v1489 = vmul.f32 %v1486, 0.35355338
    %v1490 = vadd.f32 %v1488, %v79
    %v1491 = vadd.f32 %v1489, %v80
    %v1492 = vsel %vm280, %v1490, -inf
    %1493 = vmax.xlane.f32.xlu0 %v1492
    %v1494 = vpop.xlane.xlu0 %1493
    %v1495 = vsel %vm280, %v1491, -inf
    %1496 = vmax.xlane.f32.xlu0 %v1495
    %v1497 = vpop.xlane.xlu0 %1496
    %v1498 = vsub.f32 %v1490, %v1494
    %v1499 = vsub.f32 %v1491, %v1497
    %v1500 = vmul.f32 %v1498, 1.442695
    %v1501 = vpow.pop %v1500
    %v1502 = vmul.f32 %v1499, 1.442695
    %v1503 = vpow.pop %v1502
    %v1504 = vsel %vm280, %v1501, 0.0
    %1505 = vadd.xlane.f32.xlu0 %v1504
    %v1506 = vpop.xlane.xlu0 %1505
    %v1507 = vsel %vm280, %v1503, 0.0
    %1508 = vadd.xlane.f32.xlu0 %v1507
    %v1509 = vpop.xlane.xlu0 %1508
    %v1510 = vrcp.pop %v1506
    %v1511 = vrcp.pop %v1509
    %v1512 = vmul.f32 %v1501, %v1510
    %v1513 = vmul.f32 %v1503, %v1511
    %v1514 = vpack.c.bf16 %v1513, %v1512
    %v1515 = vpack.c.bf16 %v1464, %v1462
    %v1517 = vsel %vm280, %v1514, 0
    %1519 = vmatpush.bf16.msra.mxu0 0
    %1520 = vmatpush.bf16.msra.mxu0 0
    %1521 = vmatpush.bf16.msra.mxu0 0
    %1522 = vmatpush.bf16.msra.mxu0 0
    %1523 = vmatpush.bf16.msra.mxu0 0
    %1524 = vmatpush.bf16.msra.mxu0 0
    %1525 = vmatpush.bf16.msra.mxu0 0
    %1526 = vmatpush.bf16.msra.mxu0 %v1515
    %1527 = vmatmul.bf16.gmra.mxu0 %v1517
    %v1528 = vpop.f32.mrf.mxu0
    %v1529 = vadd.f32 0.0, %v1528
    %v1530 = vpop.f32.mrf.mxu0
    %v1531 = vadd.f32 0.0, %v1530
    %1532 = vdwg.mxu0
    %v1533 = vpack.c.bf16 %v1531, %v1529
    %s1534 = scalar_lea.vmem %s10, 20
    %v1535 = vld [vmem:[%s1534] sm:$0xf]
    %v1537 = vsel %vm255, %v1533, 0
    %v1540 = vsel %vm505, %v1535, 0
    %1542 = vmatpush.bf16.msra.mxu0 0
    %1543 = vmatpush.bf16.msra.mxu0 0
    %1544 = vmatpush.bf16.msra.mxu0 0
    %1545 = vmatpush.bf16.msra.mxu0 0
    %1546 = vmatpush.bf16.msra.mxu0 0
    %1547 = vmatpush.bf16.msra.mxu0 0
    %1548 = vmatpush.bf16.msra.mxu0 0
    %1549 = vmatpush.bf16.msra.mxu0 %v1540
    %1550 = vmatmul.bf16.gmra.mxu0 %v1537
    %v1551 = vpop.f32.mrf.mxu0
    %v1552 = vadd.f32 0.0, %v1551
    %v1553 = vpop.f32.mrf.mxu0
    %v1554 = vadd.f32 0.0, %v1553
    %1555 = vdwg.mxu0
    %v1557 = vsel %vm255, %v1355, 0
    %v1560 = vsel %vm505, %v1357, 0
    %1562 = vmatpush.bf16.msra.mxu0 0
    %1563 = vmatpush.bf16.msra.mxu0 0
    %1564 = vmatpush.bf16.msra.mxu0 0
    %1565 = vmatpush.bf16.msra.mxu0 0
    %1566 = vmatpush.bf16.msra.mxu0 0
    %1567 = vmatpush.bf16.msra.mxu0 0
    %1568 = vmatpush.bf16.msra.mxu0 0
    %1569 = vmatpush.bf16.msra.mxu0 %v1560
    %1570 = vmatmul.bf16.gmra.mxu0 %v1557
    %v1571 = vpop.f32.mrf.mxu0
    %v1572 = vadd.f32 %v1552, %v1571
    %v1573 = vpop.f32.mrf.mxu0
    %v1574 = vadd.f32 %v1554, %v1573
    %1575 = vdwg.mxu0
    %s1576 = scalar_lea.vmem %s4, 96
    %v1577 = vld [vmem:[%s1576] sm:$0xf]
    %v1578 = vld [vmem:[%s1576 + $0x4] sm:$0xf]
    %v1579 = vld [vmem:[%s1576 + $0x8] sm:$0xf]
    %v1580 = vld [vmem:[%s1576 + $0xc] sm:$0xf]
    %s1581 = scalar_lea.vmem %s5, 6
    %v1582 = vld [vmem:[%s1581] sm:$0x1]
    %v1584 = vperm.slane %v1582, 0
    %v1590 = vunpack.c.l.b16 %v1577
    %v1591 = vunpack.c.l.b16 %v1578
    %v1592 = vunpack.c.l.b16 %v1579
    %v1593 = vunpack.c.l.b16 %v1580
    %v1594 = vpack.c.b16 %v1591, %v1590
    %v1595 = vpack.c.b16 %v1593, %v1592
    %1598 = vmatpush.bf16.msra.mxu0 0
    %1599 = vmatpush.bf16.msra.mxu0 0
    %1600 = vmatpush.bf16.msra.mxu0 0
    %1601 = vmatpush.bf16.msra.mxu0 0
    %1602 = vmatpush.bf16.msra.mxu0 0
    %1603 = vmatpush.bf16.msra.mxu0 0
    %1604 = vmatpush.bf16.msra.mxu0 %v1595
    %1605 = vmatpush.bf16.msra.mxu0 %v1594
    %1606 = vmatmul.bf16.gmra.mxu0 %v1200
    %v1607 = vpop.f32.mrf.mxu0
    %v1608 = vadd.f32 %v1584, %v1607
    %v1609 = vpop.f32.mrf.mxu0
    %v1610 = vadd.f32 %v1584, %v1609
    %1611 = vdwg.mxu0
    %s1612 = scalar_lea.vmem %s6, 96
    %v1613 = vld [vmem:[%s1612] sm:$0xf]
    %v1614 = vld [vmem:[%s1612 + $0x4] sm:$0xf]
    %v1615 = vld [vmem:[%s1612 + $0x8] sm:$0xf]
    %v1616 = vld [vmem:[%s1612 + $0xc] sm:$0xf]
    %s1617 = scalar_lea.vmem %s7, 6
    %v1618 = vld [vmem:[%s1617] sm:$0x1]
    %v1620 = vperm.slane %v1618, 0
    %v1626 = vunpack.c.l.b16 %v1613
    %v1627 = vunpack.c.l.b16 %v1614
    %v1628 = vunpack.c.l.b16 %v1615
    %v1629 = vunpack.c.l.b16 %v1616
    %v1630 = vpack.c.b16 %v1627, %v1626
    %v1631 = vpack.c.b16 %v1629, %v1628
    %1634 = vmatpush.bf16.msra.mxu0 0
    %1635 = vmatpush.bf16.msra.mxu0 0
    %1636 = vmatpush.bf16.msra.mxu0 0
    %1637 = vmatpush.bf16.msra.mxu0 0
    %1638 = vmatpush.bf16.msra.mxu0 0
    %1639 = vmatpush.bf16.msra.mxu0 0
    %1640 = vmatpush.bf16.msra.mxu0 %v1631
    %1641 = vmatpush.bf16.msra.mxu0 %v1630
    %1642 = vmatmul.bf16.gmra.mxu0 %v1200
    %v1643 = vpop.f32.mrf.mxu0
    %v1644 = vadd.f32 %v1620, %v1643
    %v1645 = vpop.f32.mrf.mxu0
    %v1646 = vadd.f32 %v1620, %v1645
    %1647 = vdwg.mxu0
    %s1648 = scalar_lea.vmem %s8, 96
    %v1649 = vld [vmem:[%s1648] sm:$0xf]
    %v1650 = vld [vmem:[%s1648 + $0x4] sm:$0xf]
    %v1651 = vld [vmem:[%s1648 + $0x8] sm:$0xf]
    %v1652 = vld [vmem:[%s1648 + $0xc] sm:$0xf]
    %s1653 = scalar_lea.vmem %s9, 6
    %v1654 = vld [vmem:[%s1653] sm:$0x1]
    %v1656 = vperm.slane %v1654, 0
    %v1662 = vunpack.c.l.b16 %v1649
    %v1663 = vunpack.c.l.b16 %v1650
    %v1664 = vunpack.c.l.b16 %v1651
    %v1665 = vunpack.c.l.b16 %v1652
    %v1666 = vpack.c.b16 %v1663, %v1662
    %v1667 = vpack.c.b16 %v1665, %v1664
    %1670 = vmatpush.bf16.msra.mxu0 0
    %1671 = vmatpush.bf16.msra.mxu0 0
    %1672 = vmatpush.bf16.msra.mxu0 0
    %1673 = vmatpush.bf16.msra.mxu0 0
    %1674 = vmatpush.bf16.msra.mxu0 0
    %1675 = vmatpush.bf16.msra.mxu0 0
    %1676 = vmatpush.bf16.msra.mxu0 %v1667
    %1677 = vmatpush.bf16.msra.mxu0 %v1666
    %1678 = vmatmul.bf16.gmra.mxu0 %v1200
    %v1679 = vpop.f32.mrf.mxu0
    %v1680 = vadd.f32 %v1656, %v1679
    %v1681 = vpop.f32.mrf.mxu0
    %v1682 = vadd.f32 %v1656, %v1681
    %1683 = vdwg.mxu0
    %v1684 = vpack.c.bf16 %v1610, %v1608
    %v1685 = vpack.c.bf16 %v1646, %v1644
    %v1687 = vsel %vm255, %v1684, 0
    %v1690 = vsel %vm255, %v1685, 0
    %1692 = vmatpush.bf16.xpose.msra.mxu0 0
    %1693 = vmatpush.bf16.xpose.msra.mxu0 0
    %1694 = vmatpush.bf16.xpose.msra.mxu0 0
    %1695 = vmatpush.bf16.xpose.msra.mxu0 0
    %1696 = vmatpush.bf16.xpose.msra.mxu0 0
    %1697 = vmatpush.bf16.xpose.msra.mxu0 0
    %1698 = vmatpush.bf16.xpose.msra.mxu0 0
    %1699 = vmatpush.bf16.xpose.msra.mxu0 %v1690
    %1700 = vmatmul.bf16.gmra.mxu0 %v1687
    %v1701 = vpop.f32.mrf.mxu0
    %v1702 = vadd.f32 0.0, %v1701
    %v1703 = vpop.f32.mrf.mxu0
    %v1704 = vadd.f32 0.0, %v1703
    %1705 = vdwg.mxu0
    %v1706 = vmul.f32 %v1702, 0.35355338
    %v1707 = vmul.f32 %v1704, 0.35355338
    %v1708 = vadd.f32 %v1706, %v79
    %v1709 = vadd.f32 %v1707, %v80
    %v1710 = vsel %vm280, %v1708, -inf
    %1711 = vmax.xlane.f32.xlu0 %v1710
    %v1712 = vpop.xlane.xlu0 %1711
    %v1713 = vsel %vm280, %v1709, -inf
    %1714 = vmax.xlane.f32.xlu0 %v1713
    %v1715 = vpop.xlane.xlu0 %1714
    %v1716 = vsub.f32 %v1708, %v1712
    %v1717 = vsub.f32 %v1709, %v1715
    %v1718 = vmul.f32 %v1716, 1.442695
    %v1719 = vpow.pop %v1718
    %v1720 = vmul.f32 %v1717, 1.442695
    %v1721 = vpow.pop %v1720
    %v1722 = vsel %vm280, %v1719, 0.0
    %1723 = vadd.xlane.f32.xlu0 %v1722
    %v1724 = vpop.xlane.xlu0 %1723
    %v1725 = vsel %vm280, %v1721, 0.0
    %1726 = vadd.xlane.f32.xlu0 %v1725
    %v1727 = vpop.xlane.xlu0 %1726
    %v1728 = vrcp.pop %v1724
    %v1729 = vrcp.pop %v1727
    %v1730 = vmul.f32 %v1719, %v1728
    %v1731 = vmul.f32 %v1721, %v1729
    %v1732 = vpack.c.bf16 %v1731, %v1730
    %v1733 = vpack.c.bf16 %v1682, %v1680
    %v1735 = vsel %vm280, %v1732, 0
    %1737 = vmatpush.bf16.msra.mxu0 0
    %1738 = vmatpush.bf16.msra.mxu0 0
    %1739 = vmatpush.bf16.msra.mxu0 0
    %1740 = vmatpush.bf16.msra.mxu0 0
    %1741 = vmatpush.bf16.msra.mxu0 0
    %1742 = vmatpush.bf16.msra.mxu0 0
    %1743 = vmatpush.bf16.msra.mxu0 0
    %1744 = vmatpush.bf16.msra.mxu0 %v1733
    %1745 = vmatmul.bf16.gmra.mxu0 %v1735
    %v1746 = vpop.f32.mrf.mxu0
    %v1747 = vadd.f32 0.0, %v1746
    %v1748 = vpop.f32.mrf.mxu0
    %v1749 = vadd.f32 0.0, %v1748
    %1750 = vdwg.mxu0
    %v1751 = vpack.c.bf16 %v1749, %v1747
    %s1752 = scalar_lea.vmem %s10, 24
    %v1753 = vld [vmem:[%s1752] sm:$0xf]
    %v1755 = vsel %vm255, %v1751, 0
    %v1758 = vsel %vm505, %v1753, 0
    %1760 = vmatpush.bf16.msra.mxu0 0
    %1761 = vmatpush.bf16.msra.mxu0 0
    %1762 = vmatpush.bf16.msra.mxu0 0
    %1763 = vmatpush.bf16.msra.mxu0 0
    %1764 = vmatpush.bf16.msra.mxu0 0
    %1765 = vmatpush.bf16.msra.mxu0 0
    %1766 = vmatpush.bf16.msra.mxu0 0
    %1767 = vmatpush.bf16.msra.mxu0 %v1758
    %1768 = vmatmul.bf16.gmra.mxu0 %v1755
    %v1769 = vpop.f32.mrf.mxu0
    %v1770 = vadd.f32 0.0, %v1769
    %v1771 = vpop.f32.mrf.mxu0
    %v1772 = vadd.f32 0.0, %v1771
    %1773 = vdwg.mxu0
    %v1774 = vadd.f32 %v1572, %v1770
    %v1775 = vadd.f32 %v1574, %v1772
    %s1776 = scalar_lea.vmem %s4, 112
    %v1777 = vld [vmem:[%s1776] sm:$0xf]
    %v1778 = vld [vmem:[%s1776 + $0x4] sm:$0xf]
    %v1779 = vld [vmem:[%s1776 + $0x8] sm:$0xf]
    %v1780 = vld [vmem:[%s1776 + $0xc] sm:$0xf]
    %s1781 = scalar_lea.vmem %s5, 7
    %v1782 = vld [vmem:[%s1781] sm:$0x1]
    %v1784 = vperm.slane %v1782, 0
    %v1790 = vunpack.c.l.b16 %v1777
    %v1791 = vunpack.c.l.b16 %v1778
    %v1792 = vunpack.c.l.b16 %v1779
    %v1793 = vunpack.c.l.b16 %v1780
    %v1794 = vpack.c.b16 %v1791, %v1790
    %v1795 = vpack.c.b16 %v1793, %v1792
    %1798 = vmatpush.bf16.msra.mxu0 0
    %1799 = vmatpush.bf16.msra.mxu0 0
    %1800 = vmatpush.bf16.msra.mxu0 0
    %1801 = vmatpush.bf16.msra.mxu0 0
    %1802 = vmatpush.bf16.msra.mxu0 0
    %1803 = vmatpush.bf16.msra.mxu0 0
    %1804 = vmatpush.bf16.msra.mxu0 %v1795
    %1805 = vmatpush.bf16.msra.mxu0 %v1794
    %1806 = vmatmul.bf16.gmra.mxu0 %v1200
    %v1807 = vpop.f32.mrf.mxu0
    %v1808 = vadd.f32 %v1784, %v1807
    %v1809 = vpop.f32.mrf.mxu0
    %v1810 = vadd.f32 %v1784, %v1809
    %1811 = vdwg.mxu0
    %s1812 = scalar_lea.vmem %s6, 112
    %v1813 = vld [vmem:[%s1812] sm:$0xf]
    %v1814 = vld [vmem:[%s1812 + $0x4] sm:$0xf]
    %v1815 = vld [vmem:[%s1812 + $0x8] sm:$0xf]
    %v1816 = vld [vmem:[%s1812 + $0xc] sm:$0xf]
    %s1817 = scalar_lea.vmem %s7, 7
    %v1818 = vld [vmem:[%s1817] sm:$0x1]
    %v1820 = vperm.slane %v1818, 0
    %v1826 = vunpack.c.l.b16 %v1813
    %v1827 = vunpack.c.l.b16 %v1814
    %v1828 = vunpack.c.l.b16 %v1815
    %v1829 = vunpack.c.l.b16 %v1816
    %v1830 = vpack.c.b16 %v1827, %v1826
    %v1831 = vpack.c.b16 %v1829, %v1828
    %1834 = vmatpush.bf16.msra.mxu0 0
    %1835 = vmatpush.bf16.msra.mxu0 0
    %1836 = vmatpush.bf16.msra.mxu0 0
    %1837 = vmatpush.bf16.msra.mxu0 0
    %1838 = vmatpush.bf16.msra.mxu0 0
    %1839 = vmatpush.bf16.msra.mxu0 0
    %1840 = vmatpush.bf16.msra.mxu0 %v1831
    %1841 = vmatpush.bf16.msra.mxu0 %v1830
    %1842 = vmatmul.bf16.gmra.mxu0 %v1200
    %v1843 = vpop.f32.mrf.mxu0
    %v1844 = vadd.f32 %v1820, %v1843
    %v1845 = vpop.f32.mrf.mxu0
    %v1846 = vadd.f32 %v1820, %v1845
    %1847 = vdwg.mxu0
    %s1848 = scalar_lea.vmem %s8, 112
    %v1849 = vld [vmem:[%s1848] sm:$0xf]
    %v1850 = vld [vmem:[%s1848 + $0x4] sm:$0xf]
    %v1851 = vld [vmem:[%s1848 + $0x8] sm:$0xf]
    %v1852 = vld [vmem:[%s1848 + $0xc] sm:$0xf]
    %s1853 = scalar_lea.vmem %s9, 7
    %v1854 = vld [vmem:[%s1853] sm:$0x1]
    %v1856 = vperm.slane %v1854, 0
    %v1862 = vunpack.c.l.b16 %v1849
    %v1863 = vunpack.c.l.b16 %v1850
    %v1864 = vunpack.c.l.b16 %v1851
    %v1865 = vunpack.c.l.b16 %v1852
    %v1866 = vpack.c.b16 %v1863, %v1862
    %v1867 = vpack.c.b16 %v1865, %v1864
    %1870 = vmatpush.bf16.msra.mxu0 0
    %1871 = vmatpush.bf16.msra.mxu0 0
    %1872 = vmatpush.bf16.msra.mxu0 0
    %1873 = vmatpush.bf16.msra.mxu0 0
    %1874 = vmatpush.bf16.msra.mxu0 0
    %1875 = vmatpush.bf16.msra.mxu0 0
    %1876 = vmatpush.bf16.msra.mxu0 %v1867
    %1877 = vmatpush.bf16.msra.mxu0 %v1866
    %1878 = vmatmul.bf16.gmra.mxu0 %v1200
    %v1879 = vpop.f32.mrf.mxu0
    %v1880 = vadd.f32 %v1856, %v1879
    %v1881 = vpop.f32.mrf.mxu0
    %v1882 = vadd.f32 %v1856, %v1881
    %1883 = vdwg.mxu0
    %v1884 = vpack.c.bf16 %v1810, %v1808
    %v1885 = vpack.c.bf16 %v1846, %v1844
    %v1887 = vsel %vm255, %v1884, 0
    %v1890 = vsel %vm255, %v1885, 0
    %1892 = vmatpush.bf16.xpose.msra.mxu0 0
    %1893 = vmatpush.bf16.xpose.msra.mxu0 0
    %1894 = vmatpush.bf16.xpose.msra.mxu0 0
    %1895 = vmatpush.bf16.xpose.msra.mxu0 0
    %1896 = vmatpush.bf16.xpose.msra.mxu0 0
    %1897 = vmatpush.bf16.xpose.msra.mxu0 0
    %1898 = vmatpush.bf16.xpose.msra.mxu0 0
    %1899 = vmatpush.bf16.xpose.msra.mxu0 %v1890
    %1900 = vmatmul.bf16.gmra.mxu0 %v1887
    %v1901 = vpop.f32.mrf.mxu0
    %v1902 = vadd.f32 0.0, %v1901
    %v1903 = vpop.f32.mrf.mxu0
    %v1904 = vadd.f32 0.0, %v1903
    %1905 = vdwg.mxu0
    %v1906 = vmul.f32 %v1902, 0.35355338
    %v1907 = vmul.f32 %v1904, 0.35355338
    %v1908 = vadd.f32 %v1906, %v79
    %v1909 = vadd.f32 %v1907, %v80
    %v1910 = vsel %vm280, %v1908, -inf
    %1911 = vmax.xlane.f32.xlu0 %v1910
    %v1912 = vpop.xlane.xlu0 %1911
    %v1913 = vsel %vm280, %v1909, -inf
    %1914 = vmax.xlane.f32.xlu0 %v1913
    %v1915 = vpop.xlane.xlu0 %1914
    %v1916 = vsub.f32 %v1908, %v1912
    %v1917 = vsub.f32 %v1909, %v1915
    %v1918 = vmul.f32 %v1916, 1.442695
    %v1919 = vpow.pop %v1918
    %v1920 = vmul.f32 %v1917, 1.442695
    %v1921 = vpow.pop %v1920
    %v1922 = vsel %vm280, %v1919, 0.0
    %1923 = vadd.xlane.f32.xlu0 %v1922
    %v1924 = vpop.xlane.xlu0 %1923
    %v1925 = vsel %vm280, %v1921, 0.0
    %1926 = vadd.xlane.f32.xlu0 %v1925
    %v1927 = vpop.xlane.xlu0 %1926
    %v1928 = vrcp.pop %v1924
    %v1929 = vrcp.pop %v1927
    %v1930 = vmul.f32 %v1919, %v1928
    %v1931 = vmul.f32 %v1921, %v1929
    %v1932 = vpack.c.bf16 %v1931, %v1930
    %v1933 = vpack.c.bf16 %v1882, %v1880
    %v1935 = vsel %vm280, %v1932, 0
    %1937 = vmatpush.bf16.msra.mxu0 0
    %1938 = vmatpush.bf16.msra.mxu0 0
    %1939 = vmatpush.bf16.msra.mxu0 0
    %1940 = vmatpush.bf16.msra.mxu0 0
    %1941 = vmatpush.bf16.msra.mxu0 0
    %1942 = vmatpush.bf16.msra.mxu0 0
    %1943 = vmatpush.bf16.msra.mxu0 0
    %1944 = vmatpush.bf16.msra.mxu0 %v1933
    %1945 = vmatmul.bf16.gmra.mxu0 %v1935
    %v1946 = vpop.f32.mrf.mxu0
    %v1947 = vadd.f32 0.0, %v1946
    %v1948 = vpop.f32.mrf.mxu0
    %v1949 = vadd.f32 0.0, %v1948
    %1950 = vdwg.mxu0
    %v1951 = vpack.c.bf16 %v1949, %v1947
    %s1952 = scalar_lea.vmem %s10, 28
    %v1953 = vld [vmem:[%s1952] sm:$0xf]
    %v1955 = vsel %vm255, %v1951, 0
    %v1958 = vsel %vm505, %v1953, 0
    %1960 = vmatpush.bf16.msra.mxu0 0
    %1961 = vmatpush.bf16.msra.mxu0 0
    %1962 = vmatpush.bf16.msra.mxu0 0
    %1963 = vmatpush.bf16.msra.mxu0 0
    %1964 = vmatpush.bf16.msra.mxu0 0
    %1965 = vmatpush.bf16.msra.mxu0 0
    %1966 = vmatpush.bf16.msra.mxu0 0
    %1967 = vmatpush.bf16.msra.mxu0 %v1958
    %1968 = vmatmul.bf16.gmra.mxu0 %v1955
    %v1969 = vpop.f32.mrf.mxu0
    %v1970 = vadd.f32 0.0, %v1969
    %v1971 = vpop.f32.mrf.mxu0
    %v1972 = vadd.f32 0.0, %v1971
    %1973 = vdwg.mxu0
    %v1974 = vadd.f32 %v1774, %v1970
    %v1975 = vadd.f32 %v1775, %v1972
    %s1976 = scalar_lea.vmem %s11, 1
    %v1977 = vld [vmem:[%s1976] sm:$0x1]
    %v1979 = vperm.slane %v1977, 0
    %v1981 = vadd.f32 %v1974, %v1979
    %v1982 = vadd.f32 %v1975, %v1979
    %v1983 = vadd.f32 %v1981, %v1174
    %v1984 = vadd.f32 %v1982, %v1175
    %s1985 = scalar_lea.vmem %s12, 1
    %v1986 = vld [vmem:[%s1985] sm:$0x1]
    %s1987 = scalar_lea.vmem %s13, 1
    %v1988 = vld [vmem:[%s1987] sm:$0x1]
    %v1989 = vsel %vm85, %v1983, 0.0
    %1990 = vadd.xlane.f32.xlu0 %v1989
    %v1991 = vpop.xlane.xlu0 %1990
    %v1992 = vsel %vm85, %v1984, 0.0
    %1993 = vadd.xlane.f32.xlu0 %v1992
    %v1994 = vpop.xlane.xlu0 %1993
    %v1995 = vmul.f32 %v1991, %v98
    %v1996 = vmul.f32 %v1994, %v98
    %v1997 = vsub.f32 %v1983, %v1995
    %v1998 = vsub.f32 %v1984, %v1996
    %v1999 = vmul.f32 %v1997, %v1997
    %v2000 = vmul.f32 %v1998, %v1998
    %v2001 = vsel %vm85, %v1999, 0.0
    %2002 = vadd.xlane.f32.xlu0 %v2001
    %v2003 = vpop.xlane.xlu0 %2002
    %v2004 = vsel %vm85, %v2000, 0.0
    %2005 = vadd.xlane.f32.xlu0 %v2004
    %v2006 = vpop.xlane.xlu0 %2005
    %v2007 = vmul.f32 %v2003, %v98
    %v2008 = vmul.f32 %v2006, %v98
    %v2009 = vadd.f32 %v2007, 1e-12
    %v2010 = vadd.f32 %v2008, 1e-12
    %v2011 = vrsqrt.pop %v2009
    %v2012 = vmul.f32 %v2011, %v2009
    %v2013 = vmul.f32 %v2012, %v2011
    %v2014 = vmul.f32 0.5, %v2013
    %v2015 = vsub.f32 1.5, %v2014
    %v2016 = vmul.f32 %v2011, %v2015
    %vm2017 = vweird.f32 %v2009
    %vm2018 = vweird.f32 %v2011
    %vm2019 = vmor %vm2017, %vm2018
    %v2020 = vsel %vm2019, %v2011, %v2016
    %v2021 = vrsqrt.pop %v2010
    %v2022 = vmul.f32 %v2021, %v2010
    %v2023 = vmul.f32 %v2022, %v2021
    %v2024 = vmul.f32 0.5, %v2023
    %v2025 = vsub.f32 1.5, %v2024
    %v2026 = vmul.f32 %v2021, %v2025
    %vm2027 = vweird.f32 %v2010
    %vm2028 = vweird.f32 %v2021
    %vm2029 = vmor %vm2027, %vm2028
    %v2030 = vsel %vm2029, %v2021, %v2026
    %v2031 = vmul.f32 %v1997, %v2020
    %v2032 = vmul.f32 %v1998, %v2030
    %v2034 = vperm.slane %v1986, 0
    %v2036 = vmul.f32 %v2031, %v2034
    %v2037 = vmul.f32 %v2032, %v2034
    %v2039 = vperm.slane %v1988, 0
    %v2041 = vadd.f32 %v2036, %v2039
    %v2042 = vadd.f32 %v2037, %v2039
    %v2043 = vpack.c.bf16 %v2042, %v2041
    %s2044 = scalar_lea.vmem %s14, 16
    %v2045 = vld [vmem:[%s2044] sm:$0xf]
    %v2046 = vld [vmem:[%s2044 + $0x4] sm:$0xf]
    %v2047 = vld [vmem:[%s2044 + $0x8] sm:$0xf]
    %v2048 = vld [vmem:[%s2044 + $0xc] sm:$0xf]
    %s2049 = scalar_lea.vmem %s15, 1
    %v2050 = vld [vmem:[%s2049] sm:$0x1]
    %v2052 = vperm.slane %v2050, 0
    %v2058 = vunpack.c.l.b16 %v2045
    %v2059 = vunpack.c.l.b16 %v2046
    %v2060 = vunpack.c.l.b16 %v2047
    %v2061 = vunpack.c.l.b16 %v2048
    %v2062 = vpack.c.b16 %v2059, %v2058
    %v2063 = vpack.c.b16 %v2061, %v2060
    %v2067 = vsel %vm85, %v2043, 0
    %2069 = vmatpush.bf16.msra.mxu0 0
    %2070 = vmatpush.bf16.msra.mxu0 0
    %2071 = vmatpush.bf16.msra.mxu0 0
    %2072 = vmatpush.bf16.msra.mxu0 0
    %2073 = vmatpush.bf16.msra.mxu0 0
    %2074 = vmatpush.bf16.msra.mxu0 0
    %2075 = vmatpush.bf16.msra.mxu0 %v2063
    %2076 = vmatpush.bf16.msra.mxu0 %v2062
    %2077 = vmatmul.bf16.gmra.mxu0 %v2067
    %v2078 = vpop.f32.mrf.mxu0
    %v2079 = vadd.f32 %v2052, %v2078
    %v2080 = vpop.f32.mrf.mxu0
    %v2081 = vadd.f32 %v2052, %v2080
    %2082 = vdwg.mxu0
    %v2083 = vmul.f32 %v2079, 0.5
    %v2084 = vmul.f32 %v2081, 0.5
    %v2085 = vmul.f32 %v2079, 0.044715
    %v2086 = vmul.f32 %v2081, 0.044715
    %v2087 = vmul.f32 %v2085, %v2079
    %v2088 = vmul.f32 %v2086, %v2081
    %v2089 = vmul.f32 %v2087, %v2079
    %v2090 = vmul.f32 %v2088, %v2081
    %v2091 = vadd.f32 %v2079, %v2089
    %v2092 = vadd.f32 %v2081, %v2090
    %v2093 = vmul.f32 %v2091, 0.7978846
    %v2094 = vmul.f32 %v2092, 0.7978846
    %v2095 = vtanh.pop %v2093
    %v2096 = vtanh.pop %v2094
    %v2097 = vadd.f32 %v2095, 1.0
    %v2098 = vadd.f32 %v2096, 1.0
    %v2099 = vmul.f32 %v2083, %v2097
    %v2100 = vmul.f32 %v2084, %v2098
    %v2101 = vpack.c.bf16 %v2100, %v2099
    %s2102 = scalar_lea.vmem %s16, 32
    %v2103 = vld [vmem:[%s2102] sm:$0xf]
    %v2104 = vld [vmem:[%s2102 + $0x4] sm:$0xf]
    %v2105 = vld [vmem:[%s2102 + $0x8] sm:$0xf]
    %v2106 = vld [vmem:[%s2102 + $0xc] sm:$0xf]
    %v2107 = vld [vmem:[%s2102 + $0x10] sm:$0xf]
    %v2108 = vld [vmem:[%s2102 + $0x14] sm:$0xf]
    %v2109 = vld [vmem:[%s2102 + $0x18] sm:$0xf]
    %v2110 = vld [vmem:[%s2102 + $0x1c] sm:$0xf]
    %s2111 = scalar_lea.vmem %s17, 1
    %v2112 = vld [vmem:[%s2111] sm:$0x1]
    %v2114 = vperm.slane %v2112, 0
    %v2124 = vunpack.c.l.b16 %v2103
    %v2125 = vunpack.c.l.b16 %v2104
    %v2126 = vunpack.c.l.b16 %v2105
    %v2127 = vunpack.c.l.b16 %v2106
    %v2128 = vunpack.c.l.b16 %v2107
    %v2129 = vunpack.c.l.b16 %v2108
    %v2130 = vunpack.c.l.b16 %v2109
    %v2131 = vunpack.c.l.b16 %v2110
    %v2132 = vpack.c.b16 %v2125, %v2124
    %v2133 = vpack.c.b16 %v2127, %v2126
    %v2134 = vpack.c.b16 %v2129, %v2128
    %v2135 = vpack.c.b16 %v2131, %v2130
    %v2141 = vsel %vm1100, %v2101, 0
    %2143 = vmatpush.bf16.msra.mxu0 0
    %2144 = vmatpush.bf16.msra.mxu0 0
    %2145 = vmatpush.bf16.msra.mxu0 0
    %2146 = vmatpush.bf16.msra.mxu0 0
    %2147 = vmatpush.bf16.msra.mxu0 %v2135
    %2148 = vmatpush.bf16.msra.mxu0 %v2134
    %2149 = vmatpush.bf16.msra.mxu0 %v2133
    %2150 = vmatpush.bf16.msra.mxu0 %v2132
    %2151 = vmatmul.bf16.gmra.mxu0 %v2141
    %v2152 = vpop.f32.mrf.mxu0
    %v2153 = vadd.f32 %v2114, %v2152
    %v2154 = vpop.f32.mrf.mxu0
    %v2155 = vadd.f32 %v2114, %v2154
    %2156 = vdwg.mxu0
    %v2157 = vadd.f32 %v2153, %v2041
    %v2158 = vadd.f32 %v2155, %v2042
    %s2159 = scalar_lea.vmem %s18, 1
    %v2160 = vld [vmem:[%s2159] sm:$0x1]
    %s2161 = scalar_lea.vmem %s19, 1
    %v2162 = vld [vmem:[%s2161] sm:$0x1]
    %v2163 = vsel %vm85, %v2157, 0.0
    %2164 = vadd.xlane.f32.xlu0 %v2163
    %v2165 = vpop.xlane.xlu0 %2164
    %v2166 = vsel %vm85, %v2158, 0.0
    %2167 = vadd.xlane.f32.xlu0 %v2166
    %v2168 = vpop.xlane.xlu0 %2167
    %v2169 = vmul.f32 %v2165, %v98
    %v2170 = vmul.f32 %v2168, %v98
    %v2171 = vsub.f32 %v2157, %v2169
    %v2172 = vsub.f32 %v2158, %v2170
    %v2173 = vmul.f32 %v2171, %v2171
    %v2174 = vmul.f32 %v2172, %v2172
    %v2175 = vsel %vm85, %v2173, 0.0
    %2176 = vadd.xlane.f32.xlu0 %v2175
    %v2177 = vpop.xlane.xlu0 %2176
    %v2178 = vsel %vm85, %v2174, 0.0
    %2179 = vadd.xlane.f32.xlu0 %v2178
    %v2180 = vpop.xlane.xlu0 %2179
    %v2181 = vmul.f32 %v2177, %v98
    %v2182 = vmul.f32 %v2180, %v98
    %v2183 = vadd.f32 %v2181, 1e-12
    %v2184 = vadd.f32 %v2182, 1e-12
    %v2185 = vrsqrt.pop %v2183
    %v2186 = vmul.f32 %v2185, %v2183
    %v2187 = vmul.f32 %v2186, %v2185
    %v2188 = vmul.f32 0.5, %v2187
    %v2189 = vsub.f32 1.5, %v2188
    %v2190 = vmul.f32 %v2185, %v2189
    %vm2191 = vweird.f32 %v2183
    %vm2192 = vweird.f32 %v2185
    %vm2193 = vmor %vm2191, %vm2192
    %v2194 = vsel %vm2193, %v2185, %v2190
    %v2195 = vrsqrt.pop %v2184
    %v2196 = vmul.f32 %v2195, %v2184
    %v2197 = vmul.f32 %v2196, %v2195
    %v2198 = vmul.f32 0.5, %v2197
    %v2199 = vsub.f32 1.5, %v2198
    %v2200 = vmul.f32 %v2195, %v2199
    %vm2201 = vweird.f32 %v2184
    %vm2202 = vweird.f32 %v2195
    %vm2203 = vmor %vm2201, %vm2202
    %v2204 = vsel %vm2203, %v2195, %v2200
    %v2205 = vmul.f32 %v2171, %v2194
    %v2206 = vmul.f32 %v2172, %v2204
    %v2208 = vperm.slane %v2160, 0
    %v2210 = vmul.f32 %v2205, %v2208
    %v2211 = vmul.f32 %v2206, %v2208
    %v2213 = vperm.slane %v2162, 0
    %v2215 = vadd.f32 %v2210, %v2213
    %v2216 = vadd.f32 %v2211, %v2213
    %v2217 = vpack.c.bf16 %v2216, %v2215
    %v2218 = vld [vmem:[%s20] sm:$0xf]
    %v2219 = vld [vmem:[%s20 + $0x4] sm:$0xf]
    %v2220 = vld [vmem:[%s20 + $0x8] sm:$0xf]
    %v2221 = vld [vmem:[%s20 + $0xc] sm:$0xf]
    %v2222 = vld [vmem:[%s21] sm:$0x1]
    %v2224 = vperm.slane %v2222, 0
    %v2230 = vunpack.c.l.b16 %v2218
    %v2231 = vunpack.c.l.b16 %v2219
    %v2232 = vunpack.c.l.b16 %v2220
    %v2233 = vunpack.c.l.b16 %v2221
    %v2234 = vpack.c.b16 %v2231, %v2230
    %v2235 = vpack.c.b16 %v2233, %v2232
    %v2239 = vsel %vm85, %v2217, 0
    %2241 = vmatpush.bf16.msra.mxu0 0
    %2242 = vmatpush.bf16.msra.mxu0 0
    %2243 = vmatpush.bf16.msra.mxu0 0
    %2244 = vmatpush.bf16.msra.mxu0 0
    %2245 = vmatpush.bf16.msra.mxu0 0
    %2246 = vmatpush.bf16.msra.mxu0 0
    %2247 = vmatpush.bf16.msra.mxu0 %v2235
    %2248 = vmatpush.bf16.msra.mxu0 %v2234
    %2249 = vmatmul.bf16.gmra.mxu0 %v2239
    %v2250 = vpop.f32.mrf.mxu0
    %v2251 = vadd.f32 %v2224, %v2250
    %v2252 = vpop.f32.mrf.mxu0
    %v2253 = vadd.f32 %v2224, %v2252
    %2254 = vdwg.mxu0
    %v2255 = vmax.f32 %v2251, 0.0
    %v2256 = vmax.f32 %v2253, 0.0
    %v2257 = vpack.c.bf16 %v2256, %v2255
    %v2258 = vld [vmem:[%s22] sm:$0xf]
    %v2259 = vld [vmem:[%s22 + $0x4] sm:$0xf]
    %v2260 = vld [vmem:[%s22 + $0x8] sm:$0xf]
    %v2261 = vld [vmem:[%s22 + $0xc] sm:$0xf]
    %v2262 = vld [vmem:[%s23] sm:$0x1]
    %v2264 = vperm.slane %v2262, 0
    %v2270 = vunpack.c.l.b16 %v2258
    %v2271 = vunpack.c.l.b16 %v2259
    %v2272 = vunpack.c.l.b16 %v2260
    %v2273 = vunpack.c.l.b16 %v2261
    %v2274 = vpack.c.b16 %v2271, %v2270
    %v2275 = vpack.c.b16 %v2273, %v2272
    %v2279 = vsel %vm85, %v2257, 0
    %2281 = vmatpush.bf16.msra.mxu0 0
    %2282 = vmatpush.bf16.msra.mxu0 0
    %2283 = vmatpush.bf16.msra.mxu0 0
    %2284 = vmatpush.bf16.msra.mxu0 0
    %2285 = vmatpush.bf16.msra.mxu0 0
    %2286 = vmatpush.bf16.msra.mxu0 0
    %2287 = vmatpush.bf16.msra.mxu0 %v2275
    %2288 = vmatpush.bf16.msra.mxu0 %v2274
    %2289 = vmatmul.bf16.gmra.mxu0 %v2279
    %v2290 = vpop.f32.mrf.mxu0
    %v2291 = vadd.f32 %v2264, %v2290
    %v2292 = vpop.f32.mrf.mxu0
    %v2293 = vadd.f32 %v2264, %v2292
    %2294 = vdwg.mxu0
    %2295 = vst [vmem:[#allocation2] sm:$0xff] %v2291
    %2296 = vst [vmem:[#allocation2 + $0x8] sm:$0xff] %v2293
    // Predicated region
    $region98: #{tpu_custom_call.1} parent=1 // pred_check
      _
    $region99: #{tpu_custom_call.1} parent=1 // pred_check_branch
      %2298 = sbr.rel (0) target = $region101
    $region100: #{tpu_custom_call.1} parent=1 // pred_region
      %2300 = vsyncadd [#allocation3], 0
      %s2301 = sshll.u32 [#allocation2], 4
      %s2302 = int_to_ptr.vmem [resolvable:$true] %s2301
      %s2303 = sshll.u32 %s24, 4
      %s2304 = int_to_ptr.hbm [resolvable:$true] %s2303
      %2309 = dma.vmem_to_hbm [thread:$0]  %s2302, 256, %s2304, [#allocation3], 128, 128, 8
    $region101: #{tpu_custom_call.1} parent=1 // pred_fallthru
      _
    // Predicated region
    $region102: #{tpu_custom_call.1} parent=1 // pred_check
      _
    $region103: #{tpu_custom_call.1} parent=1 // pred_check_branch
      %2311 = sbr.rel (0) target = $region105
    $region104: #{tpu_custom_call.1} parent=1 // pred_region
      %2313 = dma.done [#allocation3], 256
    $region105: #{tpu_custom_call.1} parent=1 // pred_fallthru
      _
    %2314 = vsyncpa [#allocation3], 1

</llo_original>
